<compile_context>
chip_gen: v7x
topology: tpu7x:2x2x1
jax: 0.10.0
libtpu: 0.0.40
codegen_flags: <defaults>
</compile_context>

<pallas_src>
import functools

import jax
import jax.numpy as jnp
from jax import lax
from jax.experimental import pallas as pl
from jax.experimental.pallas import tpu as pltpu


KH = KW = 3  # 3x3 conv, padding=1, stride=1


# ---------------------------------------------------------------------------
# Fused kernel: conv(3x3,pad=1)+ReLU  ->  main_output, then Linear -> exit
# ---------------------------------------------------------------------------
def _make_fused_kernel(*, n, c_in, c_out, h, w, cls_pad):
    hw = h * w

    def kernel(x_ref, wc_ref, bc_ref, wf_ref, bf_ref, main_ref, exit_ref):
        # x_ref    : [N, Cin, H*W]        flattened NCHW input
        # wc_ref   : [9, Cout, Cin]       per-tap conv weights, tap = kh*3 + kw
        # bc_ref   : [Cout, 1]
        # wf_ref   : [Cout, H*W, CLS_PAD] fc weights laid out as [co, hw, cls]
        # bf_ref   : [1, CLS_PAD]
        # main_ref : [N, Cout, H*W]       (lane-dense conv output)
        # exit_ref : [N, CLS_PAD]         (class axis padded to 128 lanes)

        # ---- boundary masks for the 9 taps (sample independent) -------------
        hw_idx = lax.broadcasted_iota(jnp.int32, (c_in, hw), 1)
        if (w & (w - 1)) == 0:           # power-of-two width: avoid int division
            col_idx = jnp.bitwise_and(hw_idx, w - 1)
        else:
            col_idx = hw_idx % w

        masks = []
        for kh in range(KH):
            for kw in range(KW):
                dh, dw = kh - 1, kw - 1
                conds = []
                if dh < 0:
                    conds.append(hw_idx >= (-dh) * w)
                elif dh > 0:
                    conds.append(hw_idx < (h - dh) * w)
                if dw < 0:
                    conds.append(col_idx >= -dw)
                elif dw > 0:
                    conds.append(col_idx < (w - dw))
                m = None
                for cond in conds:
                    m = cond if m is None else jnp.logical_and(m, cond)
                masks.append(m)          # None for the (1,1) center tap

        bc = bc_ref[...]                 # [Cout, 1]
        bf = bf_ref[...]                 # [1, CLS_PAD]

        # ---- conv(3x3, pad=1) + ReLU as 9 shifted mat-muls -------------------
        convs = []
        for s_idx in range(n):
            xn = x_ref[s_idx]            # [Cin, H*W]
            acc = jnp.zeros((c_out, hw), jnp.float32)
            t = 0
            for kh in range(KH):
                for kw in range(KW):
                    dh, dw = kh - 1, kw - 1
                    shift = dh * w + dw  # tap value at i comes from x[i + shift]
                    k = shift % hw
                    if k == 0:
                        shifted = xn
                    else:
                        # circular lane shift; wrapped lanes are masked out below
                        shifted = jnp.concatenate([xn[:, k:], xn[:, :k]], axis=1)
                    m = masks[t]
                    tap = shifted if m is None else jnp.where(m, shifted, 0.0)
                    acc = acc + jnp.dot(wc_ref[t], tap,
                                        preferred_element_type=jnp.float32)
                    t += 1
            conv = jnp.maximum(acc + bc, 0.0)                  # [Cout, H*W]
            main_ref[s_idx, :, :] = conv.astype(main_ref.dtype)
            convs.append(conv)

        # ---- exit classifier: Linear over the NCHW-flattened conv output -----
        # exit[n, cls] = bf[cls] + sum_co sum_hw conv[co, hw] * wf[co, hw, cls]
        accs = [bf] * n                                        # each [1, CLS_PAD]
        for co in range(c_out):
            wf_co = wf_ref[co]                                 # [H*W, CLS_PAD]
            for s_idx in range(n):
                accs[s_idx] = accs[s_idx] + jnp.dot(
                    convs[s_idx][co:co + 1, :], wf_co,
                    preferred_element_type=jnp.float32)
        for s_idx in range(n):
            exit_ref[pl.ds(s_idx, 1), :] = accs[s_idx].astype(exit_ref.dtype)

    return kernel


# ---------------------------------------------------------------------------
# Layer forward (main branch + exit branch) — single fused pallas_call
# ---------------------------------------------------------------------------
def layer_forward(x, kparams, *, num_classes):
    """Equivalent of Layer.forward: returns (main_output, exit_output)."""
    n, c_in, h, w = x.shape
    wc = kparams["w_conv_taps"]        # [9, Cout, Cin]
    bc = kparams["b_conv"]             # [Cout, 1]
    wf = kparams["w_fc"]               # [Cout, H*W, CLS_PAD]
    bf = kparams["b_fc"]               # [1, CLS_PAD]
    c_out = wc.shape[1]
    cls_pad = bf.shape[1]
    hw = h * w

    kernel = _make_fused_kernel(n=n, c_in=c_in, c_out=c_out, h=h, w=w,
                                cls_pad=cls_pad)

    main_flat, exit_pad = pl.pallas_call(
        kernel,
        out_shape=(
            jax.ShapeDtypeStruct((n, c_out, hw), jnp.float32),
            jax.ShapeDtypeStruct((n, cls_pad), jnp.float32),
        ),
        grid=(1,),
        in_specs=[
            pl.BlockSpec((n, c_in, hw), lambda i: (0, 0, 0)),
            pl.BlockSpec((KH * KW, c_out, c_in), lambda i: (0, 0, 0)),
            pl.BlockSpec((c_out, 1), lambda i: (0, 0)),
            pl.BlockSpec((c_out, hw, cls_pad), lambda i: (0, 0, 0)),
            pl.BlockSpec((1, cls_pad), lambda i: (0, 0)),
        ],
        out_specs=(
            pl.BlockSpec((n, c_out, hw), lambda i: (0, 0, 0)),
            pl.BlockSpec((n, cls_pad), lambda i: (0, 0)),
        ),
        compiler_params=pltpu.CompilerParams(
            dimension_semantics=("arbitrary",)),
    )(x.reshape(n, c_in, hw), wc, bc, wf, bf)

    main_output = main_flat.reshape(n, c_out, h, w)   # free row-major reshape
    exit_output = exit_pad[:, :num_classes]
    return main_output, exit_output


# ---------------------------------------------------------------------------
# One-time re-layout of PyTorch-layout weights into the kernel layout
# ---------------------------------------------------------------------------
def prepare_params(params):
    conv_w = params["conv_w"]          # [Cout, Cin, 3, 3]
    conv_b = params["conv_b"]          # [Cout]
    fc_w = params["fc_w"]              # [num_classes, Cout*H*W]
    fc_b = params["fc_b"]              # [num_classes]
    c_out, c_in, kh, kw = conv_w.shape
    num_classes, k_fc = fc_w.shape
    hw = k_fc // c_out
    cls_pad = ((num_classes + 127) // 128) * 128

    w_conv_taps = jnp.transpose(conv_w, (2, 3, 0, 1)).reshape(kh * kw, c_out, c_in)
    b_conv = conv_b.reshape(c_out, 1)
    fc_w_pad = jnp.pad(fc_w, ((0, cls_pad - num_classes), (0, 0)))
    w_fc = jnp.transpose(fc_w_pad.reshape(cls_pad, c_out, hw), (1, 2, 0))
    b_fc = jnp.pad(fc_b, (0, cls_pad - num_classes)).reshape(1, cls_pad)
    return {"w_conv_taps": w_conv_taps, "b_conv": b_conv,
            "w_fc": w_fc, "b_fc": b_fc}


# ---------------------------------------------------------------------------
# Deterministic parameter init, pure-JAX reference, smoke test
# ---------------------------------------------------------------------------
def init_params(key, c_in=4, c_out=8, h=16, w=16, num_classes=10):
    k1, k2, k3, k4 = jax.random.split(key, 4)
    return {
        "conv_w": 0.1 * jax.random.normal(k1, (c_out, c_in, 3, 3), jnp.float32),
        "conv_b": 0.1 * jax.random.normal(k2, (c_out,), jnp.float32),
        "fc_w": 0.05 * jax.random.normal(k3, (num_classes, c_out * h * w), jnp.float32),
        "fc_b": 0.05 * jax.random.normal(k4, (num_classes,), jnp.float32),
    }


def reference_forward(x, params):
    conv = lax.conv_general_dilated(
        x, params["conv_w"], window_strides=(1, 1), padding=((1, 1), (1, 1)),
        dimension_numbers=("NCHW", "OIHW", "NCHW"),
        precision=lax.Precision.HIGHEST)
    main = jnp.maximum(conv + params["conv_b"][None, :, None, None], 0.0)
    flat = main.reshape(main.shape[0], -1)
    logits = jnp.dot(flat, params["fc_w"].T,
                     precision=lax.Precision.HIGHEST) + params["fc_b"]
    return main, logits


if __name__ == "__main__":
    key = jax.random.PRNGKey(0)
    k_x, k_p = jax.random.split(key)

    N, C, H, W = 2, 4, 16, 16
    NUM_CLASSES = 10
    x = jax.random.normal(k_x, (N, C, H, W), jnp.float32)
    params = init_params(k_p, c_in=C, c_out=8, h=H, w=W, num_classes=NUM_CLASSES)
    kparams = prepare_params(params)   # weight re-layout done once, outside the jit

    fwd = jax.jit(functools.partial(layer_forward, num_classes=NUM_CLASSES))
    main_out, exit_out = fwd(x, kparams)
    jax.block_until_ready((main_out, exit_out))

    assert main_out.shape == (N, 8, H, W)
    assert exit_out.shape == (N, NUM_CLASSES)

    # Numerical check against a pure-JAX reference of the same Layer.forward.
    ref_main, ref_exit = reference_forward(x, params)
    assert jnp.allclose(main_out, ref_main, atol=5e-2, rtol=5e-2), (
        "main mismatch", float(jnp.max(jnp.abs(main_out - ref_main))))
    assert jnp.allclose(exit_out, ref_exit, atol=5e-2, rtol=5e-2), (
        "exit mismatch", float(jnp.max(jnp.abs(exit_out - ref_exit))))

    print("KERNEL_OK")
</pallas_src>

<mosaic_0001>
module attributes {stable_mosaic.version = 11 : i64} {
  func.func @kernel(%arg0: i32, %arg1: memref<2x4x256xf32, #tpu.memory_space<vmem>>, %arg2: memref<9x8x4xf32, #tpu.memory_space<vmem>>, %arg3: memref<8x1xf32, #tpu.memory_space<vmem>>, %arg4: memref<8x256x128xf32, #tpu.memory_space<vmem>>, %arg5: memref<1x128xf32, #tpu.memory_space<vmem>>, %arg6: memref<2x8x256xf32, #tpu.memory_space<vmem>>, %arg7: memref<2x128xf32, #tpu.memory_space<vmem>>) attributes {dimension_semantics = [#tpu.dimension_semantics<arbitrary>], iteration_bounds = array<i64: 1>, scalar_prefetch = 0 : i64, scratch_operands = 0 : i64, tpu.core_type = #tpu.core_type<tc>, window_params = [{pipeline_mode = #tpu.pipeline_mode<synchronous>, transform_indices = @transform_0, window_bounds = array<i64: 2, 4, 256>}, {pipeline_mode = #tpu.pipeline_mode<synchronous>, transform_indices = @transform_1, window_bounds = array<i64: 9, 8, 4>}, {pipeline_mode = #tpu.pipeline_mode<synchronous>, transform_indices = @transform_2, window_bounds = array<i64: 8, 1>}, {pipeline_mode = #tpu.pipeline_mode<synchronous>, transform_indices = @transform_3, window_bounds = array<i64: 8, 256, 128>}, {pipeline_mode = #tpu.pipeline_mode<synchronous>, transform_indices = @transform_4, window_bounds = array<i64: 1, 128>}, {pipeline_mode = #tpu.pipeline_mode<synchronous>, transform_indices = @transform_5, window_bounds = array<i64: 2, 8, 256>}, {pipeline_mode = #tpu.pipeline_mode<synchronous>, transform_indices = @transform_6, window_bounds = array<i64: 2, 128>}]} {
    %0 = tpu.iota {dimensions = array<i32: 1>} : vector<4x256xi32>
    %c15_i32 = arith.constant 15 : i32
    %1 = vector.broadcast %c15_i32 : i32 to vector<4x256xi32>
    %2 = arith.andi %0, %1 : vector<4x256xi32>
    %c16_i32 = arith.constant 16 : i32
    %3 = vector.broadcast %c16_i32 : i32 to vector<4x256xi32>
    %4 = arith.cmpi sge, %0, %3 : vector<4x256xi32>
    %c1_i32 = arith.constant 1 : i32
    %5 = vector.broadcast %c1_i32 : i32 to vector<4x256xi32>
    %6 = arith.cmpi sge, %2, %5 : vector<4x256xi32>
    %7 = arith.andi %4, %6 : vector<4x256xi1>
    %c16_i32_0 = arith.constant 16 : i32
    %8 = vector.broadcast %c16_i32_0 : i32 to vector<4x256xi32>
    %9 = arith.cmpi sge, %0, %8 : vector<4x256xi32>
    %c16_i32_1 = arith.constant 16 : i32
    %10 = vector.broadcast %c16_i32_1 : i32 to vector<4x256xi32>
    %11 = arith.cmpi sge, %0, %10 : vector<4x256xi32>
    %c15_i32_2 = arith.constant 15 : i32
    %12 = vector.broadcast %c15_i32_2 : i32 to vector<4x256xi32>
    %13 = arith.cmpi slt, %2, %12 : vector<4x256xi32>
    %14 = arith.andi %11, %13 : vector<4x256xi1>
    %c1_i32_3 = arith.constant 1 : i32
    %15 = vector.broadcast %c1_i32_3 : i32 to vector<4x256xi32>
    %16 = arith.cmpi sge, %2, %15 : vector<4x256xi32>
    %c15_i32_4 = arith.constant 15 : i32
    %17 = vector.broadcast %c15_i32_4 : i32 to vector<4x256xi32>
    %18 = arith.cmpi slt, %2, %17 : vector<4x256xi32>
    %c240_i32 = arith.constant 240 : i32
    %19 = vector.broadcast %c240_i32 : i32 to vector<4x256xi32>
    %20 = arith.cmpi slt, %0, %19 : vector<4x256xi32>
    %c1_i32_5 = arith.constant 1 : i32
    %21 = vector.broadcast %c1_i32_5 : i32 to vector<4x256xi32>
    %22 = arith.cmpi sge, %2, %21 : vector<4x256xi32>
    %23 = arith.andi %20, %22 : vector<4x256xi1>
    %c240_i32_6 = arith.constant 240 : i32
    %24 = vector.broadcast %c240_i32_6 : i32 to vector<4x256xi32>
    %25 = arith.cmpi slt, %0, %24 : vector<4x256xi32>
    %c240_i32_7 = arith.constant 240 : i32
    %26 = vector.broadcast %c240_i32_7 : i32 to vector<4x256xi32>
    %27 = arith.cmpi slt, %0, %26 : vector<4x256xi32>
    %c15_i32_8 = arith.constant 15 : i32
    %28 = vector.broadcast %c15_i32_8 : i32 to vector<4x256xi32>
    %29 = arith.cmpi slt, %2, %28 : vector<4x256xi32>
    %30 = arith.andi %27, %29 : vector<4x256xi1>
    %c0 = arith.constant 0 : index
    %c0_9 = arith.constant 0 : index
    %31 = vector.load %arg3[%c0, %c0_9] : memref<8x1xf32, #tpu.memory_space<vmem>>, vector<8x1xf32>
    %c0_10 = arith.constant 0 : index
    %c0_11 = arith.constant 0 : index
    %32 = vector.load %arg5[%c0_10, %c0_11] : memref<1x128xf32, #tpu.memory_space<vmem>>, vector<1x128xf32>
    %c0_12 = arith.constant 0 : index
    %c0_13 = arith.constant 0 : index
    %c0_14 = arith.constant 0 : index
    %33 = vector.load %arg1[%c0_12, %c0_13, %c0_14] : memref<2x4x256xf32, #tpu.memory_space<vmem>>, vector<1x4x256xf32>
    %34 = vector.shape_cast %33 : vector<1x4x256xf32> to vector<4x256xf32>
    %cst = arith.constant 0.000000e+00 : f32
    %35 = vector.broadcast %cst : f32 to vector<8x256xf32>
    %36 = vector.extract_strided_slice %34 {offsets = [0, 239], sizes = [4, 17], strides = [1, 1]} : vector<4x256xf32> to vector<4x17xf32>
    %37 = vector.extract_strided_slice %34 {offsets = [0, 0], sizes = [4, 239], strides = [1, 1]} : vector<4x256xf32> to vector<4x239xf32>
    %38 = tpu.concatenate %36, %37 in 1 : vector<4x17xf32>, vector<4x239xf32> -> vector<4x256xf32>
    %cst_15 = arith.constant 0.000000e+00 : f32
    %39 = vector.broadcast %cst_15 : f32 to vector<4x256xf32>
    %40 = arith.select %7, %38, %39 : vector<4x256xi1>, vector<4x256xf32>
    %c0_16 = arith.constant 0 : index
    %c0_17 = arith.constant 0 : index
    %c0_18 = arith.constant 0 : index
    %41 = vector.load %arg2[%c0_16, %c0_17, %c0_18] : memref<9x8x4xf32, #tpu.memory_space<vmem>>, vector<1x8x4xf32>
    %42 = vector.shape_cast %41 : vector<1x8x4xf32> to vector<8x4xf32>
    %cst_19 = arith.constant dense<0.000000e+00> : vector<8x256xf32>
    %43 = tpu.matmul %42, %40, %cst_19 {dimension_numbers = #tpu.dot_dimension_numbers<[1], [0], [0], [1], [0, 0, 1, 1], [], []>} : vector<8x4xf32>, vector<4x256xf32>, vector<8x256xf32> -> vector<8x256xf32>
    %44 = arith.addf %35, %43 : vector<8x256xf32>
    %45 = vector.extract_strided_slice %34 {offsets = [0, 240], sizes = [4, 16], strides = [1, 1]} : vector<4x256xf32> to vector<4x16xf32>
    %46 = vector.extract_strided_slice %34 {offsets = [0, 0], sizes = [4, 240], strides = [1, 1]} : vector<4x256xf32> to vector<4x240xf32>
    %47 = tpu.concatenate %45, %46 in 1 : vector<4x16xf32>, vector<4x240xf32> -> vector<4x256xf32>
    %cst_20 = arith.constant 0.000000e+00 : f32
    %48 = vector.broadcast %cst_20 : f32 to vector<4x256xf32>
    %49 = arith.select %9, %47, %48 : vector<4x256xi1>, vector<4x256xf32>
    %c1 = arith.constant 1 : index
    %c0_21 = arith.constant 0 : index
    %c0_22 = arith.constant 0 : index
    %50 = vector.load %arg2[%c1, %c0_21, %c0_22] : memref<9x8x4xf32, #tpu.memory_space<vmem>>, vector<1x8x4xf32>
    %51 = vector.shape_cast %50 : vector<1x8x4xf32> to vector<8x4xf32>
    %cst_23 = arith.constant dense<0.000000e+00> : vector<8x256xf32>
    %52 = tpu.matmul %51, %49, %cst_23 {dimension_numbers = #tpu.dot_dimension_numbers<[1], [0], [0], [1], [0, 0, 1, 1], [], []>} : vector<8x4xf32>, vector<4x256xf32>, vector<8x256xf32> -> vector<8x256xf32>
    %53 = arith.addf %44, %52 : vector<8x256xf32>
    %54 = vector.extract_strided_slice %34 {offsets = [0, 241], sizes = [4, 15], strides = [1, 1]} : vector<4x256xf32> to vector<4x15xf32>
    %55 = vector.extract_strided_slice %34 {offsets = [0, 0], sizes = [4, 241], strides = [1, 1]} : vector<4x256xf32> to vector<4x241xf32>
    %56 = tpu.concatenate %54, %55 in 1 : vector<4x15xf32>, vector<4x241xf32> -> vector<4x256xf32>
    %cst_24 = arith.constant 0.000000e+00 : f32
    %57 = vector.broadcast %cst_24 : f32 to vector<4x256xf32>
    %58 = arith.select %14, %56, %57 : vector<4x256xi1>, vector<4x256xf32>
    %c2 = arith.constant 2 : index
    %c0_25 = arith.constant 0 : index
    %c0_26 = arith.constant 0 : index
    %59 = vector.load %arg2[%c2, %c0_25, %c0_26] : memref<9x8x4xf32, #tpu.memory_space<vmem>>, vector<1x8x4xf32>
    %60 = vector.shape_cast %59 : vector<1x8x4xf32> to vector<8x4xf32>
    %cst_27 = arith.constant dense<0.000000e+00> : vector<8x256xf32>
    %61 = tpu.matmul %60, %58, %cst_27 {dimension_numbers = #tpu.dot_dimension_numbers<[1], [0], [0], [1], [0, 0, 1, 1], [], []>} : vector<8x4xf32>, vector<4x256xf32>, vector<8x256xf32> -> vector<8x256xf32>
    %62 = arith.addf %53, %61 : vector<8x256xf32>
    %63 = vector.extract_strided_slice %34 {offsets = [0, 255], sizes = [4, 1], strides = [1, 1]} : vector<4x256xf32> to vector<4x1xf32>
    %64 = vector.extract_strided_slice %34 {offsets = [0, 0], sizes = [4, 255], strides = [1, 1]} : vector<4x256xf32> to vector<4x255xf32>
    %65 = tpu.concatenate %63, %64 in 1 : vector<4x1xf32>, vector<4x255xf32> -> vector<4x256xf32>
    %cst_28 = arith.constant 0.000000e+00 : f32
    %66 = vector.broadcast %cst_28 : f32 to vector<4x256xf32>
    %67 = arith.select %16, %65, %66 : vector<4x256xi1>, vector<4x256xf32>
    %c3 = arith.constant 3 : index
    %c0_29 = arith.constant 0 : index
    %c0_30 = arith.constant 0 : index
    %68 = vector.load %arg2[%c3, %c0_29, %c0_30] : memref<9x8x4xf32, #tpu.memory_space<vmem>>, vector<1x8x4xf32>
    %69 = vector.shape_cast %68 : vector<1x8x4xf32> to vector<8x4xf32>
    %cst_31 = arith.constant dense<0.000000e+00> : vector<8x256xf32>
    %70 = tpu.matmul %69, %67, %cst_31 {dimension_numbers = #tpu.dot_dimension_numbers<[1], [0], [0], [1], [0, 0, 1, 1], [], []>} : vector<8x4xf32>, vector<4x256xf32>, vector<8x256xf32> -> vector<8x256xf32>
    %71 = arith.addf %62, %70 : vector<8x256xf32>
    %c4 = arith.constant 4 : index
    %c0_32 = arith.constant 0 : index
    %c0_33 = arith.constant 0 : index
    %72 = vector.load %arg2[%c4, %c0_32, %c0_33] : memref<9x8x4xf32, #tpu.memory_space<vmem>>, vector<1x8x4xf32>
    %73 = vector.shape_cast %72 : vector<1x8x4xf32> to vector<8x4xf32>
    %cst_34 = arith.constant dense<0.000000e+00> : vector<8x256xf32>
    %74 = tpu.matmul %73, %34, %cst_34 {dimension_numbers = #tpu.dot_dimension_numbers<[1], [0], [0], [1], [0, 0, 1, 1], [], []>} : vector<8x4xf32>, vector<4x256xf32>, vector<8x256xf32> -> vector<8x256xf32>
    %75 = arith.addf %71, %74 : vector<8x256xf32>
    %76 = vector.extract_strided_slice %34 {offsets = [0, 1], sizes = [4, 255], strides = [1, 1]} : vector<4x256xf32> to vector<4x255xf32>
    %77 = vector.extract_strided_slice %34 {offsets = [0, 0], sizes = [4, 1], strides = [1, 1]} : vector<4x256xf32> to vector<4x1xf32>
    %78 = tpu.concatenate %76, %77 in 1 : vector<4x255xf32>, vector<4x1xf32> -> vector<4x256xf32>
    %cst_35 = arith.constant 0.000000e+00 : f32
    %79 = vector.broadcast %cst_35 : f32 to vector<4x256xf32>
    %80 = arith.select %18, %78, %79 : vector<4x256xi1>, vector<4x256xf32>
    %c5 = arith.constant 5 : index
    %c0_36 = arith.constant 0 : index
    %c0_37 = arith.constant 0 : index
    %81 = vector.load %arg2[%c5, %c0_36, %c0_37] : memref<9x8x4xf32, #tpu.memory_space<vmem>>, vector<1x8x4xf32>
    %82 = vector.shape_cast %81 : vector<1x8x4xf32> to vector<8x4xf32>
    %cst_38 = arith.constant dense<0.000000e+00> : vector<8x256xf32>
    %83 = tpu.matmul %82, %80, %cst_38 {dimension_numbers = #tpu.dot_dimension_numbers<[1], [0], [0], [1], [0, 0, 1, 1], [], []>} : vector<8x4xf32>, vector<4x256xf32>, vector<8x256xf32> -> vector<8x256xf32>
    %84 = arith.addf %75, %83 : vector<8x256xf32>
    %85 = vector.extract_strided_slice %34 {offsets = [0, 15], sizes = [4, 241], strides = [1, 1]} : vector<4x256xf32> to vector<4x241xf32>
    %86 = vector.extract_strided_slice %34 {offsets = [0, 0], sizes = [4, 15], strides = [1, 1]} : vector<4x256xf32> to vector<4x15xf32>
    %87 = tpu.concatenate %85, %86 in 1 : vector<4x241xf32>, vector<4x15xf32> -> vector<4x256xf32>
    %cst_39 = arith.constant 0.000000e+00 : f32
    %88 = vector.broadcast %cst_39 : f32 to vector<4x256xf32>
    %89 = arith.select %23, %87, %88 : vector<4x256xi1>, vector<4x256xf32>
    %c6 = arith.constant 6 : index
    %c0_40 = arith.constant 0 : index
    %c0_41 = arith.constant 0 : index
    %90 = vector.load %arg2[%c6, %c0_40, %c0_41] : memref<9x8x4xf32, #tpu.memory_space<vmem>>, vector<1x8x4xf32>
    %91 = vector.shape_cast %90 : vector<1x8x4xf32> to vector<8x4xf32>
    %cst_42 = arith.constant dense<0.000000e+00> : vector<8x256xf32>
    %92 = tpu.matmul %91, %89, %cst_42 {dimension_numbers = #tpu.dot_dimension_numbers<[1], [0], [0], [1], [0, 0, 1, 1], [], []>} : vector<8x4xf32>, vector<4x256xf32>, vector<8x256xf32> -> vector<8x256xf32>
    %93 = arith.addf %84, %92 : vector<8x256xf32>
    %94 = vector.extract_strided_slice %34 {offsets = [0, 16], sizes = [4, 240], strides = [1, 1]} : vector<4x256xf32> to vector<4x240xf32>
    %95 = vector.extract_strided_slice %34 {offsets = [0, 0], sizes = [4, 16], strides = [1, 1]} : vector<4x256xf32> to vector<4x16xf32>
    %96 = tpu.concatenate %94, %95 in 1 : vector<4x240xf32>, vector<4x16xf32> -> vector<4x256xf32>
    %cst_43 = arith.constant 0.000000e+00 : f32
    %97 = vector.broadcast %cst_43 : f32 to vector<4x256xf32>
    %98 = arith.select %25, %96, %97 : vector<4x256xi1>, vector<4x256xf32>
    %c7 = arith.constant 7 : index
    %c0_44 = arith.constant 0 : index
    %c0_45 = arith.constant 0 : index
    %99 = vector.load %arg2[%c7, %c0_44, %c0_45] : memref<9x8x4xf32, #tpu.memory_space<vmem>>, vector<1x8x4xf32>
    %100 = vector.shape_cast %99 : vector<1x8x4xf32> to vector<8x4xf32>
    %cst_46 = arith.constant dense<0.000000e+00> : vector<8x256xf32>
    %101 = tpu.matmul %100, %98, %cst_46 {dimension_numbers = #tpu.dot_dimension_numbers<[1], [0], [0], [1], [0, 0, 1, 1], [], []>} : vector<8x4xf32>, vector<4x256xf32>, vector<8x256xf32> -> vector<8x256xf32>
    %102 = arith.addf %93, %101 : vector<8x256xf32>
    %103 = vector.extract_strided_slice %34 {offsets = [0, 17], sizes = [4, 239], strides = [1, 1]} : vector<4x256xf32> to vector<4x239xf32>
    %104 = vector.extract_strided_slice %34 {offsets = [0, 0], sizes = [4, 17], strides = [1, 1]} : vector<4x256xf32> to vector<4x17xf32>
    %105 = tpu.concatenate %103, %104 in 1 : vector<4x239xf32>, vector<4x17xf32> -> vector<4x256xf32>
    %cst_47 = arith.constant 0.000000e+00 : f32
    %106 = vector.broadcast %cst_47 : f32 to vector<4x256xf32>
    %107 = arith.select %30, %105, %106 : vector<4x256xi1>, vector<4x256xf32>
    %c8 = arith.constant 8 : index
    %c0_48 = arith.constant 0 : index
    %c0_49 = arith.constant 0 : index
    %108 = vector.load %arg2[%c8, %c0_48, %c0_49] : memref<9x8x4xf32, #tpu.memory_space<vmem>>, vector<1x8x4xf32>
    %109 = vector.shape_cast %108 : vector<1x8x4xf32> to vector<8x4xf32>
    %cst_50 = arith.constant dense<0.000000e+00> : vector<8x256xf32>
    %110 = tpu.matmul %109, %107, %cst_50 {dimension_numbers = #tpu.dot_dimension_numbers<[1], [0], [0], [1], [0, 0, 1, 1], [], []>} : vector<8x4xf32>, vector<4x256xf32>, vector<8x256xf32> -> vector<8x256xf32>
    %111 = arith.addf %102, %110 : vector<8x256xf32>
    %112 = vector.broadcast %31 : vector<8x1xf32> to vector<8x256xf32>
    %113 = arith.addf %111, %112 : vector<8x256xf32>
    %cst_51 = arith.constant 0.000000e+00 : f32
    %114 = vector.broadcast %cst_51 : f32 to vector<8x256xf32>
    %115 = arith.maximumf %113, %114 : vector<8x256xf32>
    %c0_52 = arith.constant 0 : index
    %c0_53 = arith.constant 0 : index
    %c0_54 = arith.constant 0 : index
    %116 = vector.load %arg6[%c0_52, %c0_53, %c0_54] : memref<2x8x256xf32, #tpu.memory_space<vmem>>, vector<1x8x256xf32>
    %117 = vector.shape_cast %116 : vector<1x8x256xf32> to vector<8x256xf32>
    %118 = vector.shape_cast %115 : vector<8x256xf32> to vector<1x8x256xf32>
    tpu.vector_store %arg6[%c0_52, %c0_53, %c0_54], %118 {strides = array<i32>} : memref<2x8x256xf32, #tpu.memory_space<vmem>>, vector<1x8x256xf32>,
    %c1_55 = arith.constant 1 : index
    %c0_56 = arith.constant 0 : index
    %c0_57 = arith.constant 0 : index
    %119 = vector.load %arg1[%c1_55, %c0_56, %c0_57] : memref<2x4x256xf32, #tpu.memory_space<vmem>>, vector<1x4x256xf32>
    %120 = vector.shape_cast %119 : vector<1x4x256xf32> to vector<4x256xf32>
    %cst_58 = arith.constant 0.000000e+00 : f32
    %121 = vector.broadcast %cst_58 : f32 to vector<8x256xf32>
    %122 = vector.extract_strided_slice %120 {offsets = [0, 239], sizes = [4, 17], strides = [1, 1]} : vector<4x256xf32> to vector<4x17xf32>
    %123 = vector.extract_strided_slice %120 {offsets = [0, 0], sizes = [4, 239], strides = [1, 1]} : vector<4x256xf32> to vector<4x239xf32>
    %124 = tpu.concatenate %122, %123 in 1 : vector<4x17xf32>, vector<4x239xf32> -> vector<4x256xf32>
    %cst_59 = arith.constant 0.000000e+00 : f32
    %125 = vector.broadcast %cst_59 : f32 to vector<4x256xf32>
    %126 = arith.select %7, %124, %125 : vector<4x256xi1>, vector<4x256xf32>
    %c0_60 = arith.constant 0 : index
    %c0_61 = arith.constant 0 : index
    %c0_62 = arith.constant 0 : index
    %127 = vector.load %arg2[%c0_60, %c0_61, %c0_62] : memref<9x8x4xf32, #tpu.memory_space<vmem>>, vector<1x8x4xf32>
    %128 = vector.shape_cast %127 : vector<1x8x4xf32> to vector<8x4xf32>
    %cst_63 = arith.constant dense<0.000000e+00> : vector<8x256xf32>
    %129 = tpu.matmul %128, %126, %cst_63 {dimension_numbers = #tpu.dot_dimension_numbers<[1], [0], [0], [1], [0, 0, 1, 1], [], []>} : vector<8x4xf32>, vector<4x256xf32>, vector<8x256xf32> -> vector<8x256xf32>
    %130 = arith.addf %121, %129 : vector<8x256xf32>
    %131 = vector.extract_strided_slice %120 {offsets = [0, 240], sizes = [4, 16], strides = [1, 1]} : vector<4x256xf32> to vector<4x16xf32>
    %132 = vector.extract_strided_slice %120 {offsets = [0, 0], sizes = [4, 240], strides = [1, 1]} : vector<4x256xf32> to vector<4x240xf32>
    %133 = tpu.concatenate %131, %132 in 1 : vector<4x16xf32>, vector<4x240xf32> -> vector<4x256xf32>
    %cst_64 = arith.constant 0.000000e+00 : f32
    %134 = vector.broadcast %cst_64 : f32 to vector<4x256xf32>
    %135 = arith.select %9, %133, %134 : vector<4x256xi1>, vector<4x256xf32>
    %c1_65 = arith.constant 1 : index
    %c0_66 = arith.constant 0 : index
    %c0_67 = arith.constant 0 : index
    %136 = vector.load %arg2[%c1_65, %c0_66, %c0_67] : memref<9x8x4xf32, #tpu.memory_space<vmem>>, vector<1x8x4xf32>
    %137 = vector.shape_cast %136 : vector<1x8x4xf32> to vector<8x4xf32>
    %cst_68 = arith.constant dense<0.000000e+00> : vector<8x256xf32>
    %138 = tpu.matmul %137, %135, %cst_68 {dimension_numbers = #tpu.dot_dimension_numbers<[1], [0], [0], [1], [0, 0, 1, 1], [], []>} : vector<8x4xf32>, vector<4x256xf32>, vector<8x256xf32> -> vector<8x256xf32>
    %139 = arith.addf %130, %138 : vector<8x256xf32>
    %140 = vector.extract_strided_slice %120 {offsets = [0, 241], sizes = [4, 15], strides = [1, 1]} : vector<4x256xf32> to vector<4x15xf32>
    %141 = vector.extract_strided_slice %120 {offsets = [0, 0], sizes = [4, 241], strides = [1, 1]} : vector<4x256xf32> to vector<4x241xf32>
    %142 = tpu.concatenate %140, %141 in 1 : vector<4x15xf32>, vector<4x241xf32> -> vector<4x256xf32>
    %cst_69 = arith.constant 0.000000e+00 : f32
    %143 = vector.broadcast %cst_69 : f32 to vector<4x256xf32>
    %144 = arith.select %14, %142, %143 : vector<4x256xi1>, vector<4x256xf32>
    %c2_70 = arith.constant 2 : index
    %c0_71 = arith.constant 0 : index
    %c0_72 = arith.constant 0 : index
    %145 = vector.load %arg2[%c2_70, %c0_71, %c0_72] : memref<9x8x4xf32, #tpu.memory_space<vmem>>, vector<1x8x4xf32>
    %146 = vector.shape_cast %145 : vector<1x8x4xf32> to vector<8x4xf32>
    %cst_73 = arith.constant dense<0.000000e+00> : vector<8x256xf32>
    %147 = tpu.matmul %146, %144, %cst_73 {dimension_numbers = #tpu.dot_dimension_numbers<[1], [0], [0], [1], [0, 0, 1, 1], [], []>} : vector<8x4xf32>, vector<4x256xf32>, vector<8x256xf32> -> vector<8x256xf32>
    %148 = arith.addf %139, %147 : vector<8x256xf32>
    %149 = vector.extract_strided_slice %120 {offsets = [0, 255], sizes = [4, 1], strides = [1, 1]} : vector<4x256xf32> to vector<4x1xf32>
    %150 = vector.extract_strided_slice %120 {offsets = [0, 0], sizes = [4, 255], strides = [1, 1]} : vector<4x256xf32> to vector<4x255xf32>
    %151 = tpu.concatenate %149, %150 in 1 : vector<4x1xf32>, vector<4x255xf32> -> vector<4x256xf32>
    %cst_74 = arith.constant 0.000000e+00 : f32
    %152 = vector.broadcast %cst_74 : f32 to vector<4x256xf32>
    %153 = arith.select %16, %151, %152 : vector<4x256xi1>, vector<4x256xf32>
    %c3_75 = arith.constant 3 : index
    %c0_76 = arith.constant 0 : index
    %c0_77 = arith.constant 0 : index
    %154 = vector.load %arg2[%c3_75, %c0_76, %c0_77] : memref<9x8x4xf32, #tpu.memory_space<vmem>>, vector<1x8x4xf32>
    %155 = vector.shape_cast %154 : vector<1x8x4xf32> to vector<8x4xf32>
    %cst_78 = arith.constant dense<0.000000e+00> : vector<8x256xf32>
    %156 = tpu.matmul %155, %153, %cst_78 {dimension_numbers = #tpu.dot_dimension_numbers<[1], [0], [0], [1], [0, 0, 1, 1], [], []>} : vector<8x4xf32>, vector<4x256xf32>, vector<8x256xf32> -> vector<8x256xf32>
    %157 = arith.addf %148, %156 : vector<8x256xf32>
    %c4_79 = arith.constant 4 : index
    %c0_80 = arith.constant 0 : index
    %c0_81 = arith.constant 0 : index
    %158 = vector.load %arg2[%c4_79, %c0_80, %c0_81] : memref<9x8x4xf32, #tpu.memory_space<vmem>>, vector<1x8x4xf32>
    %159 = vector.shape_cast %158 : vector<1x8x4xf32> to vector<8x4xf32>
    %cst_82 = arith.constant dense<0.000000e+00> : vector<8x256xf32>
    %160 = tpu.matmul %159, %120, %cst_82 {dimension_numbers = #tpu.dot_dimension_numbers<[1], [0], [0], [1], [0, 0, 1, 1], [], []>} : vector<8x4xf32>, vector<4x256xf32>, vector<8x256xf32> -> vector<8x256xf32>
    %161 = arith.addf %157, %160 : vector<8x256xf32>
    %162 = vector.extract_strided_slice %120 {offsets = [0, 1], sizes = [4, 255], strides = [1, 1]} : vector<4x256xf32> to vector<4x255xf32>
    %163 = vector.extract_strided_slice %120 {offsets = [0, 0], sizes = [4, 1], strides = [1, 1]} : vector<4x256xf32> to vector<4x1xf32>
    %164 = tpu.concatenate %162, %163 in 1 : vector<4x255xf32>, vector<4x1xf32> -> vector<4x256xf32>
    %cst_83 = arith.constant 0.000000e+00 : f32
    %165 = vector.broadcast %cst_83 : f32 to vector<4x256xf32>
    %166 = arith.select %18, %164, %165 : vector<4x256xi1>, vector<4x256xf32>
    %c5_84 = arith.constant 5 : index
    %c0_85 = arith.constant 0 : index
    %c0_86 = arith.constant 0 : index
    %167 = vector.load %arg2[%c5_84, %c0_85, %c0_86] : memref<9x8x4xf32, #tpu.memory_space<vmem>>, vector<1x8x4xf32>
    %168 = vector.shape_cast %167 : vector<1x8x4xf32> to vector<8x4xf32>
    %cst_87 = arith.constant dense<0.000000e+00> : vector<8x256xf32>
    %169 = tpu.matmul %168, %166, %cst_87 {dimension_numbers = #tpu.dot_dimension_numbers<[1], [0], [0], [1], [0, 0, 1, 1], [], []>} : vector<8x4xf32>, vector<4x256xf32>, vector<8x256xf32> -> vector<8x256xf32>
    %170 = arith.addf %161, %169 : vector<8x256xf32>
    %171 = vector.extract_strided_slice %120 {offsets = [0, 15], sizes = [4, 241], strides = [1, 1]} : vector<4x256xf32> to vector<4x241xf32>
    %172 = vector.extract_strided_slice %120 {offsets = [0, 0], sizes = [4, 15], strides = [1, 1]} : vector<4x256xf32> to vector<4x15xf32>
    %173 = tpu.concatenate %171, %172 in 1 : vector<4x241xf32>, vector<4x15xf32> -> vector<4x256xf32>
    %cst_88 = arith.constant 0.000000e+00 : f32
    %174 = vector.broadcast %cst_88 : f32 to vector<4x256xf32>
    %175 = arith.select %23, %173, %174 : vector<4x256xi1>, vector<4x256xf32>
    %c6_89 = arith.constant 6 : index
    %c0_90 = arith.constant 0 : index
    %c0_91 = arith.constant 0 : index
    %176 = vector.load %arg2[%c6_89, %c0_90, %c0_91] : memref<9x8x4xf32, #tpu.memory_space<vmem>>, vector<1x8x4xf32>
    %177 = vector.shape_cast %176 : vector<1x8x4xf32> to vector<8x4xf32>
    %cst_92 = arith.constant dense<0.000000e+00> : vector<8x256xf32>
    %178 = tpu.matmul %177, %175, %cst_92 {dimension_numbers = #tpu.dot_dimension_numbers<[1], [0], [0], [1], [0, 0, 1, 1], [], []>} : vector<8x4xf32>, vector<4x256xf32>, vector<8x256xf32> -> vector<8x256xf32>
    %179 = arith.addf %170, %178 : vector<8x256xf32>
    %180 = vector.extract_strided_slice %120 {offsets = [0, 16], sizes = [4, 240], strides = [1, 1]} : vector<4x256xf32> to vector<4x240xf32>
    %181 = vector.extract_strided_slice %120 {offsets = [0, 0], sizes = [4, 16], strides = [1, 1]} : vector<4x256xf32> to vector<4x16xf32>
    %182 = tpu.concatenate %180, %181 in 1 : vector<4x240xf32>, vector<4x16xf32> -> vector<4x256xf32>
    %cst_93 = arith.constant 0.000000e+00 : f32
    %183 = vector.broadcast %cst_93 : f32 to vector<4x256xf32>
    %184 = arith.select %25, %182, %183 : vector<4x256xi1>, vector<4x256xf32>
    %c7_94 = arith.constant 7 : index
    %c0_95 = arith.constant 0 : index
    %c0_96 = arith.constant 0 : index
    %185 = vector.load %arg2[%c7_94, %c0_95, %c0_96] : memref<9x8x4xf32, #tpu.memory_space<vmem>>, vector<1x8x4xf32>
    %186 = vector.shape_cast %185 : vector<1x8x4xf32> to vector<8x4xf32>
    %cst_97 = arith.constant dense<0.000000e+00> : vector<8x256xf32>
    %187 = tpu.matmul %186, %184, %cst_97 {dimension_numbers = #tpu.dot_dimension_numbers<[1], [0], [0], [1], [0, 0, 1, 1], [], []>} : vector<8x4xf32>, vector<4x256xf32>, vector<8x256xf32> -> vector<8x256xf32>
    %188 = arith.addf %179, %187 : vector<8x256xf32>
    %189 = vector.extract_strided_slice %120 {offsets = [0, 17], sizes = [4, 239], strides = [1, 1]} : vector<4x256xf32> to vector<4x239xf32>
    %190 = vector.extract_strided_slice %120 {offsets = [0, 0], sizes = [4, 17], strides = [1, 1]} : vector<4x256xf32> to vector<4x17xf32>
    %191 = tpu.concatenate %189, %190 in 1 : vector<4x239xf32>, vector<4x17xf32> -> vector<4x256xf32>
    %cst_98 = arith.constant 0.000000e+00 : f32
    %192 = vector.broadcast %cst_98 : f32 to vector<4x256xf32>
    %193 = arith.select %30, %191, %192 : vector<4x256xi1>, vector<4x256xf32>
    %c8_99 = arith.constant 8 : index
    %c0_100 = arith.constant 0 : index
    %c0_101 = arith.constant 0 : index
    %194 = vector.load %arg2[%c8_99, %c0_100, %c0_101] : memref<9x8x4xf32, #tpu.memory_space<vmem>>, vector<1x8x4xf32>
    %195 = vector.shape_cast %194 : vector<1x8x4xf32> to vector<8x4xf32>
    %cst_102 = arith.constant dense<0.000000e+00> : vector<8x256xf32>
    %196 = tpu.matmul %195, %193, %cst_102 {dimension_numbers = #tpu.dot_dimension_numbers<[1], [0], [0], [1], [0, 0, 1, 1], [], []>} : vector<8x4xf32>, vector<4x256xf32>, vector<8x256xf32> -> vector<8x256xf32>
    %197 = arith.addf %188, %196 : vector<8x256xf32>
    %198 = vector.broadcast %31 : vector<8x1xf32> to vector<8x256xf32>
    %199 = arith.addf %197, %198 : vector<8x256xf32>
    %cst_103 = arith.constant 0.000000e+00 : f32
    %200 = vector.broadcast %cst_103 : f32 to vector<8x256xf32>
    %201 = arith.maximumf %199, %200 : vector<8x256xf32>
    %c1_104 = arith.constant 1 : index
    %c0_105 = arith.constant 0 : index
    %c0_106 = arith.constant 0 : index
    %202 = vector.load %arg6[%c1_104, %c0_105, %c0_106] : memref<2x8x256xf32, #tpu.memory_space<vmem>>, vector<1x8x256xf32>
    %203 = vector.shape_cast %202 : vector<1x8x256xf32> to vector<8x256xf32>
    %204 = vector.shape_cast %201 : vector<8x256xf32> to vector<1x8x256xf32>
    tpu.vector_store %arg6[%c1_104, %c0_105, %c0_106], %204 {strides = array<i32>} : memref<2x8x256xf32, #tpu.memory_space<vmem>>, vector<1x8x256xf32>,
    %c0_107 = arith.constant 0 : index
    %c0_108 = arith.constant 0 : index
    %c0_109 = arith.constant 0 : index
    %205 = vector.load %arg4[%c0_107, %c0_108, %c0_109] : memref<8x256x128xf32, #tpu.memory_space<vmem>>, vector<1x256x128xf32>
    %206 = vector.shape_cast %205 : vector<1x256x128xf32> to vector<256x128xf32>
    %207 = vector.extract_strided_slice %115 {offsets = [0, 0], sizes = [1, 256], strides = [1, 1]} : vector<8x256xf32> to vector<1x256xf32>
    %cst_110 = arith.constant dense<0.000000e+00> : vector<1x128xf32>
    %208 = tpu.matmul %207, %206, %cst_110 {dimension_numbers = #tpu.dot_dimension_numbers<[1], [0], [0], [1], [0, 0, 1, 1], [], []>} : vector<1x256xf32>, vector<256x128xf32>, vector<1x128xf32> -> vector<1x128xf32>
    %209 = arith.addf %32, %208 : vector<1x128xf32>
    %210 = vector.extract_strided_slice %201 {offsets = [0, 0], sizes = [1, 256], strides = [1, 1]} : vector<8x256xf32> to vector<1x256xf32>
    %cst_111 = arith.constant dense<0.000000e+00> : vector<1x128xf32>
    %211 = tpu.matmul %210, %206, %cst_111 {dimension_numbers = #tpu.dot_dimension_numbers<[1], [0], [0], [1], [0, 0, 1, 1], [], []>} : vector<1x256xf32>, vector<256x128xf32>, vector<1x128xf32> -> vector<1x128xf32>
    %212 = arith.addf %32, %211 : vector<1x128xf32>
    %c1_112 = arith.constant 1 : index
    %c0_113 = arith.constant 0 : index
    %c0_114 = arith.constant 0 : index
    %213 = vector.load %arg4[%c1_112, %c0_113, %c0_114] : memref<8x256x128xf32, #tpu.memory_space<vmem>>, vector<1x256x128xf32>
    %214 = vector.shape_cast %213 : vector<1x256x128xf32> to vector<256x128xf32>
    %215 = vector.extract_strided_slice %115 {offsets = [1, 0], sizes = [1, 256], strides = [1, 1]} : vector<8x256xf32> to vector<1x256xf32>
    %cst_115 = arith.constant dense<0.000000e+00> : vector<1x128xf32>
    %216 = tpu.matmul %215, %214, %cst_115 {dimension_numbers = #tpu.dot_dimension_numbers<[1], [0], [0], [1], [0, 0, 1, 1], [], []>} : vector<1x256xf32>, vector<256x128xf32>, vector<1x128xf32> -> vector<1x128xf32>
    %217 = arith.addf %209, %216 : vector<1x128xf32>
    %218 = vector.extract_strided_slice %201 {offsets = [1, 0], sizes = [1, 256], strides = [1, 1]} : vector<8x256xf32> to vector<1x256xf32>
    %cst_116 = arith.constant dense<0.000000e+00> : vector<1x128xf32>
    %219 = tpu.matmul %218, %214, %cst_116 {dimension_numbers = #tpu.dot_dimension_numbers<[1], [0], [0], [1], [0, 0, 1, 1], [], []>} : vector<1x256xf32>, vector<256x128xf32>, vector<1x128xf32> -> vector<1x128xf32>
    %220 = arith.addf %212, %219 : vector<1x128xf32>
    %c2_117 = arith.constant 2 : index
    %c0_118 = arith.constant 0 : index
    %c0_119 = arith.constant 0 : index
    %221 = vector.load %arg4[%c2_117, %c0_118, %c0_119] : memref<8x256x128xf32, #tpu.memory_space<vmem>>, vector<1x256x128xf32>
    %222 = vector.shape_cast %221 : vector<1x256x128xf32> to vector<256x128xf32>
    %223 = vector.extract_strided_slice %115 {offsets = [2, 0], sizes = [1, 256], strides = [1, 1]} : vector<8x256xf32> to vector<1x256xf32>
    %cst_120 = arith.constant dense<0.000000e+00> : vector<1x128xf32>
    %224 = tpu.matmul %223, %222, %cst_120 {dimension_numbers = #tpu.dot_dimension_numbers<[1], [0], [0], [1], [0, 0, 1, 1], [], []>} : vector<1x256xf32>, vector<256x128xf32>, vector<1x128xf32> -> vector<1x128xf32>
    %225 = arith.addf %217, %224 : vector<1x128xf32>
    %226 = vector.extract_strided_slice %201 {offsets = [2, 0], sizes = [1, 256], strides = [1, 1]} : vector<8x256xf32> to vector<1x256xf32>
    %cst_121 = arith.constant dense<0.000000e+00> : vector<1x128xf32>
    %227 = tpu.matmul %226, %222, %cst_121 {dimension_numbers = #tpu.dot_dimension_numbers<[1], [0], [0], [1], [0, 0, 1, 1], [], []>} : vector<1x256xf32>, vector<256x128xf32>, vector<1x128xf32> -> vector<1x128xf32>
    %228 = arith.addf %220, %227 : vector<1x128xf32>
    %c3_122 = arith.constant 3 : index
    %c0_123 = arith.constant 0 : index
    %c0_124 = arith.constant 0 : index
    %229 = vector.load %arg4[%c3_122, %c0_123, %c0_124] : memref<8x256x128xf32, #tpu.memory_space<vmem>>, vector<1x256x128xf32>
    %230 = vector.shape_cast %229 : vector<1x256x128xf32> to vector<256x128xf32>
    %231 = vector.extract_strided_slice %115 {offsets = [3, 0], sizes = [1, 256], strides = [1, 1]} : vector<8x256xf32> to vector<1x256xf32>
    %cst_125 = arith.constant dense<0.000000e+00> : vector<1x128xf32>
    %232 = tpu.matmul %231, %230, %cst_125 {dimension_numbers = #tpu.dot_dimension_numbers<[1], [0], [0], [1], [0, 0, 1, 1], [], []>} : vector<1x256xf32>, vector<256x128xf32>, vector<1x128xf32> -> vector<1x128xf32>
    %233 = arith.addf %225, %232 : vector<1x128xf32>
    %234 = vector.extract_strided_slice %201 {offsets = [3, 0], sizes = [1, 256], strides = [1, 1]} : vector<8x256xf32> to vector<1x256xf32>
    %cst_126 = arith.constant dense<0.000000e+00> : vector<1x128xf32>
    %235 = tpu.matmul %234, %230, %cst_126 {dimension_numbers = #tpu.dot_dimension_numbers<[1], [0], [0], [1], [0, 0, 1, 1], [], []>} : vector<1x256xf32>, vector<256x128xf32>, vector<1x128xf32> -> vector<1x128xf32>
    %236 = arith.addf %228, %235 : vector<1x128xf32>
    %c4_127 = arith.constant 4 : index
    %c0_128 = arith.constant 0 : index
    %c0_129 = arith.constant 0 : index
    %237 = vector.load %arg4[%c4_127, %c0_128, %c0_129] : memref<8x256x128xf32, #tpu.memory_space<vmem>>, vector<1x256x128xf32>
    %238 = vector.shape_cast %237 : vector<1x256x128xf32> to vector<256x128xf32>
    %239 = vector.extract_strided_slice %115 {offsets = [4, 0], sizes = [1, 256], strides = [1, 1]} : vector<8x256xf32> to vector<1x256xf32>
    %cst_130 = arith.constant dense<0.000000e+00> : vector<1x128xf32>
    %240 = tpu.matmul %239, %238, %cst_130 {dimension_numbers = #tpu.dot_dimension_numbers<[1], [0], [0], [1], [0, 0, 1, 1], [], []>} : vector<1x256xf32>, vector<256x128xf32>, vector<1x128xf32> -> vector<1x128xf32>
    %241 = arith.addf %233, %240 : vector<1x128xf32>
    %242 = vector.extract_strided_slice %201 {offsets = [4, 0], sizes = [1, 256], strides = [1, 1]} : vector<8x256xf32> to vector<1x256xf32>
    %cst_131 = arith.constant dense<0.000000e+00> : vector<1x128xf32>
    %243 = tpu.matmul %242, %238, %cst_131 {dimension_numbers = #tpu.dot_dimension_numbers<[1], [0], [0], [1], [0, 0, 1, 1], [], []>} : vector<1x256xf32>, vector<256x128xf32>, vector<1x128xf32> -> vector<1x128xf32>
    %244 = arith.addf %236, %243 : vector<1x128xf32>
    %c5_132 = arith.constant 5 : index
    %c0_133 = arith.constant 0 : index
    %c0_134 = arith.constant 0 : index
    %245 = vector.load %arg4[%c5_132, %c0_133, %c0_134] : memref<8x256x128xf32, #tpu.memory_space<vmem>>, vector<1x256x128xf32>
    %246 = vector.shape_cast %245 : vector<1x256x128xf32> to vector<256x128xf32>
    %247 = vector.extract_strided_slice %115 {offsets = [5, 0], sizes = [1, 256], strides = [1, 1]} : vector<8x256xf32> to vector<1x256xf32>
    %cst_135 = arith.constant dense<0.000000e+00> : vector<1x128xf32>
    %248 = tpu.matmul %247, %246, %cst_135 {dimension_numbers = #tpu.dot_dimension_numbers<[1], [0], [0], [1], [0, 0, 1, 1], [], []>} : vector<1x256xf32>, vector<256x128xf32>, vector<1x128xf32> -> vector<1x128xf32>
    %249 = arith.addf %241, %248 : vector<1x128xf32>
    %250 = vector.extract_strided_slice %201 {offsets = [5, 0], sizes = [1, 256], strides = [1, 1]} : vector<8x256xf32> to vector<1x256xf32>
    %cst_136 = arith.constant dense<0.000000e+00> : vector<1x128xf32>
    %251 = tpu.matmul %250, %246, %cst_136 {dimension_numbers = #tpu.dot_dimension_numbers<[1], [0], [0], [1], [0, 0, 1, 1], [], []>} : vector<1x256xf32>, vector<256x128xf32>, vector<1x128xf32> -> vector<1x128xf32>
    %252 = arith.addf %244, %251 : vector<1x128xf32>
    %c6_137 = arith.constant 6 : index
    %c0_138 = arith.constant 0 : index
    %c0_139 = arith.constant 0 : index
    %253 = vector.load %arg4[%c6_137, %c0_138, %c0_139] : memref<8x256x128xf32, #tpu.memory_space<vmem>>, vector<1x256x128xf32>
    %254 = vector.shape_cast %253 : vector<1x256x128xf32> to vector<256x128xf32>
    %255 = vector.extract_strided_slice %115 {offsets = [6, 0], sizes = [1, 256], strides = [1, 1]} : vector<8x256xf32> to vector<1x256xf32>
    %cst_140 = arith.constant dense<0.000000e+00> : vector<1x128xf32>
    %256 = tpu.matmul %255, %254, %cst_140 {dimension_numbers = #tpu.dot_dimension_numbers<[1], [0], [0], [1], [0, 0, 1, 1], [], []>} : vector<1x256xf32>, vector<256x128xf32>, vector<1x128xf32> -> vector<1x128xf32>
    %257 = arith.addf %249, %256 : vector<1x128xf32>
    %258 = vector.extract_strided_slice %201 {offsets = [6, 0], sizes = [1, 256], strides = [1, 1]} : vector<8x256xf32> to vector<1x256xf32>
    %cst_141 = arith.constant dense<0.000000e+00> : vector<1x128xf32>
    %259 = tpu.matmul %258, %254, %cst_141 {dimension_numbers = #tpu.dot_dimension_numbers<[1], [0], [0], [1], [0, 0, 1, 1], [], []>} : vector<1x256xf32>, vector<256x128xf32>, vector<1x128xf32> -> vector<1x128xf32>
    %260 = arith.addf %252, %259 : vector<1x128xf32>
    %c7_142 = arith.constant 7 : index
    %c0_143 = arith.constant 0 : index
    %c0_144 = arith.constant 0 : index
    %261 = vector.load %arg4[%c7_142, %c0_143, %c0_144] : memref<8x256x128xf32, #tpu.memory_space<vmem>>, vector<1x256x128xf32>
    %262 = vector.shape_cast %261 : vector<1x256x128xf32> to vector<256x128xf32>
    %263 = vector.extract_strided_slice %115 {offsets = [7, 0], sizes = [1, 256], strides = [1, 1]} : vector<8x256xf32> to vector<1x256xf32>
    %cst_145 = arith.constant dense<0.000000e+00> : vector<1x128xf32>
    %264 = tpu.matmul %263, %262, %cst_145 {dimension_numbers = #tpu.dot_dimension_numbers<[1], [0], [0], [1], [0, 0, 1, 1], [], []>} : vector<1x256xf32>, vector<256x128xf32>, vector<1x128xf32> -> vector<1x128xf32>
    %265 = arith.addf %257, %264 : vector<1x128xf32>
    %266 = vector.extract_strided_slice %201 {offsets = [7, 0], sizes = [1, 256], strides = [1, 1]} : vector<8x256xf32> to vector<1x256xf32>
    %cst_146 = arith.constant dense<0.000000e+00> : vector<1x128xf32>
    %267 = tpu.matmul %266, %262, %cst_146 {dimension_numbers = #tpu.dot_dimension_numbers<[1], [0], [0], [1], [0, 0, 1, 1], [], []>} : vector<1x256xf32>, vector<256x128xf32>, vector<1x128xf32> -> vector<1x128xf32>
    %268 = arith.addf %260, %267 : vector<1x128xf32>
    %c0_147 = arith.constant 0 : index
    %c0_148 = arith.constant 0 : index
    %269 = vector.load %arg7[%c0_147, %c0_148] : memref<2x128xf32, #tpu.memory_space<vmem>>, vector<1x128xf32>
    tpu.vector_store %arg7[%c0_147, %c0_148], %265 {strides = array<i32>} : memref<2x128xf32, #tpu.memory_space<vmem>>, vector<1x128xf32>,
    %c1_149 = arith.constant 1 : index
    %c0_150 = arith.constant 0 : index
    %270 = vector.load %arg7[%c1_149, %c0_150] : memref<2x128xf32, #tpu.memory_space<vmem>>, vector<1x128xf32>
    tpu.vector_store %arg7[%c1_149, %c0_150], %268 {strides = array<i32>} : memref<2x128xf32, #tpu.memory_space<vmem>>, vector<1x128xf32>,
    return
  }
  func.func @transform_0(%arg0: i32) -> (i32, i32, i32) {
    %c0_i32 = arith.constant 0 : i32
    %c0_i32_0 = arith.constant 0 : i32
    %c0_i32_1 = arith.constant 0 : i32
    %c0_i32_2 = arith.constant 0 : i32
    return %c0_i32, %c0_i32_0, %c0_i32_1 : i32, i32, i32
  }
  func.func @transform_1(%arg0: i32) -> (i32, i32, i32) {
    %c0_i32 = arith.constant 0 : i32
    %c0_i32_0 = arith.constant 0 : i32
    %c0_i32_1 = arith.constant 0 : i32
    %c0_i32_2 = arith.constant 0 : i32
    return %c0_i32, %c0_i32_0, %c0_i32_1 : i32, i32, i32
  }
  func.func @transform_2(%arg0: i32) -> (i32, i32) {
    %c0_i32 = arith.constant 0 : i32
    %c0_i32_0 = arith.constant 0 : i32
    %c0_i32_1 = arith.constant 0 : i32
    return %c0_i32, %c0_i32_0 : i32, i32
  }
  func.func @transform_3(%arg0: i32) -> (i32, i32, i32) {
    %c0_i32 = arith.constant 0 : i32
    %c0_i32_0 = arith.constant 0 : i32
    %c0_i32_1 = arith.constant 0 : i32
    %c0_i32_2 = arith.constant 0 : i32
    return %c0_i32, %c0_i32_0, %c0_i32_1 : i32, i32, i32
  }
  func.func @transform_4(%arg0: i32) -> (i32, i32) {
    %c0_i32 = arith.constant 0 : i32
    %c0_i32_0 = arith.constant 0 : i32
    %c0_i32_1 = arith.constant 0 : i32
    return %c0_i32, %c0_i32_0 : i32, i32
  }
  func.func @transform_5(%arg0: i32) -> (i32, i32, i32) {
    %c0_i32 = arith.constant 0 : i32
    %c0_i32_0 = arith.constant 0 : i32
    %c0_i32_1 = arith.constant 0 : i32
    %c0_i32_2 = arith.constant 0 : i32
    return %c0_i32, %c0_i32_0, %c0_i32_1 : i32, i32, i32
  }
  func.func @transform_6(%arg0: i32) -> (i32, i32) {
    %c0_i32 = arith.constant 0 : i32
    %c0_i32_0 = arith.constant 0 : i32
    %c0_i32_1 = arith.constant 0 : i32
    return %c0_i32, %c0_i32_0 : i32, i32
  }
}

</mosaic_0001>

<llo_original>
// kernel: layer_forward.1
$region0: #{layer_forward.1}
  #allocation0 [shape = 'u32[]', space=smem, size = 0x4, offset = 0x4, fixed_abs, tag = 'smem constant byte address 0x4 - core index']
  #allocation1 [shape = 'u32[144,128]{1,0:T(1,128)}', space=vmem, size = 0x12000, scoped, tag = 'internal scratch']
  %s0 = inlined_call_operand.vmem [shape: f32[2,4,256], index: 0, kind: input, shape index: {}]
  %s1 = inlined_call_operand.vmem [shape: f32[9,8,4], index: 1, kind: input, shape index: {}]
  %s2 = inlined_call_operand.vmem [shape: f32[8,1], index: 2, kind: input, shape index: {}]
  %s3 = inlined_call_operand.hbm [shape: f32[8,256,128], index: 3, kind: input, shape index: {}]
  %s4 = inlined_call_operand.vmem [shape: f32[1,128], index: 4, kind: input, shape index: {}]
  %s5 = inlined_call_operand.vmem [shape: f32[2,8,256], index: 5, kind: output, shape index: {0}]
  %s6 = inlined_call_operand.hbm [shape: f32[2,128], index: 6, kind: output, shape index: {1}]
  %7 = xla_tuple %s5, %s6
  %s8 = sld [smem:[#allocation0]]
  $region42: #{layer_forward.1} parent=0
    _
  %s10 = ssub.s32 1, %s8
  %s11 = scalar_select 0, %s10, %s8
  $region1: #{layer_forward.1} parent=0
    #allocation2 [shape = 'u8[1048576]{0}', space=vmem, size = 0x100000, scoped, tag = 'input window, operand 3, single buffered']
    #allocation3 [shape = 's32[1]{0}', space=sflag, size = 0x4, scoped, tag = 'scoped memory for layer_forward.1']
    #allocation4 [shape = 's32[1]{0}', space=sflag, size = 0x4, scoped, tag = 'scoped memory for layer_forward.1']
    #allocation5 [shape = 'u8[1024]{0}', space=vmem, size = 0x400, scoped, tag = 'output window, operand 1, single buffered']
    %12 = vsyncpa [#allocation3], 0
    %13 = vsyncpa [#allocation4], 0
    // Predicated region
    $region2: #{layer_forward.1} parent=1 // pred_check
      _
    $region3: #{layer_forward.1} parent=1 // pred_check_branch
      %15 = sbr.rel (0) target = $region5
    $region4: #{layer_forward.1} parent=1 // pred_region
      _
    $region5: #{layer_forward.1} parent=1 // pred_fallthru
      _
    // Predicated region
    $region6: #{layer_forward.1} parent=1 // pred_check
      _
    $region7: #{layer_forward.1} parent=1 // pred_check_branch
      %17 = sbr.rel (0) target = $region9
    $region8: #{layer_forward.1} parent=1 // pred_region
      _
    $region9: #{layer_forward.1} parent=1 // pred_fallthru
      _
    // Predicated region
    $region10: #{layer_forward.1} parent=1 // pred_check
      _
    $region11: #{layer_forward.1} parent=1 // pred_check_branch
      %19 = sbr.rel (0) target = $region13
    $region12: #{layer_forward.1} parent=1 // pred_region
      _
    $region13: #{layer_forward.1} parent=1 // pred_fallthru
      _
    // Predicated region
    $region14: #{layer_forward.1} parent=1 // pred_check
      _
    $region15: #{layer_forward.1} parent=1 // pred_check_branch
      %21 = sbr.rel (0) target = $region17
    $region16: #{layer_forward.1} parent=1 // pred_region
      %s23 = ssub.s32 32768, 32768
      %24 = vsyncadd [#allocation3], %s23
      %s25 = sshll.u32 [#allocation2], 4
      %s26 = int_to_ptr.vmem [resolvable:$true] %s25
      %31 = dma.hbm_to_vmem [thread:$0]  %s3, 32768, %s26, [#allocation3], 128, 128, 8
    $region17: #{layer_forward.1} parent=1 // pred_fallthru
      _
    // Predicated region
    $region18: #{layer_forward.1} parent=1 // pred_check
      _
    $region19: #{layer_forward.1} parent=1 // pred_check_branch
      %33 = sbr.rel (0) target = $region21
    $region20: #{layer_forward.1} parent=1 // pred_region
      _
    $region21: #{layer_forward.1} parent=1 // pred_fallthru
      _
    // Predicated region
    $region22: #{layer_forward.1} parent=1 // pred_check
      _
    $region23: #{layer_forward.1} parent=1 // pred_check_branch
      %35 = sbr.rel (0) target = $region25
    $region24: #{layer_forward.1} parent=1 // pred_region
      %36 = dma.done [#allocation3], 32768
    $region25: #{layer_forward.1} parent=1 // pred_fallthru
      _
    %v37 = vlaneseq
    %v38 = vand.u32 %v37, 127
    %v39 = vadd.s32 %v38, 128
    %v40 = vand.u32 %v38, 15
    %v41 = vand.u32 %v39, 15
    %vm42 = vcmp.ge.s32.totalorder %v38, 16
    %vm43 = vcmp.ge.s32.totalorder %v39, 16
    %vm44 = vcmp.ge.s32.totalorder %v40, 1
    %vm45 = vcmp.ge.s32.totalorder %v41, 1
    %vm46 = vmand %vm42, %vm44
    %vm47 = vmand %vm43, %vm45
    %vm48 = vcmp.lt.s32.totalorder %v40, 15
    %vm49 = vcmp.lt.s32.totalorder %v41, 15
    %vm50 = vmand %vm42, %vm48
    %vm51 = vmand %vm43, %vm49
    %vm52 = vcmp.lt.s32.totalorder %v38, 240
    %vm53 = vcmp.lt.s32.totalorder %v39, 240
    %vm54 = vmand %vm52, %vm44
    %vm55 = vmand %vm53, %vm45
    %vm56 = vmand %vm52, %vm48
    %vm57 = vmand %vm53, %vm49
    %v58 = vld [vmem:[%s2] sm:$0xff]
    %v59 = vld [vmem:[%s4] sm:$0x1]
    %v60 = vld [vmem:[%s0] sm:$0xff]
    %v62 = vcombine.high %v60, %v60
    %63 = vrot.lane.b32.xlu0 %v62, 17
    %v64 = vpop.permute.xlu0 %63
    %66 = vrot.lane.b32.xlu0 %v60, 17
    %v67 = vpop.permute.xlu0 %66
    %vm68 = vcmask 138240
    %v69 = vsel %vm68, %v67, %v64
    %v72 = vsel %vm68, %v64, %v67
    %v73 = vsel %vm46, %v72, 0.0
    %v74 = vsel %vm47, %v69, 0.0
    %v75 = vld [vmem:[%s1] sm:$0xff]
    %76 = vrot.lane.b32.xlu0 %v62, 16
    %v77 = vpop.permute.xlu0 %76
    %79 = vrot.lane.b32.xlu0 %v60, 16
    %v80 = vpop.permute.xlu0 %79
    %vm81 = vcmask 130048
    %v82 = vsel %vm81, %v80, %v77
    %v85 = vsel %vm81, %v77, %v80
    %v86 = vsel %vm42, %v85, 0.0
    %v87 = vsel %vm43, %v82, 0.0
    %s88 = scalar_lea.vmem %s1, 8
    %v89 = vld [vmem:[%s88] sm:$0xff]
    %vm90 = vcmask 31744
    %v92 = vsel %vm90, %v89, 0
    %vm94 = vcmask 1043456
    %v96 = vsel %vm94, %v86, 0
    %v99 = vsel %vm94, %v87, 0
    %101 = vmatprep.subr.mxu0 %v99
    %102 = vmatpush1.msra.mxu0 %v96
    %103 = vmatprep.subr.mxu0 0.0
    %104 = vmatpush1.msra.mxu0 0.0
    %105 = vmatprep.subr.mxu0 0.0
    %106 = vmatpush1.msra.mxu0 0.0
    %107 = vmatprep.subr.mxu0 0.0
    %108 = vmatpush1.msra.mxu0 0.0
    %109 = vmatprep.subr.mxu0 0.0
    %110 = vmatpush1.msra.mxu0 0.0
    %111 = vmatprep.subr.mxu0 0.0
    %112 = vmatpush1.msra.mxu0 0.0
    %113 = vmatprep.subr.mxu0 0.0
    %114 = vmatpush1.msra.mxu0 0.0
    %115 = vmatprep.subr.mxu0 0.0
    %116 = vmatpush1.msra.mxu0 0.0
    %117 = vmatprep.subr.mxu0 0.0
    %118 = vmatpush1.msra.mxu0 0.0
    %119 = vmatprep.subr.mxu0 0.0
    %120 = vmatpush1.msra.mxu0 0.0
    %121 = vmatprep.subr.mxu0 0.0
    %122 = vmatpush1.msra.mxu0 0.0
    %123 = vmatprep.subr.mxu0 0.0
    %124 = vmatpush1.msra.mxu0 0.0
    %125 = vmatprep.subr.mxu0 0.0
    %126 = vmatpush1.msra.mxu0 0.0
    %127 = vmatprep.subr.mxu0 0.0
    %128 = vmatpush1.msra.mxu0 0.0
    %129 = vmatprep.subr.mxu0 0.0
    %130 = vmatpush1.msra.mxu0 0.0
    %131 = vmatprep.subr.mxu0 0.0
    %132 = vmatpush1.msra.mxu0 0.0
    %133 = vmatprep.subr.mxu0 0.0
    %134 = vmatpush1.msra.mxu0 0.0
    %135 = vmatprep.subr.mxu0 0.0
    %136 = vmatpush1.msra.mxu0 0.0
    %137 = vmatprep.subr.mxu0 0.0
    %138 = vmatpush1.msra.mxu0 0.0
    %139 = vmatprep.subr.mxu0 0.0
    %140 = vmatpush1.msra.mxu0 0.0
    %141 = vmatprep.subr.mxu0 0.0
    %142 = vmatpush1.msra.mxu0 0.0
    %143 = vmatprep.subr.mxu0 0.0
    %144 = vmatpush1.msra.mxu0 0.0
    %145 = vmatprep.subr.mxu0 0.0
    %146 = vmatpush1.msra.mxu0 0.0
    %147 = vmatprep.subr.mxu0 0.0
    %148 = vmatpush1.msra.mxu0 0.0
    %149 = vmatprep.subr.mxu0 0.0
    %150 = vmatpush1.msra.mxu0 0.0
    %151 = vmatprep.subr.mxu0 0.0
    %152 = vmatpush1.msra.mxu0 0.0
    %153 = vmatprep.subr.mxu0 0.0
    %154 = vmatpush1.msra.mxu0 0.0
    %155 = vmatprep.subr.mxu0 0.0
    %156 = vmatpush1.msra.mxu0 0.0
    %157 = vmatprep.subr.mxu0 0.0
    %158 = vmatpush1.msra.mxu0 0.0
    %159 = vmatprep.subr.mxu0 0.0
    %160 = vmatpush1.msra.mxu0 0.0
    %161 = vmatprep.subr.mxu0 0.0
    %162 = vmatpush1.msra.mxu0 0.0
    %163 = vmatprep.subr.mxu0 0.0
    %164 = vmatpush1.msra.mxu0 0.0
    %165 = vmatprep.mubr.f32.mxu0 0.0
    %166 = vmatmul.mubr.f32.gmra.mrb[0].mxu0 %v92
    %v167 = vpop.f32.mrb[0].mxu0
    %v168 = vadd.f32 0.0, %v167
    %v169 = vpop.f32.mrb[0].mxu0
    %v170 = vadd.f32 0.0, %v169
    %171 = vdwg.mxu0
    %v173 = vsel %vm90, %v75, 0
    %v176 = vsel %vm94, %v73, 0
    %v179 = vsel %vm94, %v74, 0
    %181 = vmatprep.subr.mxu0 %v179
    %182 = vmatpush1.msra.mxu0 %v176
    %183 = vmatprep.subr.mxu0 0.0
    %184 = vmatpush1.msra.mxu0 0.0
    %185 = vmatprep.subr.mxu0 0.0
    %186 = vmatpush1.msra.mxu0 0.0
    %187 = vmatprep.subr.mxu0 0.0
    %188 = vmatpush1.msra.mxu0 0.0
    %189 = vmatprep.subr.mxu0 0.0
    %190 = vmatpush1.msra.mxu0 0.0
    %191 = vmatprep.subr.mxu0 0.0
    %192 = vmatpush1.msra.mxu0 0.0
    %193 = vmatprep.subr.mxu0 0.0
    %194 = vmatpush1.msra.mxu0 0.0
    %195 = vmatprep.subr.mxu0 0.0
    %196 = vmatpush1.msra.mxu0 0.0
    %197 = vmatprep.subr.mxu0 0.0
    %198 = vmatpush1.msra.mxu0 0.0
    %199 = vmatprep.subr.mxu0 0.0
    %200 = vmatpush1.msra.mxu0 0.0
    %201 = vmatprep.subr.mxu0 0.0
    %202 = vmatpush1.msra.mxu0 0.0
    %203 = vmatprep.subr.mxu0 0.0
    %204 = vmatpush1.msra.mxu0 0.0
    %205 = vmatprep.subr.mxu0 0.0
    %206 = vmatpush1.msra.mxu0 0.0
    %207 = vmatprep.subr.mxu0 0.0
    %208 = vmatpush1.msra.mxu0 0.0
    %209 = vmatprep.subr.mxu0 0.0
    %210 = vmatpush1.msra.mxu0 0.0
    %211 = vmatprep.subr.mxu0 0.0
    %212 = vmatpush1.msra.mxu0 0.0
    %213 = vmatprep.subr.mxu0 0.0
    %214 = vmatpush1.msra.mxu0 0.0
    %215 = vmatprep.subr.mxu0 0.0
    %216 = vmatpush1.msra.mxu0 0.0
    %217 = vmatprep.subr.mxu0 0.0
    %218 = vmatpush1.msra.mxu0 0.0
    %219 = vmatprep.subr.mxu0 0.0
    %220 = vmatpush1.msra.mxu0 0.0
    %221 = vmatprep.subr.mxu0 0.0
    %222 = vmatpush1.msra.mxu0 0.0
    %223 = vmatprep.subr.mxu0 0.0
    %224 = vmatpush1.msra.mxu0 0.0
    %225 = vmatprep.subr.mxu0 0.0
    %226 = vmatpush1.msra.mxu0 0.0
    %227 = vmatprep.subr.mxu0 0.0
    %228 = vmatpush1.msra.mxu0 0.0
    %229 = vmatprep.subr.mxu0 0.0
    %230 = vmatpush1.msra.mxu0 0.0
    %231 = vmatprep.subr.mxu0 0.0
    %232 = vmatpush1.msra.mxu0 0.0
    %233 = vmatprep.subr.mxu0 0.0
    %234 = vmatpush1.msra.mxu0 0.0
    %235 = vmatprep.subr.mxu0 0.0
    %236 = vmatpush1.msra.mxu0 0.0
    %237 = vmatprep.subr.mxu0 0.0
    %238 = vmatpush1.msra.mxu0 0.0
    %239 = vmatprep.subr.mxu0 0.0
    %240 = vmatpush1.msra.mxu0 0.0
    %241 = vmatprep.subr.mxu0 0.0
    %242 = vmatpush1.msra.mxu0 0.0
    %243 = vmatprep.subr.mxu0 0.0
    %244 = vmatpush1.msra.mxu0 0.0
    %245 = vmatprep.mubr.f32.mxu0 0.0
    %246 = vmatmul.mubr.f32.gmra.mrb[0].mxu0 %v173
    %v247 = vpop.f32.mrb[0].mxu0
    %v248 = vadd.f32 %v168, %v247
    %v249 = vpop.f32.mrb[0].mxu0
    %v250 = vadd.f32 %v170, %v249
    %251 = vdwg.mxu0
    %252 = vrot.lane.b32.xlu0 %v62, 15
    %v253 = vpop.permute.xlu0 %252
    %255 = vrot.lane.b32.xlu0 %v60, 15
    %v256 = vpop.permute.xlu0 %255
    %vm257 = vcmask 121856
    %v258 = vsel %vm257, %v256, %v253
    %v261 = vsel %vm257, %v253, %v256
    %v262 = vsel %vm50, %v261, 0.0
    %v263 = vsel %vm51, %v258, 0.0
    %s264 = scalar_lea.vmem %s1, 16
    %v265 = vld [vmem:[%s264] sm:$0xff]
    %v267 = vsel %vm90, %v265, 0
    %v270 = vsel %vm94, %v262, 0
    %v273 = vsel %vm94, %v263, 0
    %275 = vmatprep.subr.mxu0 %v273
    %276 = vmatpush1.msra.mxu0 %v270
    %277 = vmatprep.subr.mxu0 0.0
    %278 = vmatpush1.msra.mxu0 0.0
    %279 = vmatprep.subr.mxu0 0.0
    %280 = vmatpush1.msra.mxu0 0.0
    %281 = vmatprep.subr.mxu0 0.0
    %282 = vmatpush1.msra.mxu0 0.0
    %283 = vmatprep.subr.mxu0 0.0
    %284 = vmatpush1.msra.mxu0 0.0
    %285 = vmatprep.subr.mxu0 0.0
    %286 = vmatpush1.msra.mxu0 0.0
    %287 = vmatprep.subr.mxu0 0.0
    %288 = vmatpush1.msra.mxu0 0.0
    %289 = vmatprep.subr.mxu0 0.0
    %290 = vmatpush1.msra.mxu0 0.0
    %291 = vmatprep.subr.mxu0 0.0
    %292 = vmatpush1.msra.mxu0 0.0
    %293 = vmatprep.subr.mxu0 0.0
    %294 = vmatpush1.msra.mxu0 0.0
    %295 = vmatprep.subr.mxu0 0.0
    %296 = vmatpush1.msra.mxu0 0.0
    %297 = vmatprep.subr.mxu0 0.0
    %298 = vmatpush1.msra.mxu0 0.0
    %299 = vmatprep.subr.mxu0 0.0
    %300 = vmatpush1.msra.mxu0 0.0
    %301 = vmatprep.subr.mxu0 0.0
    %302 = vmatpush1.msra.mxu0 0.0
    %303 = vmatprep.subr.mxu0 0.0
    %304 = vmatpush1.msra.mxu0 0.0
    %305 = vmatprep.subr.mxu0 0.0
    %306 = vmatpush1.msra.mxu0 0.0
    %307 = vmatprep.subr.mxu0 0.0
    %308 = vmatpush1.msra.mxu0 0.0
    %309 = vmatprep.subr.mxu0 0.0
    %310 = vmatpush1.msra.mxu0 0.0
    %311 = vmatprep.subr.mxu0 0.0
    %312 = vmatpush1.msra.mxu0 0.0
    %313 = vmatprep.subr.mxu0 0.0
    %314 = vmatpush1.msra.mxu0 0.0
    %315 = vmatprep.subr.mxu0 0.0
    %316 = vmatpush1.msra.mxu0 0.0
    %317 = vmatprep.subr.mxu0 0.0
    %318 = vmatpush1.msra.mxu0 0.0
    %319 = vmatprep.subr.mxu0 0.0
    %320 = vmatpush1.msra.mxu0 0.0
    %321 = vmatprep.subr.mxu0 0.0
    %322 = vmatpush1.msra.mxu0 0.0
    %323 = vmatprep.subr.mxu0 0.0
    %324 = vmatpush1.msra.mxu0 0.0
    %325 = vmatprep.subr.mxu0 0.0
    %326 = vmatpush1.msra.mxu0 0.0
    %327 = vmatprep.subr.mxu0 0.0
    %328 = vmatpush1.msra.mxu0 0.0
    %329 = vmatprep.subr.mxu0 0.0
    %330 = vmatpush1.msra.mxu0 0.0
    %331 = vmatprep.subr.mxu0 0.0
    %332 = vmatpush1.msra.mxu0 0.0
    %333 = vmatprep.subr.mxu0 0.0
    %334 = vmatpush1.msra.mxu0 0.0
    %335 = vmatprep.subr.mxu0 0.0
    %336 = vmatpush1.msra.mxu0 0.0
    %337 = vmatprep.subr.mxu0 0.0
    %338 = vmatpush1.msra.mxu0 0.0
    %339 = vmatprep.mubr.f32.mxu0 0.0
    %340 = vmatmul.mubr.f32.gmra.mrb[0].mxu0 %v267
    %v341 = vpop.f32.mrb[0].mxu0
    %v342 = vadd.f32 0.0, %v341
    %v343 = vpop.f32.mrb[0].mxu0
    %v344 = vadd.f32 0.0, %v343
    %345 = vdwg.mxu0
    %v346 = vadd.f32 %v248, %v342
    %v347 = vadd.f32 %v250, %v344
    %348 = vrot.lane.b32.xlu0 %v62, 1
    %v349 = vpop.permute.xlu0 %348
    %351 = vrot.lane.b32.xlu0 %v60, 1
    %v352 = vpop.permute.xlu0 %351
    %vm353 = vcmask 7168
    %v354 = vsel %vm353, %v352, %v349
    %v357 = vsel %vm353, %v349, %v352
    %v358 = vsel %vm44, %v357, 0.0
    %v359 = vsel %vm45, %v354, 0.0
    %s360 = scalar_lea.vmem %s1, 24
    %v361 = vld [vmem:[%s360] sm:$0xff]
    %v363 = vsel %vm90, %v361, 0
    %v366 = vsel %vm94, %v358, 0
    %v369 = vsel %vm94, %v359, 0
    %371 = vmatprep.subr.mxu0 %v369
    %372 = vmatpush1.msra.mxu0 %v366
    %373 = vmatprep.subr.mxu0 0.0
    %374 = vmatpush1.msra.mxu0 0.0
    %375 = vmatprep.subr.mxu0 0.0
    %376 = vmatpush1.msra.mxu0 0.0
    %377 = vmatprep.subr.mxu0 0.0
    %378 = vmatpush1.msra.mxu0 0.0
    %379 = vmatprep.subr.mxu0 0.0
    %380 = vmatpush1.msra.mxu0 0.0
    %381 = vmatprep.subr.mxu0 0.0
    %382 = vmatpush1.msra.mxu0 0.0
    %383 = vmatprep.subr.mxu0 0.0
    %384 = vmatpush1.msra.mxu0 0.0
    %385 = vmatprep.subr.mxu0 0.0
    %386 = vmatpush1.msra.mxu0 0.0
    %387 = vmatprep.subr.mxu0 0.0
    %388 = vmatpush1.msra.mxu0 0.0
    %389 = vmatprep.subr.mxu0 0.0
    %390 = vmatpush1.msra.mxu0 0.0
    %391 = vmatprep.subr.mxu0 0.0
    %392 = vmatpush1.msra.mxu0 0.0
    %393 = vmatprep.subr.mxu0 0.0
    %394 = vmatpush1.msra.mxu0 0.0
    %395 = vmatprep.subr.mxu0 0.0
    %396 = vmatpush1.msra.mxu0 0.0
    %397 = vmatprep.subr.mxu0 0.0
    %398 = vmatpush1.msra.mxu0 0.0
    %399 = vmatprep.subr.mxu0 0.0
    %400 = vmatpush1.msra.mxu0 0.0
    %401 = vmatprep.subr.mxu0 0.0
    %402 = vmatpush1.msra.mxu0 0.0
    %403 = vmatprep.subr.mxu0 0.0
    %404 = vmatpush1.msra.mxu0 0.0
    %405 = vmatprep.subr.mxu0 0.0
    %406 = vmatpush1.msra.mxu0 0.0
    %407 = vmatprep.subr.mxu0 0.0
    %408 = vmatpush1.msra.mxu0 0.0
    %409 = vmatprep.subr.mxu0 0.0
    %410 = vmatpush1.msra.mxu0 0.0
    %411 = vmatprep.subr.mxu0 0.0
    %412 = vmatpush1.msra.mxu0 0.0
    %413 = vmatprep.subr.mxu0 0.0
    %414 = vmatpush1.msra.mxu0 0.0
    %415 = vmatprep.subr.mxu0 0.0
    %416 = vmatpush1.msra.mxu0 0.0
    %417 = vmatprep.subr.mxu0 0.0
    %418 = vmatpush1.msra.mxu0 0.0
    %419 = vmatprep.subr.mxu0 0.0
    %420 = vmatpush1.msra.mxu0 0.0
    %421 = vmatprep.subr.mxu0 0.0
    %422 = vmatpush1.msra.mxu0 0.0
    %423 = vmatprep.subr.mxu0 0.0
    %424 = vmatpush1.msra.mxu0 0.0
    %425 = vmatprep.subr.mxu0 0.0
    %426 = vmatpush1.msra.mxu0 0.0
    %427 = vmatprep.subr.mxu0 0.0
    %428 = vmatpush1.msra.mxu0 0.0
    %429 = vmatprep.subr.mxu0 0.0
    %430 = vmatpush1.msra.mxu0 0.0
    %431 = vmatprep.subr.mxu0 0.0
    %432 = vmatpush1.msra.mxu0 0.0
    %433 = vmatprep.subr.mxu0 0.0
    %434 = vmatpush1.msra.mxu0 0.0
    %435 = vmatprep.mubr.f32.mxu0 0.0
    %436 = vmatmul.mubr.f32.gmra.mrb[0].mxu0 %v363
    %v437 = vpop.f32.mrb[0].mxu0
    %v438 = vadd.f32 0.0, %v437
    %v439 = vpop.f32.mrb[0].mxu0
    %v440 = vadd.f32 0.0, %v439
    %441 = vdwg.mxu0
    %v442 = vadd.f32 %v346, %v438
    %v443 = vadd.f32 %v347, %v440
    %s444 = scalar_lea.vmem %s1, 32
    %v445 = vld [vmem:[%s444] sm:$0xff]
    %v447 = vsel %vm90, %v445, 0
    %v449 = vsel %vm94, %v60, 0
    %v451 = vsel %vm94, %v62, 0
    %453 = vmatprep.subr.mxu0 %v451
    %454 = vmatpush1.msra.mxu0 %v449
    %455 = vmatprep.subr.mxu0 0.0
    %456 = vmatpush1.msra.mxu0 0.0
    %457 = vmatprep.subr.mxu0 0.0
    %458 = vmatpush1.msra.mxu0 0.0
    %459 = vmatprep.subr.mxu0 0.0
    %460 = vmatpush1.msra.mxu0 0.0
    %461 = vmatprep.subr.mxu0 0.0
    %462 = vmatpush1.msra.mxu0 0.0
    %463 = vmatprep.subr.mxu0 0.0
    %464 = vmatpush1.msra.mxu0 0.0
    %465 = vmatprep.subr.mxu0 0.0
    %466 = vmatpush1.msra.mxu0 0.0
    %467 = vmatprep.subr.mxu0 0.0
    %468 = vmatpush1.msra.mxu0 0.0
    %469 = vmatprep.subr.mxu0 0.0
    %470 = vmatpush1.msra.mxu0 0.0
    %471 = vmatprep.subr.mxu0 0.0
    %472 = vmatpush1.msra.mxu0 0.0
    %473 = vmatprep.subr.mxu0 0.0
    %474 = vmatpush1.msra.mxu0 0.0
    %475 = vmatprep.subr.mxu0 0.0
    %476 = vmatpush1.msra.mxu0 0.0
    %477 = vmatprep.subr.mxu0 0.0
    %478 = vmatpush1.msra.mxu0 0.0
    %479 = vmatprep.subr.mxu0 0.0
    %480 = vmatpush1.msra.mxu0 0.0
    %481 = vmatprep.subr.mxu0 0.0
    %482 = vmatpush1.msra.mxu0 0.0
    %483 = vmatprep.subr.mxu0 0.0
    %484 = vmatpush1.msra.mxu0 0.0
    %485 = vmatprep.subr.mxu0 0.0
    %486 = vmatpush1.msra.mxu0 0.0
    %487 = vmatprep.subr.mxu0 0.0
    %488 = vmatpush1.msra.mxu0 0.0
    %489 = vmatprep.subr.mxu0 0.0
    %490 = vmatpush1.msra.mxu0 0.0
    %491 = vmatprep.subr.mxu0 0.0
    %492 = vmatpush1.msra.mxu0 0.0
    %493 = vmatprep.subr.mxu0 0.0
    %494 = vmatpush1.msra.mxu0 0.0
    %495 = vmatprep.subr.mxu0 0.0
    %496 = vmatpush1.msra.mxu0 0.0
    %497 = vmatprep.subr.mxu0 0.0
    %498 = vmatpush1.msra.mxu0 0.0
    %499 = vmatprep.subr.mxu0 0.0
    %500 = vmatpush1.msra.mxu0 0.0
    %501 = vmatprep.subr.mxu0 0.0
    %502 = vmatpush1.msra.mxu0 0.0
    %503 = vmatprep.subr.mxu0 0.0
    %504 = vmatpush1.msra.mxu0 0.0
    %505 = vmatprep.subr.mxu0 0.0
    %506 = vmatpush1.msra.mxu0 0.0
    %507 = vmatprep.subr.mxu0 0.0
    %508 = vmatpush1.msra.mxu0 0.0
    %509 = vmatprep.subr.mxu0 0.0
    %510 = vmatpush1.msra.mxu0 0.0
    %511 = vmatprep.subr.mxu0 0.0
    %512 = vmatpush1.msra.mxu0 0.0
    %513 = vmatprep.subr.mxu0 0.0
    %514 = vmatpush1.msra.mxu0 0.0
    %515 = vmatprep.subr.mxu0 0.0
    %516 = vmatpush1.msra.mxu0 0.0
    %517 = vmatprep.mubr.f32.mxu0 0.0
    %518 = vmatmul.mubr.f32.gmra.mrb[0].mxu0 %v447
    %v519 = vpop.f32.mrb[0].mxu0
    %v520 = vadd.f32 0.0, %v519
    %v521 = vpop.f32.mrb[0].mxu0
    %v522 = vadd.f32 0.0, %v521
    %523 = vdwg.mxu0
    %v524 = vadd.f32 %v442, %v520
    %v525 = vadd.f32 %v443, %v522
    %526 = vrot.lane.b32.xlu0 %v60, 127
    %v527 = vpop.permute.xlu0 %526
    %528 = vrot.lane.b32.xlu0 %v62, 127
    %v529 = vpop.permute.xlu0 %528
    %vm530 = vcmask 1039360
    %v531 = vsel %vm530, %v527, %v529
    %v535 = vsel %vm530, %v529, %v527
    %v536 = vsel %vm48, %v531, 0.0
    %v537 = vsel %vm49, %v535, 0.0
    %s538 = scalar_lea.vmem %s1, 40
    %v539 = vld [vmem:[%s538] sm:$0xff]
    %v541 = vsel %vm90, %v539, 0
    %v544 = vsel %vm94, %v536, 0
    %v547 = vsel %vm94, %v537, 0
    %549 = vmatprep.subr.mxu0 %v547
    %550 = vmatpush1.msra.mxu0 %v544
    %551 = vmatprep.subr.mxu0 0.0
    %552 = vmatpush1.msra.mxu0 0.0
    %553 = vmatprep.subr.mxu0 0.0
    %554 = vmatpush1.msra.mxu0 0.0
    %555 = vmatprep.subr.mxu0 0.0
    %556 = vmatpush1.msra.mxu0 0.0
    %557 = vmatprep.subr.mxu0 0.0
    %558 = vmatpush1.msra.mxu0 0.0
    %559 = vmatprep.subr.mxu0 0.0
    %560 = vmatpush1.msra.mxu0 0.0
    %561 = vmatprep.subr.mxu0 0.0
    %562 = vmatpush1.msra.mxu0 0.0
    %563 = vmatprep.subr.mxu0 0.0
    %564 = vmatpush1.msra.mxu0 0.0
    %565 = vmatprep.subr.mxu0 0.0
    %566 = vmatpush1.msra.mxu0 0.0
    %567 = vmatprep.subr.mxu0 0.0
    %568 = vmatpush1.msra.mxu0 0.0
    %569 = vmatprep.subr.mxu0 0.0
    %570 = vmatpush1.msra.mxu0 0.0
    %571 = vmatprep.subr.mxu0 0.0
    %572 = vmatpush1.msra.mxu0 0.0
    %573 = vmatprep.subr.mxu0 0.0
    %574 = vmatpush1.msra.mxu0 0.0
    %575 = vmatprep.subr.mxu0 0.0
    %576 = vmatpush1.msra.mxu0 0.0
    %577 = vmatprep.subr.mxu0 0.0
    %578 = vmatpush1.msra.mxu0 0.0
    %579 = vmatprep.subr.mxu0 0.0
    %580 = vmatpush1.msra.mxu0 0.0
    %581 = vmatprep.subr.mxu0 0.0
    %582 = vmatpush1.msra.mxu0 0.0
    %583 = vmatprep.subr.mxu0 0.0
    %584 = vmatpush1.msra.mxu0 0.0
    %585 = vmatprep.subr.mxu0 0.0
    %586 = vmatpush1.msra.mxu0 0.0
    %587 = vmatprep.subr.mxu0 0.0
    %588 = vmatpush1.msra.mxu0 0.0
    %589 = vmatprep.subr.mxu0 0.0
    %590 = vmatpush1.msra.mxu0 0.0
    %591 = vmatprep.subr.mxu0 0.0
    %592 = vmatpush1.msra.mxu0 0.0
    %593 = vmatprep.subr.mxu0 0.0
    %594 = vmatpush1.msra.mxu0 0.0
    %595 = vmatprep.subr.mxu0 0.0
    %596 = vmatpush1.msra.mxu0 0.0
    %597 = vmatprep.subr.mxu0 0.0
    %598 = vmatpush1.msra.mxu0 0.0
    %599 = vmatprep.subr.mxu0 0.0
    %600 = vmatpush1.msra.mxu0 0.0
    %601 = vmatprep.subr.mxu0 0.0
    %602 = vmatpush1.msra.mxu0 0.0
    %603 = vmatprep.subr.mxu0 0.0
    %604 = vmatpush1.msra.mxu0 0.0
    %605 = vmatprep.subr.mxu0 0.0
    %606 = vmatpush1.msra.mxu0 0.0
    %607 = vmatprep.subr.mxu0 0.0
    %608 = vmatpush1.msra.mxu0 0.0
    %609 = vmatprep.subr.mxu0 0.0
    %610 = vmatpush1.msra.mxu0 0.0
    %611 = vmatprep.subr.mxu0 0.0
    %612 = vmatpush1.msra.mxu0 0.0
    %613 = vmatprep.mubr.f32.mxu0 0.0
    %614 = vmatmul.mubr.f32.gmra.mrb[0].mxu0 %v541
    %v615 = vpop.f32.mrb[0].mxu0
    %v616 = vadd.f32 0.0, %v615
    %v617 = vpop.f32.mrb[0].mxu0
    %v618 = vadd.f32 0.0, %v617
    %619 = vdwg.mxu0
    %v620 = vadd.f32 %v524, %v616
    %v621 = vadd.f32 %v525, %v618
    %622 = vrot.lane.b32.xlu0 %v60, 113
    %v623 = vpop.permute.xlu0 %622
    %624 = vrot.lane.b32.xlu0 %v62, 113
    %v625 = vpop.permute.xlu0 %624
    %vm626 = vcmask 924672
    %v627 = vsel %vm626, %v623, %v625
    %v631 = vsel %vm626, %v625, %v623
    %v632 = vsel %vm54, %v627, 0.0
    %v633 = vsel %vm55, %v631, 0.0
    %s634 = scalar_lea.vmem %s1, 48
    %v635 = vld [vmem:[%s634] sm:$0xff]
    %v637 = vsel %vm90, %v635, 0
    %v640 = vsel %vm94, %v632, 0
    %v643 = vsel %vm94, %v633, 0
    %645 = vmatprep.subr.mxu0 %v643
    %646 = vmatpush1.msra.mxu0 %v640
    %647 = vmatprep.subr.mxu0 0.0
    %648 = vmatpush1.msra.mxu0 0.0
    %649 = vmatprep.subr.mxu0 0.0
    %650 = vmatpush1.msra.mxu0 0.0
    %651 = vmatprep.subr.mxu0 0.0
    %652 = vmatpush1.msra.mxu0 0.0
    %653 = vmatprep.subr.mxu0 0.0
    %654 = vmatpush1.msra.mxu0 0.0
    %655 = vmatprep.subr.mxu0 0.0
    %656 = vmatpush1.msra.mxu0 0.0
    %657 = vmatprep.subr.mxu0 0.0
    %658 = vmatpush1.msra.mxu0 0.0
    %659 = vmatprep.subr.mxu0 0.0
    %660 = vmatpush1.msra.mxu0 0.0
    %661 = vmatprep.subr.mxu0 0.0
    %662 = vmatpush1.msra.mxu0 0.0
    %663 = vmatprep.subr.mxu0 0.0
    %664 = vmatpush1.msra.mxu0 0.0
    %665 = vmatprep.subr.mxu0 0.0
    %666 = vmatpush1.msra.mxu0 0.0
    %667 = vmatprep.subr.mxu0 0.0
    %668 = vmatpush1.msra.mxu0 0.0
    %669 = vmatprep.subr.mxu0 0.0
    %670 = vmatpush1.msra.mxu0 0.0
    %671 = vmatprep.subr.mxu0 0.0
    %672 = vmatpush1.msra.mxu0 0.0
    %673 = vmatprep.subr.mxu0 0.0
    %674 = vmatpush1.msra.mxu0 0.0
    %675 = vmatprep.subr.mxu0 0.0
    %676 = vmatpush1.msra.mxu0 0.0
    %677 = vmatprep.subr.mxu0 0.0
    %678 = vmatpush1.msra.mxu0 0.0
    %679 = vmatprep.subr.mxu0 0.0
    %680 = vmatpush1.msra.mxu0 0.0
    %681 = vmatprep.subr.mxu0 0.0
    %682 = vmatpush1.msra.mxu0 0.0
    %683 = vmatprep.subr.mxu0 0.0
    %684 = vmatpush1.msra.mxu0 0.0
    %685 = vmatprep.subr.mxu0 0.0
    %686 = vmatpush1.msra.mxu0 0.0
    %687 = vmatprep.subr.mxu0 0.0
    %688 = vmatpush1.msra.mxu0 0.0
    %689 = vmatprep.subr.mxu0 0.0
    %690 = vmatpush1.msra.mxu0 0.0
    %691 = vmatprep.subr.mxu0 0.0
    %692 = vmatpush1.msra.mxu0 0.0
    %693 = vmatprep.subr.mxu0 0.0
    %694 = vmatpush1.msra.mxu0 0.0
    %695 = vmatprep.subr.mxu0 0.0
    %696 = vmatpush1.msra.mxu0 0.0
    %697 = vmatprep.subr.mxu0 0.0
    %698 = vmatpush1.msra.mxu0 0.0
    %699 = vmatprep.subr.mxu0 0.0
    %700 = vmatpush1.msra.mxu0 0.0
    %701 = vmatprep.subr.mxu0 0.0
    %702 = vmatpush1.msra.mxu0 0.0
    %703 = vmatprep.subr.mxu0 0.0
    %704 = vmatpush1.msra.mxu0 0.0
    %705 = vmatprep.subr.mxu0 0.0
    %706 = vmatpush1.msra.mxu0 0.0
    %707 = vmatprep.subr.mxu0 0.0
    %708 = vmatpush1.msra.mxu0 0.0
    %709 = vmatprep.mubr.f32.mxu0 0.0
    %710 = vmatmul.mubr.f32.gmra.mrb[0].mxu0 %v637
    %v711 = vpop.f32.mrb[0].mxu0
    %v712 = vadd.f32 0.0, %v711
    %v713 = vpop.f32.mrb[0].mxu0
    %v714 = vadd.f32 0.0, %v713
    %715 = vdwg.mxu0
    %v716 = vadd.f32 %v620, %v712
    %v717 = vadd.f32 %v621, %v714
    %718 = vrot.lane.b32.xlu0 %v60, 112
    %v719 = vpop.permute.xlu0 %718
    %720 = vrot.lane.b32.xlu0 %v62, 112
    %v721 = vpop.permute.xlu0 %720
    %vm722 = vcmask 916480
    %v723 = vsel %vm722, %v719, %v721
    %v727 = vsel %vm722, %v721, %v719
    %v728 = vsel %vm52, %v723, 0.0
    %v729 = vsel %vm53, %v727, 0.0
    %s730 = scalar_lea.vmem %s1, 56
    %v731 = vld [vmem:[%s730] sm:$0xff]
    %v733 = vsel %vm90, %v731, 0
    %v736 = vsel %vm94, %v728, 0
    %v739 = vsel %vm94, %v729, 0
    %741 = vmatprep.subr.mxu0 %v739
    %742 = vmatpush1.msra.mxu0 %v736
    %743 = vmatprep.subr.mxu0 0.0
    %744 = vmatpush1.msra.mxu0 0.0
    %745 = vmatprep.subr.mxu0 0.0
    %746 = vmatpush1.msra.mxu0 0.0
    %747 = vmatprep.subr.mxu0 0.0
    %748 = vmatpush1.msra.mxu0 0.0
    %749 = vmatprep.subr.mxu0 0.0
    %750 = vmatpush1.msra.mxu0 0.0
    %751 = vmatprep.subr.mxu0 0.0
    %752 = vmatpush1.msra.mxu0 0.0
    %753 = vmatprep.subr.mxu0 0.0
    %754 = vmatpush1.msra.mxu0 0.0
    %755 = vmatprep.subr.mxu0 0.0
    %756 = vmatpush1.msra.mxu0 0.0
    %757 = vmatprep.subr.mxu0 0.0
    %758 = vmatpush1.msra.mxu0 0.0
    %759 = vmatprep.subr.mxu0 0.0
    %760 = vmatpush1.msra.mxu0 0.0
    %761 = vmatprep.subr.mxu0 0.0
    %762 = vmatpush1.msra.mxu0 0.0
    %763 = vmatprep.subr.mxu0 0.0
    %764 = vmatpush1.msra.mxu0 0.0
    %765 = vmatprep.subr.mxu0 0.0
    %766 = vmatpush1.msra.mxu0 0.0
    %767 = vmatprep.subr.mxu0 0.0
    %768 = vmatpush1.msra.mxu0 0.0
    %769 = vmatprep.subr.mxu0 0.0
    %770 = vmatpush1.msra.mxu0 0.0
    %771 = vmatprep.subr.mxu0 0.0
    %772 = vmatpush1.msra.mxu0 0.0
    %773 = vmatprep.subr.mxu0 0.0
    %774 = vmatpush1.msra.mxu0 0.0
    %775 = vmatprep.subr.mxu0 0.0
    %776 = vmatpush1.msra.mxu0 0.0
    %777 = vmatprep.subr.mxu0 0.0
    %778 = vmatpush1.msra.mxu0 0.0
    %779 = vmatprep.subr.mxu0 0.0
    %780 = vmatpush1.msra.mxu0 0.0
    %781 = vmatprep.subr.mxu0 0.0
    %782 = vmatpush1.msra.mxu0 0.0
    %783 = vmatprep.subr.mxu0 0.0
    %784 = vmatpush1.msra.mxu0 0.0
    %785 = vmatprep.subr.mxu0 0.0
    %786 = vmatpush1.msra.mxu0 0.0
    %787 = vmatprep.subr.mxu0 0.0
    %788 = vmatpush1.msra.mxu0 0.0
    %789 = vmatprep.subr.mxu0 0.0
    %790 = vmatpush1.msra.mxu0 0.0
    %791 = vmatprep.subr.mxu0 0.0
    %792 = vmatpush1.msra.mxu0 0.0
    %793 = vmatprep.subr.mxu0 0.0
    %794 = vmatpush1.msra.mxu0 0.0
    %795 = vmatprep.subr.mxu0 0.0
    %796 = vmatpush1.msra.mxu0 0.0
    %797 = vmatprep.subr.mxu0 0.0
    %798 = vmatpush1.msra.mxu0 0.0
    %799 = vmatprep.subr.mxu0 0.0
    %800 = vmatpush1.msra.mxu0 0.0
    %801 = vmatprep.subr.mxu0 0.0
    %802 = vmatpush1.msra.mxu0 0.0
    %803 = vmatprep.subr.mxu0 0.0
    %804 = vmatpush1.msra.mxu0 0.0
    %805 = vmatprep.mubr.f32.mxu0 0.0
    %806 = vmatmul.mubr.f32.gmra.mrb[0].mxu0 %v733
    %v807 = vpop.f32.mrb[0].mxu0
    %v808 = vadd.f32 0.0, %v807
    %v809 = vpop.f32.mrb[0].mxu0
    %v810 = vadd.f32 0.0, %v809
    %811 = vdwg.mxu0
    %v812 = vadd.f32 %v716, %v808
    %v813 = vadd.f32 %v717, %v810
    %814 = vrot.lane.b32.xlu0 %v60, 111
    %v815 = vpop.permute.xlu0 %814
    %816 = vrot.lane.b32.xlu0 %v62, 111
    %v817 = vpop.permute.xlu0 %816
    %vm818 = vcmask 908288
    %v819 = vsel %vm818, %v815, %v817
    %v823 = vsel %vm818, %v817, %v815
    %v824 = vsel %vm56, %v819, 0.0
    %v825 = vsel %vm57, %v823, 0.0
    %s826 = scalar_lea.vmem %s1, 64
    %v827 = vld [vmem:[%s826] sm:$0xff]
    %v829 = vsel %vm90, %v827, 0
    %v832 = vsel %vm94, %v824, 0
    %v835 = vsel %vm94, %v825, 0
    %837 = vmatprep.subr.mxu0 %v835
    %838 = vmatpush1.msra.mxu0 %v832
    %839 = vmatprep.subr.mxu0 0.0
    %840 = vmatpush1.msra.mxu0 0.0
    %841 = vmatprep.subr.mxu0 0.0
    %842 = vmatpush1.msra.mxu0 0.0
    %843 = vmatprep.subr.mxu0 0.0
    %844 = vmatpush1.msra.mxu0 0.0
    %845 = vmatprep.subr.mxu0 0.0
    %846 = vmatpush1.msra.mxu0 0.0
    %847 = vmatprep.subr.mxu0 0.0
    %848 = vmatpush1.msra.mxu0 0.0
    %849 = vmatprep.subr.mxu0 0.0
    %850 = vmatpush1.msra.mxu0 0.0
    %851 = vmatprep.subr.mxu0 0.0
    %852 = vmatpush1.msra.mxu0 0.0
    %853 = vmatprep.subr.mxu0 0.0
    %854 = vmatpush1.msra.mxu0 0.0
    %855 = vmatprep.subr.mxu0 0.0
    %856 = vmatpush1.msra.mxu0 0.0
    %857 = vmatprep.subr.mxu0 0.0
    %858 = vmatpush1.msra.mxu0 0.0
    %859 = vmatprep.subr.mxu0 0.0
    %860 = vmatpush1.msra.mxu0 0.0
    %861 = vmatprep.subr.mxu0 0.0
    %862 = vmatpush1.msra.mxu0 0.0
    %863 = vmatprep.subr.mxu0 0.0
    %864 = vmatpush1.msra.mxu0 0.0
    %865 = vmatprep.subr.mxu0 0.0
    %866 = vmatpush1.msra.mxu0 0.0
    %867 = vmatprep.subr.mxu0 0.0
    %868 = vmatpush1.msra.mxu0 0.0
    %869 = vmatprep.subr.mxu0 0.0
    %870 = vmatpush1.msra.mxu0 0.0
    %871 = vmatprep.subr.mxu0 0.0
    %872 = vmatpush1.msra.mxu0 0.0
    %873 = vmatprep.subr.mxu0 0.0
    %874 = vmatpush1.msra.mxu0 0.0
    %875 = vmatprep.subr.mxu0 0.0
    %876 = vmatpush1.msra.mxu0 0.0
    %877 = vmatprep.subr.mxu0 0.0
    %878 = vmatpush1.msra.mxu0 0.0
    %879 = vmatprep.subr.mxu0 0.0
    %880 = vmatpush1.msra.mxu0 0.0
    %881 = vmatprep.subr.mxu0 0.0
    %882 = vmatpush1.msra.mxu0 0.0
    %883 = vmatprep.subr.mxu0 0.0
    %884 = vmatpush1.msra.mxu0 0.0
    %885 = vmatprep.subr.mxu0 0.0
    %886 = vmatpush1.msra.mxu0 0.0
    %887 = vmatprep.subr.mxu0 0.0
    %888 = vmatpush1.msra.mxu0 0.0
    %889 = vmatprep.subr.mxu0 0.0
    %890 = vmatpush1.msra.mxu0 0.0
    %891 = vmatprep.subr.mxu0 0.0
    %892 = vmatpush1.msra.mxu0 0.0
    %893 = vmatprep.subr.mxu0 0.0
    %894 = vmatpush1.msra.mxu0 0.0
    %895 = vmatprep.subr.mxu0 0.0
    %896 = vmatpush1.msra.mxu0 0.0
    %897 = vmatprep.subr.mxu0 0.0
    %898 = vmatpush1.msra.mxu0 0.0
    %899 = vmatprep.subr.mxu0 0.0
    %900 = vmatpush1.msra.mxu0 0.0
    %901 = vmatprep.mubr.f32.mxu0 0.0
    %902 = vmatmul.mubr.f32.gmra.mrb[0].mxu0 %v829
    %v903 = vpop.f32.mrb[0].mxu0
    %v904 = vadd.f32 0.0, %v903
    %v905 = vpop.f32.mrb[0].mxu0
    %v906 = vadd.f32 0.0, %v905
    %907 = vdwg.mxu0
    %v908 = vadd.f32 %v812, %v904
    %v909 = vadd.f32 %v813, %v906
    %911 = vset.pattern.permute.xlu0 0
    %912 = vperm.xlu0 %911, %v58
    %v913 = vpop.permute.xlu0 %912
    %v915 = vadd.f32 %v908, %v913
    %v916 = vadd.f32 %v909, %v913
    %v917 = vmax.f32 %v915, 0.0
    %v918 = vmax.f32 %v916, 0.0
    %919 = vst [vmem:[%s5] sm:$0xff] %v917
    %920 = vst [vmem:[%s5 + $0x8] sm:$0xff] %v918
    %s921 = scalar_lea.vmem %s0, 8
    %v922 = vld [vmem:[%s921] sm:$0xff]
    %v924 = vcombine.high %v922, %v922
    %925 = vrot.lane.b32.xlu0 %v924, 17
    %v926 = vpop.permute.xlu0 %925
    %928 = vrot.lane.b32.xlu0 %v922, 17
    %v929 = vpop.permute.xlu0 %928
    %v930 = vsel %vm68, %v929, %v926
    %v933 = vsel %vm68, %v926, %v929
    %v934 = vsel %vm46, %v933, 0.0
    %v935 = vsel %vm47, %v930, 0.0
    %v936 = vld [vmem:[%s1] sm:$0xff]
    %937 = vrot.lane.b32.xlu0 %v924, 16
    %v938 = vpop.permute.xlu0 %937
    %940 = vrot.lane.b32.xlu0 %v922, 16
    %v941 = vpop.permute.xlu0 %940
    %v942 = vsel %vm81, %v941, %v938
    %v945 = vsel %vm81, %v938, %v941
    %v946 = vsel %vm42, %v945, 0.0
    %v947 = vsel %vm43, %v942, 0.0
    %v948 = vld [vmem:[%s88] sm:$0xff]
    %v950 = vsel %vm90, %v948, 0
    %v953 = vsel %vm94, %v946, 0
    %v956 = vsel %vm94, %v947, 0
    %958 = vmatprep.subr.mxu0 %v956
    %959 = vmatpush1.msra.mxu0 %v953
    %960 = vmatprep.subr.mxu0 0.0
    %961 = vmatpush1.msra.mxu0 0.0
    %962 = vmatprep.subr.mxu0 0.0
    %963 = vmatpush1.msra.mxu0 0.0
    %964 = vmatprep.subr.mxu0 0.0
    %965 = vmatpush1.msra.mxu0 0.0
    %966 = vmatprep.subr.mxu0 0.0
    %967 = vmatpush1.msra.mxu0 0.0
    %968 = vmatprep.subr.mxu0 0.0
    %969 = vmatpush1.msra.mxu0 0.0
    %970 = vmatprep.subr.mxu0 0.0
    %971 = vmatpush1.msra.mxu0 0.0
    %972 = vmatprep.subr.mxu0 0.0
    %973 = vmatpush1.msra.mxu0 0.0
    %974 = vmatprep.subr.mxu0 0.0
    %975 = vmatpush1.msra.mxu0 0.0
    %976 = vmatprep.subr.mxu0 0.0
    %977 = vmatpush1.msra.mxu0 0.0
    %978 = vmatprep.subr.mxu0 0.0
    %979 = vmatpush1.msra.mxu0 0.0
    %980 = vmatprep.subr.mxu0 0.0
    %981 = vmatpush1.msra.mxu0 0.0
    %982 = vmatprep.subr.mxu0 0.0
    %983 = vmatpush1.msra.mxu0 0.0
    %984 = vmatprep.subr.mxu0 0.0
    %985 = vmatpush1.msra.mxu0 0.0
    %986 = vmatprep.subr.mxu0 0.0
    %987 = vmatpush1.msra.mxu0 0.0
    %988 = vmatprep.subr.mxu0 0.0
    %989 = vmatpush1.msra.mxu0 0.0
    %990 = vmatprep.subr.mxu0 0.0
    %991 = vmatpush1.msra.mxu0 0.0
    %992 = vmatprep.subr.mxu0 0.0
    %993 = vmatpush1.msra.mxu0 0.0
    %994 = vmatprep.subr.mxu0 0.0
    %995 = vmatpush1.msra.mxu0 0.0
    %996 = vmatprep.subr.mxu0 0.0
    %997 = vmatpush1.msra.mxu0 0.0
    %998 = vmatprep.subr.mxu0 0.0
    %999 = vmatpush1.msra.mxu0 0.0
    %1000 = vmatprep.subr.mxu0 0.0
    %1001 = vmatpush1.msra.mxu0 0.0
    %1002 = vmatprep.subr.mxu0 0.0
    %1003 = vmatpush1.msra.mxu0 0.0
    %1004 = vmatprep.subr.mxu0 0.0
    %1005 = vmatpush1.msra.mxu0 0.0
    %1006 = vmatprep.subr.mxu0 0.0
    %1007 = vmatpush1.msra.mxu0 0.0
    %1008 = vmatprep.subr.mxu0 0.0
    %1009 = vmatpush1.msra.mxu0 0.0
    %1010 = vmatprep.subr.mxu0 0.0
    %1011 = vmatpush1.msra.mxu0 0.0
    %1012 = vmatprep.subr.mxu0 0.0
    %1013 = vmatpush1.msra.mxu0 0.0
    %1014 = vmatprep.subr.mxu0 0.0
    %1015 = vmatpush1.msra.mxu0 0.0
    %1016 = vmatprep.subr.mxu0 0.0
    %1017 = vmatpush1.msra.mxu0 0.0
    %1018 = vmatprep.subr.mxu0 0.0
    %1019 = vmatpush1.msra.mxu0 0.0
    %1020 = vmatprep.subr.mxu0 0.0
    %1021 = vmatpush1.msra.mxu0 0.0
    %1022 = vmatprep.mubr.f32.mxu0 0.0
    %1023 = vmatmul.mubr.f32.gmra.mrb[0].mxu0 %v950
    %v1024 = vpop.f32.mrb[0].mxu0
    %v1025 = vadd.f32 0.0, %v1024
    %v1026 = vpop.f32.mrb[0].mxu0
    %v1027 = vadd.f32 0.0, %v1026
    %1028 = vdwg.mxu0
    %v1030 = vsel %vm90, %v936, 0
    %v1033 = vsel %vm94, %v934, 0
    %v1036 = vsel %vm94, %v935, 0
    %1038 = vmatprep.subr.mxu0 %v1036
    %1039 = vmatpush1.msra.mxu0 %v1033
    %1040 = vmatprep.subr.mxu0 0.0
    %1041 = vmatpush1.msra.mxu0 0.0
    %1042 = vmatprep.subr.mxu0 0.0
    %1043 = vmatpush1.msra.mxu0 0.0
    %1044 = vmatprep.subr.mxu0 0.0
    %1045 = vmatpush1.msra.mxu0 0.0
    %1046 = vmatprep.subr.mxu0 0.0
    %1047 = vmatpush1.msra.mxu0 0.0
    %1048 = vmatprep.subr.mxu0 0.0
    %1049 = vmatpush1.msra.mxu0 0.0
    %1050 = vmatprep.subr.mxu0 0.0
    %1051 = vmatpush1.msra.mxu0 0.0
    %1052 = vmatprep.subr.mxu0 0.0
    %1053 = vmatpush1.msra.mxu0 0.0
    %1054 = vmatprep.subr.mxu0 0.0
    %1055 = vmatpush1.msra.mxu0 0.0
    %1056 = vmatprep.subr.mxu0 0.0
    %1057 = vmatpush1.msra.mxu0 0.0
    %1058 = vmatprep.subr.mxu0 0.0
    %1059 = vmatpush1.msra.mxu0 0.0
    %1060 = vmatprep.subr.mxu0 0.0
    %1061 = vmatpush1.msra.mxu0 0.0
    %1062 = vmatprep.subr.mxu0 0.0
    %1063 = vmatpush1.msra.mxu0 0.0
    %1064 = vmatprep.subr.mxu0 0.0
    %1065 = vmatpush1.msra.mxu0 0.0
    %1066 = vmatprep.subr.mxu0 0.0
    %1067 = vmatpush1.msra.mxu0 0.0
    %1068 = vmatprep.subr.mxu0 0.0
    %1069 = vmatpush1.msra.mxu0 0.0
    %1070 = vmatprep.subr.mxu0 0.0
    %1071 = vmatpush1.msra.mxu0 0.0
    %1072 = vmatprep.subr.mxu0 0.0
    %1073 = vmatpush1.msra.mxu0 0.0
    %1074 = vmatprep.subr.mxu0 0.0
    %1075 = vmatpush1.msra.mxu0 0.0
    %1076 = vmatprep.subr.mxu0 0.0
    %1077 = vmatpush1.msra.mxu0 0.0
    %1078 = vmatprep.subr.mxu0 0.0
    %1079 = vmatpush1.msra.mxu0 0.0
    %1080 = vmatprep.subr.mxu0 0.0
    %1081 = vmatpush1.msra.mxu0 0.0
    %1082 = vmatprep.subr.mxu0 0.0
    %1083 = vmatpush1.msra.mxu0 0.0
    %1084 = vmatprep.subr.mxu0 0.0
    %1085 = vmatpush1.msra.mxu0 0.0
    %1086 = vmatprep.subr.mxu0 0.0
    %1087 = vmatpush1.msra.mxu0 0.0
    %1088 = vmatprep.subr.mxu0 0.0
    %1089 = vmatpush1.msra.mxu0 0.0
    %1090 = vmatprep.subr.mxu0 0.0
    %1091 = vmatpush1.msra.mxu0 0.0
    %1092 = vmatprep.subr.mxu0 0.0
    %1093 = vmatpush1.msra.mxu0 0.0
    %1094 = vmatprep.subr.mxu0 0.0
    %1095 = vmatpush1.msra.mxu0 0.0
    %1096 = vmatprep.subr.mxu0 0.0
    %1097 = vmatpush1.msra.mxu0 0.0
    %1098 = vmatprep.subr.mxu0 0.0
    %1099 = vmatpush1.msra.mxu0 0.0
    %1100 = vmatprep.subr.mxu0 0.0
    %1101 = vmatpush1.msra.mxu0 0.0
    %1102 = vmatprep.mubr.f32.mxu0 0.0
    %1103 = vmatmul.mubr.f32.gmra.mrb[0].mxu0 %v1030
    %v1104 = vpop.f32.mrb[0].mxu0
    %v1105 = vadd.f32 %v1025, %v1104
    %v1106 = vpop.f32.mrb[0].mxu0
    %v1107 = vadd.f32 %v1027, %v1106
    %1108 = vdwg.mxu0
    %1109 = vrot.lane.b32.xlu0 %v924, 15
    %v1110 = vpop.permute.xlu0 %1109
    %1112 = vrot.lane.b32.xlu0 %v922, 15
    %v1113 = vpop.permute.xlu0 %1112
    %v1114 = vsel %vm257, %v1113, %v1110
    %v1117 = vsel %vm257, %v1110, %v1113
    %v1118 = vsel %vm50, %v1117, 0.0
    %v1119 = vsel %vm51, %v1114, 0.0
    %v1120 = vld [vmem:[%s264] sm:$0xff]
    %v1122 = vsel %vm90, %v1120, 0
    %v1125 = vsel %vm94, %v1118, 0
    %v1128 = vsel %vm94, %v1119, 0
    %1130 = vmatprep.subr.mxu0 %v1128
    %1131 = vmatpush1.msra.mxu0 %v1125
    %1132 = vmatprep.subr.mxu0 0.0
    %1133 = vmatpush1.msra.mxu0 0.0
    %1134 = vmatprep.subr.mxu0 0.0
    %1135 = vmatpush1.msra.mxu0 0.0
    %1136 = vmatprep.subr.mxu0 0.0
    %1137 = vmatpush1.msra.mxu0 0.0
    %1138 = vmatprep.subr.mxu0 0.0
    %1139 = vmatpush1.msra.mxu0 0.0
    %1140 = vmatprep.subr.mxu0 0.0
    %1141 = vmatpush1.msra.mxu0 0.0
    %1142 = vmatprep.subr.mxu0 0.0
    %1143 = vmatpush1.msra.mxu0 0.0
    %1144 = vmatprep.subr.mxu0 0.0
    %1145 = vmatpush1.msra.mxu0 0.0
    %1146 = vmatprep.subr.mxu0 0.0
    %1147 = vmatpush1.msra.mxu0 0.0
    %1148 = vmatprep.subr.mxu0 0.0
    %1149 = vmatpush1.msra.mxu0 0.0
    %1150 = vmatprep.subr.mxu0 0.0
    %1151 = vmatpush1.msra.mxu0 0.0
    %1152 = vmatprep.subr.mxu0 0.0
    %1153 = vmatpush1.msra.mxu0 0.0
    %1154 = vmatprep.subr.mxu0 0.0
    %1155 = vmatpush1.msra.mxu0 0.0
    %1156 = vmatprep.subr.mxu0 0.0
    %1157 = vmatpush1.msra.mxu0 0.0
    %1158 = vmatprep.subr.mxu0 0.0
    %1159 = vmatpush1.msra.mxu0 0.0
    %1160 = vmatprep.subr.mxu0 0.0
    %1161 = vmatpush1.msra.mxu0 0.0
    %1162 = vmatprep.subr.mxu0 0.0
    %1163 = vmatpush1.msra.mxu0 0.0
    %1164 = vmatprep.subr.mxu0 0.0
    %1165 = vmatpush1.msra.mxu0 0.0
    %1166 = vmatprep.subr.mxu0 0.0
    %1167 = vmatpush1.msra.mxu0 0.0
    %1168 = vmatprep.subr.mxu0 0.0
    %1169 = vmatpush1.msra.mxu0 0.0
    %1170 = vmatprep.subr.mxu0 0.0
    %1171 = vmatpush1.msra.mxu0 0.0
    %1172 = vmatprep.subr.mxu0 0.0
    %1173 = vmatpush1.msra.mxu0 0.0
    %1174 = vmatprep.subr.mxu0 0.0
    %1175 = vmatpush1.msra.mxu0 0.0
    %1176 = vmatprep.subr.mxu0 0.0
    %1177 = vmatpush1.msra.mxu0 0.0
    %1178 = vmatprep.subr.mxu0 0.0
    %1179 = vmatpush1.msra.mxu0 0.0
    %1180 = vmatprep.subr.mxu0 0.0
    %1181 = vmatpush1.msra.mxu0 0.0
    %1182 = vmatprep.subr.mxu0 0.0
    %1183 = vmatpush1.msra.mxu0 0.0
    %1184 = vmatprep.subr.mxu0 0.0
    %1185 = vmatpush1.msra.mxu0 0.0
    %1186 = vmatprep.subr.mxu0 0.0
    %1187 = vmatpush1.msra.mxu0 0.0
    %1188 = vmatprep.subr.mxu0 0.0
    %1189 = vmatpush1.msra.mxu0 0.0
    %1190 = vmatprep.subr.mxu0 0.0
    %1191 = vmatpush1.msra.mxu0 0.0
    %1192 = vmatprep.subr.mxu0 0.0
    %1193 = vmatpush1.msra.mxu0 0.0
    %1194 = vmatprep.mubr.f32.mxu0 0.0
    %1195 = vmatmul.mubr.f32.gmra.mrb[0].mxu0 %v1122
    %v1196 = vpop.f32.mrb[0].mxu0
    %v1197 = vadd.f32 0.0, %v1196
    %v1198 = vpop.f32.mrb[0].mxu0
    %v1199 = vadd.f32 0.0, %v1198
    %1200 = vdwg.mxu0
    %v1201 = vadd.f32 %v1105, %v1197
    %v1202 = vadd.f32 %v1107, %v1199
    %1203 = vrot.lane.b32.xlu0 %v924, 1
    %v1204 = vpop.permute.xlu0 %1203
    %1206 = vrot.lane.b32.xlu0 %v922, 1
    %v1207 = vpop.permute.xlu0 %1206
    %v1208 = vsel %vm353, %v1207, %v1204
    %v1211 = vsel %vm353, %v1204, %v1207
    %v1212 = vsel %vm44, %v1211, 0.0
    %v1213 = vsel %vm45, %v1208, 0.0
    %v1214 = vld [vmem:[%s360] sm:$0xff]
    %v1216 = vsel %vm90, %v1214, 0
    %v1219 = vsel %vm94, %v1212, 0
    %v1222 = vsel %vm94, %v1213, 0
    %1224 = vmatprep.subr.mxu0 %v1222
    %1225 = vmatpush1.msra.mxu0 %v1219
    %1226 = vmatprep.subr.mxu0 0.0
    %1227 = vmatpush1.msra.mxu0 0.0
    %1228 = vmatprep.subr.mxu0 0.0
    %1229 = vmatpush1.msra.mxu0 0.0
    %1230 = vmatprep.subr.mxu0 0.0
    %1231 = vmatpush1.msra.mxu0 0.0
    %1232 = vmatprep.subr.mxu0 0.0
    %1233 = vmatpush1.msra.mxu0 0.0
    %1234 = vmatprep.subr.mxu0 0.0
    %1235 = vmatpush1.msra.mxu0 0.0
    %1236 = vmatprep.subr.mxu0 0.0
    %1237 = vmatpush1.msra.mxu0 0.0
    %1238 = vmatprep.subr.mxu0 0.0
    %1239 = vmatpush1.msra.mxu0 0.0
    %1240 = vmatprep.subr.mxu0 0.0
    %1241 = vmatpush1.msra.mxu0 0.0
    %1242 = vmatprep.subr.mxu0 0.0
    %1243 = vmatpush1.msra.mxu0 0.0
    %1244 = vmatprep.subr.mxu0 0.0
    %1245 = vmatpush1.msra.mxu0 0.0
    %1246 = vmatprep.subr.mxu0 0.0
    %1247 = vmatpush1.msra.mxu0 0.0
    %1248 = vmatprep.subr.mxu0 0.0
    %1249 = vmatpush1.msra.mxu0 0.0
    %1250 = vmatprep.subr.mxu0 0.0
    %1251 = vmatpush1.msra.mxu0 0.0
    %1252 = vmatprep.subr.mxu0 0.0
    %1253 = vmatpush1.msra.mxu0 0.0
    %1254 = vmatprep.subr.mxu0 0.0
    %1255 = vmatpush1.msra.mxu0 0.0
    %1256 = vmatprep.subr.mxu0 0.0
    %1257 = vmatpush1.msra.mxu0 0.0
    %1258 = vmatprep.subr.mxu0 0.0
    %1259 = vmatpush1.msra.mxu0 0.0
    %1260 = vmatprep.subr.mxu0 0.0
    %1261 = vmatpush1.msra.mxu0 0.0
    %1262 = vmatprep.subr.mxu0 0.0
    %1263 = vmatpush1.msra.mxu0 0.0
    %1264 = vmatprep.subr.mxu0 0.0
    %1265 = vmatpush1.msra.mxu0 0.0
    %1266 = vmatprep.subr.mxu0 0.0
    %1267 = vmatpush1.msra.mxu0 0.0
    %1268 = vmatprep.subr.mxu0 0.0
    %1269 = vmatpush1.msra.mxu0 0.0
    %1270 = vmatprep.subr.mxu0 0.0
    %1271 = vmatpush1.msra.mxu0 0.0
    %1272 = vmatprep.subr.mxu0 0.0
    %1273 = vmatpush1.msra.mxu0 0.0
    %1274 = vmatprep.subr.mxu0 0.0
    %1275 = vmatpush1.msra.mxu0 0.0
    %1276 = vmatprep.subr.mxu0 0.0
    %1277 = vmatpush1.msra.mxu0 0.0
    %1278 = vmatprep.subr.mxu0 0.0
    %1279 = vmatpush1.msra.mxu0 0.0
    %1280 = vmatprep.subr.mxu0 0.0
    %1281 = vmatpush1.msra.mxu0 0.0
    %1282 = vmatprep.subr.mxu0 0.0
    %1283 = vmatpush1.msra.mxu0 0.0
    %1284 = vmatprep.subr.mxu0 0.0
    %1285 = vmatpush1.msra.mxu0 0.0
    %1286 = vmatprep.subr.mxu0 0.0
    %1287 = vmatpush1.msra.mxu0 0.0
    %1288 = vmatprep.mubr.f32.mxu0 0.0
    %1289 = vmatmul.mubr.f32.gmra.mrb[0].mxu0 %v1216
    %v1290 = vpop.f32.mrb[0].mxu0
    %v1291 = vadd.f32 0.0, %v1290
    %v1292 = vpop.f32.mrb[0].mxu0
    %v1293 = vadd.f32 0.0, %v1292
    %1294 = vdwg.mxu0
    %v1295 = vadd.f32 %v1201, %v1291
    %v1296 = vadd.f32 %v1202, %v1293
    %v1297 = vld [vmem:[%s444] sm:$0xff]
    %v1299 = vsel %vm90, %v1297, 0
    %v1301 = vsel %vm94, %v922, 0
    %v1303 = vsel %vm94, %v924, 0
    %1305 = vmatprep.subr.mxu0 %v1303
    %1306 = vmatpush1.msra.mxu0 %v1301
    %1307 = vmatprep.subr.mxu0 0.0
    %1308 = vmatpush1.msra.mxu0 0.0
    %1309 = vmatprep.subr.mxu0 0.0
    %1310 = vmatpush1.msra.mxu0 0.0
    %1311 = vmatprep.subr.mxu0 0.0
    %1312 = vmatpush1.msra.mxu0 0.0
    %1313 = vmatprep.subr.mxu0 0.0
    %1314 = vmatpush1.msra.mxu0 0.0
    %1315 = vmatprep.subr.mxu0 0.0
    %1316 = vmatpush1.msra.mxu0 0.0
    %1317 = vmatprep.subr.mxu0 0.0
    %1318 = vmatpush1.msra.mxu0 0.0
    %1319 = vmatprep.subr.mxu0 0.0
    %1320 = vmatpush1.msra.mxu0 0.0
    %1321 = vmatprep.subr.mxu0 0.0
    %1322 = vmatpush1.msra.mxu0 0.0
    %1323 = vmatprep.subr.mxu0 0.0
    %1324 = vmatpush1.msra.mxu0 0.0
    %1325 = vmatprep.subr.mxu0 0.0
    %1326 = vmatpush1.msra.mxu0 0.0
    %1327 = vmatprep.subr.mxu0 0.0
    %1328 = vmatpush1.msra.mxu0 0.0
    %1329 = vmatprep.subr.mxu0 0.0
    %1330 = vmatpush1.msra.mxu0 0.0
    %1331 = vmatprep.subr.mxu0 0.0
    %1332 = vmatpush1.msra.mxu0 0.0
    %1333 = vmatprep.subr.mxu0 0.0
    %1334 = vmatpush1.msra.mxu0 0.0
    %1335 = vmatprep.subr.mxu0 0.0
    %1336 = vmatpush1.msra.mxu0 0.0
    %1337 = vmatprep.subr.mxu0 0.0
    %1338 = vmatpush1.msra.mxu0 0.0
    %1339 = vmatprep.subr.mxu0 0.0
    %1340 = vmatpush1.msra.mxu0 0.0
    %1341 = vmatprep.subr.mxu0 0.0
    %1342 = vmatpush1.msra.mxu0 0.0
    %1343 = vmatprep.subr.mxu0 0.0
    %1344 = vmatpush1.msra.mxu0 0.0
    %1345 = vmatprep.subr.mxu0 0.0
    %1346 = vmatpush1.msra.mxu0 0.0
    %1347 = vmatprep.subr.mxu0 0.0
    %1348 = vmatpush1.msra.mxu0 0.0
    %1349 = vmatprep.subr.mxu0 0.0
    %1350 = vmatpush1.msra.mxu0 0.0
    %1351 = vmatprep.subr.mxu0 0.0
    %1352 = vmatpush1.msra.mxu0 0.0
    %1353 = vmatprep.subr.mxu0 0.0
    %1354 = vmatpush1.msra.mxu0 0.0
    %1355 = vmatprep.subr.mxu0 0.0
    %1356 = vmatpush1.msra.mxu0 0.0
    %1357 = vmatprep.subr.mxu0 0.0
    %1358 = vmatpush1.msra.mxu0 0.0
    %1359 = vmatprep.subr.mxu0 0.0
    %1360 = vmatpush1.msra.mxu0 0.0
    %1361 = vmatprep.subr.mxu0 0.0
    %1362 = vmatpush1.msra.mxu0 0.0
    %1363 = vmatprep.subr.mxu0 0.0
    %1364 = vmatpush1.msra.mxu0 0.0
    %1365 = vmatprep.subr.mxu0 0.0
    %1366 = vmatpush1.msra.mxu0 0.0
    %1367 = vmatprep.subr.mxu0 0.0
    %1368 = vmatpush1.msra.mxu0 0.0
    %1369 = vmatprep.mubr.f32.mxu0 0.0
    %1370 = vmatmul.mubr.f32.gmra.mrb[0].mxu0 %v1299
    %v1371 = vpop.f32.mrb[0].mxu0
    %v1372 = vadd.f32 0.0, %v1371
    %v1373 = vpop.f32.mrb[0].mxu0
    %v1374 = vadd.f32 0.0, %v1373
    %1375 = vdwg.mxu0
    %v1376 = vadd.f32 %v1295, %v1372
    %v1377 = vadd.f32 %v1296, %v1374
    %1378 = vrot.lane.b32.xlu0 %v922, 127
    %v1379 = vpop.permute.xlu0 %1378
    %1380 = vrot.lane.b32.xlu0 %v924, 127
    %v1381 = vpop.permute.xlu0 %1380
    %v1382 = vsel %vm530, %v1379, %v1381
    %v1386 = vsel %vm530, %v1381, %v1379
    %v1387 = vsel %vm48, %v1382, 0.0
    %v1388 = vsel %vm49, %v1386, 0.0
    %v1389 = vld [vmem:[%s538] sm:$0xff]
    %v1391 = vsel %vm90, %v1389, 0
    %v1394 = vsel %vm94, %v1387, 0
    %v1397 = vsel %vm94, %v1388, 0
    %1399 = vmatprep.subr.mxu0 %v1397
    %1400 = vmatpush1.msra.mxu0 %v1394
    %1401 = vmatprep.subr.mxu0 0.0
    %1402 = vmatpush1.msra.mxu0 0.0
    %1403 = vmatprep.subr.mxu0 0.0
    %1404 = vmatpush1.msra.mxu0 0.0
    %1405 = vmatprep.subr.mxu0 0.0
    %1406 = vmatpush1.msra.mxu0 0.0
    %1407 = vmatprep.subr.mxu0 0.0
    %1408 = vmatpush1.msra.mxu0 0.0
    %1409 = vmatprep.subr.mxu0 0.0
    %1410 = vmatpush1.msra.mxu0 0.0
    %1411 = vmatprep.subr.mxu0 0.0
    %1412 = vmatpush1.msra.mxu0 0.0
    %1413 = vmatprep.subr.mxu0 0.0
    %1414 = vmatpush1.msra.mxu0 0.0
    %1415 = vmatprep.subr.mxu0 0.0
    %1416 = vmatpush1.msra.mxu0 0.0
    %1417 = vmatprep.subr.mxu0 0.0
    %1418 = vmatpush1.msra.mxu0 0.0
    %1419 = vmatprep.subr.mxu0 0.0
    %1420 = vmatpush1.msra.mxu0 0.0
    %1421 = vmatprep.subr.mxu0 0.0
    %1422 = vmatpush1.msra.mxu0 0.0
    %1423 = vmatprep.subr.mxu0 0.0
    %1424 = vmatpush1.msra.mxu0 0.0
    %1425 = vmatprep.subr.mxu0 0.0
    %1426 = vmatpush1.msra.mxu0 0.0
    %1427 = vmatprep.subr.mxu0 0.0
    %1428 = vmatpush1.msra.mxu0 0.0
    %1429 = vmatprep.subr.mxu0 0.0
    %1430 = vmatpush1.msra.mxu0 0.0
    %1431 = vmatprep.subr.mxu0 0.0
    %1432 = vmatpush1.msra.mxu0 0.0
    %1433 = vmatprep.subr.mxu0 0.0
    %1434 = vmatpush1.msra.mxu0 0.0
    %1435 = vmatprep.subr.mxu0 0.0
    %1436 = vmatpush1.msra.mxu0 0.0
    %1437 = vmatprep.subr.mxu0 0.0
    %1438 = vmatpush1.msra.mxu0 0.0
    %1439 = vmatprep.subr.mxu0 0.0
    %1440 = vmatpush1.msra.mxu0 0.0
    %1441 = vmatprep.subr.mxu0 0.0
    %1442 = vmatpush1.msra.mxu0 0.0
    %1443 = vmatprep.subr.mxu0 0.0
    %1444 = vmatpush1.msra.mxu0 0.0
    %1445 = vmatprep.subr.mxu0 0.0
    %1446 = vmatpush1.msra.mxu0 0.0
    %1447 = vmatprep.subr.mxu0 0.0
    %1448 = vmatpush1.msra.mxu0 0.0
    %1449 = vmatprep.subr.mxu0 0.0
    %1450 = vmatpush1.msra.mxu0 0.0
    %1451 = vmatprep.subr.mxu0 0.0
    %1452 = vmatpush1.msra.mxu0 0.0
    %1453 = vmatprep.subr.mxu0 0.0
    %1454 = vmatpush1.msra.mxu0 0.0
    %1455 = vmatprep.subr.mxu0 0.0
    %1456 = vmatpush1.msra.mxu0 0.0
    %1457 = vmatprep.subr.mxu0 0.0
    %1458 = vmatpush1.msra.mxu0 0.0
    %1459 = vmatprep.subr.mxu0 0.0
    %1460 = vmatpush1.msra.mxu0 0.0
    %1461 = vmatprep.subr.mxu0 0.0
    %1462 = vmatpush1.msra.mxu0 0.0
    %1463 = vmatprep.mubr.f32.mxu0 0.0
    %1464 = vmatmul.mubr.f32.gmra.mrb[0].mxu0 %v1391
    %v1465 = vpop.f32.mrb[0].mxu0
    %v1466 = vadd.f32 0.0, %v1465
    %v1467 = vpop.f32.mrb[0].mxu0
    %v1468 = vadd.f32 0.0, %v1467
    %1469 = vdwg.mxu0
    %v1470 = vadd.f32 %v1376, %v1466
    %v1471 = vadd.f32 %v1377, %v1468
    %1472 = vrot.lane.b32.xlu0 %v922, 113
    %v1473 = vpop.permute.xlu0 %1472
    %1474 = vrot.lane.b32.xlu0 %v924, 113
    %v1475 = vpop.permute.xlu0 %1474
    %v1476 = vsel %vm626, %v1473, %v1475
    %v1480 = vsel %vm626, %v1475, %v1473
    %v1481 = vsel %vm54, %v1476, 0.0
    %v1482 = vsel %vm55, %v1480, 0.0
    %v1483 = vld [vmem:[%s634] sm:$0xff]
    %v1485 = vsel %vm90, %v1483, 0
    %v1488 = vsel %vm94, %v1481, 0
    %v1491 = vsel %vm94, %v1482, 0
    %1493 = vmatprep.subr.mxu0 %v1491
    %1494 = vmatpush1.msra.mxu0 %v1488
    %1495 = vmatprep.subr.mxu0 0.0
    %1496 = vmatpush1.msra.mxu0 0.0
    %1497 = vmatprep.subr.mxu0 0.0
    %1498 = vmatpush1.msra.mxu0 0.0
    %1499 = vmatprep.subr.mxu0 0.0
    %1500 = vmatpush1.msra.mxu0 0.0
    %1501 = vmatprep.subr.mxu0 0.0
    %1502 = vmatpush1.msra.mxu0 0.0
    %1503 = vmatprep.subr.mxu0 0.0
    %1504 = vmatpush1.msra.mxu0 0.0
    %1505 = vmatprep.subr.mxu0 0.0
    %1506 = vmatpush1.msra.mxu0 0.0
    %1507 = vmatprep.subr.mxu0 0.0
    %1508 = vmatpush1.msra.mxu0 0.0
    %1509 = vmatprep.subr.mxu0 0.0
    %1510 = vmatpush1.msra.mxu0 0.0
    %1511 = vmatprep.subr.mxu0 0.0
    %1512 = vmatpush1.msra.mxu0 0.0
    %1513 = vmatprep.subr.mxu0 0.0
    %1514 = vmatpush1.msra.mxu0 0.0
    %1515 = vmatprep.subr.mxu0 0.0
    %1516 = vmatpush1.msra.mxu0 0.0
    %1517 = vmatprep.subr.mxu0 0.0
    %1518 = vmatpush1.msra.mxu0 0.0
    %1519 = vmatprep.subr.mxu0 0.0
    %1520 = vmatpush1.msra.mxu0 0.0
    %1521 = vmatprep.subr.mxu0 0.0
    %1522 = vmatpush1.msra.mxu0 0.0
    %1523 = vmatprep.subr.mxu0 0.0
    %1524 = vmatpush1.msra.mxu0 0.0
    %1525 = vmatprep.subr.mxu0 0.0
    %1526 = vmatpush1.msra.mxu0 0.0
    %1527 = vmatprep.subr.mxu0 0.0
    %1528 = vmatpush1.msra.mxu0 0.0
    %1529 = vmatprep.subr.mxu0 0.0
    %1530 = vmatpush1.msra.mxu0 0.0
    %1531 = vmatprep.subr.mxu0 0.0
    %1532 = vmatpush1.msra.mxu0 0.0
    %1533 = vmatprep.subr.mxu0 0.0
    %1534 = vmatpush1.msra.mxu0 0.0
    %1535 = vmatprep.subr.mxu0 0.0
    %1536 = vmatpush1.msra.mxu0 0.0
    %1537 = vmatprep.subr.mxu0 0.0
    %1538 = vmatpush1.msra.mxu0 0.0
    %1539 = vmatprep.subr.mxu0 0.0
    %1540 = vmatpush1.msra.mxu0 0.0
    %1541 = vmatprep.subr.mxu0 0.0
    %1542 = vmatpush1.msra.mxu0 0.0
    %1543 = vmatprep.subr.mxu0 0.0
    %1544 = vmatpush1.msra.mxu0 0.0
    %1545 = vmatprep.subr.mxu0 0.0
    %1546 = vmatpush1.msra.mxu0 0.0
    %1547 = vmatprep.subr.mxu0 0.0
    %1548 = vmatpush1.msra.mxu0 0.0
    %1549 = vmatprep.subr.mxu0 0.0
    %1550 = vmatpush1.msra.mxu0 0.0
    %1551 = vmatprep.subr.mxu0 0.0
    %1552 = vmatpush1.msra.mxu0 0.0
    %1553 = vmatprep.subr.mxu0 0.0
    %1554 = vmatpush1.msra.mxu0 0.0
    %1555 = vmatprep.subr.mxu0 0.0
    %1556 = vmatpush1.msra.mxu0 0.0
    %1557 = vmatprep.mubr.f32.mxu0 0.0
    %1558 = vmatmul.mubr.f32.gmra.mrb[0].mxu0 %v1485
    %v1559 = vpop.f32.mrb[0].mxu0
    %v1560 = vadd.f32 0.0, %v1559
    %v1561 = vpop.f32.mrb[0].mxu0
    %v1562 = vadd.f32 0.0, %v1561
    %1563 = vdwg.mxu0
    %v1564 = vadd.f32 %v1470, %v1560
    %v1565 = vadd.f32 %v1471, %v1562
    %1566 = vrot.lane.b32.xlu0 %v922, 112
    %v1567 = vpop.permute.xlu0 %1566
    %1568 = vrot.lane.b32.xlu0 %v924, 112
    %v1569 = vpop.permute.xlu0 %1568
    %v1570 = vsel %vm722, %v1567, %v1569
    %v1574 = vsel %vm722, %v1569, %v1567
    %v1575 = vsel %vm52, %v1570, 0.0
    %v1576 = vsel %vm53, %v1574, 0.0
    %v1577 = vld [vmem:[%s730] sm:$0xff]
    %v1579 = vsel %vm90, %v1577, 0
    %v1582 = vsel %vm94, %v1575, 0
    %v1585 = vsel %vm94, %v1576, 0
    %1587 = vmatprep.subr.mxu0 %v1585
    %1588 = vmatpush1.msra.mxu0 %v1582
    %1589 = vmatprep.subr.mxu0 0.0
    %1590 = vmatpush1.msra.mxu0 0.0
    %1591 = vmatprep.subr.mxu0 0.0
    %1592 = vmatpush1.msra.mxu0 0.0
    %1593 = vmatprep.subr.mxu0 0.0
    %1594 = vmatpush1.msra.mxu0 0.0
    %1595 = vmatprep.subr.mxu0 0.0
    %1596 = vmatpush1.msra.mxu0 0.0
    %1597 = vmatprep.subr.mxu0 0.0
    %1598 = vmatpush1.msra.mxu0 0.0
    %1599 = vmatprep.subr.mxu0 0.0
    %1600 = vmatpush1.msra.mxu0 0.0
    %1601 = vmatprep.subr.mxu0 0.0
    %1602 = vmatpush1.msra.mxu0 0.0
    %1603 = vmatprep.subr.mxu0 0.0
    %1604 = vmatpush1.msra.mxu0 0.0
    %1605 = vmatprep.subr.mxu0 0.0
    %1606 = vmatpush1.msra.mxu0 0.0
    %1607 = vmatprep.subr.mxu0 0.0
    %1608 = vmatpush1.msra.mxu0 0.0
    %1609 = vmatprep.subr.mxu0 0.0
    %1610 = vmatpush1.msra.mxu0 0.0
    %1611 = vmatprep.subr.mxu0 0.0
    %1612 = vmatpush1.msra.mxu0 0.0
    %1613 = vmatprep.subr.mxu0 0.0
    %1614 = vmatpush1.msra.mxu0 0.0
    %1615 = vmatprep.subr.mxu0 0.0
    %1616 = vmatpush1.msra.mxu0 0.0
    %1617 = vmatprep.subr.mxu0 0.0
    %1618 = vmatpush1.msra.mxu0 0.0
    %1619 = vmatprep.subr.mxu0 0.0
    %1620 = vmatpush1.msra.mxu0 0.0
    %1621 = vmatprep.subr.mxu0 0.0
    %1622 = vmatpush1.msra.mxu0 0.0
    %1623 = vmatprep.subr.mxu0 0.0
    %1624 = vmatpush1.msra.mxu0 0.0
    %1625 = vmatprep.subr.mxu0 0.0
    %1626 = vmatpush1.msra.mxu0 0.0
    %1627 = vmatprep.subr.mxu0 0.0
    %1628 = vmatpush1.msra.mxu0 0.0
    %1629 = vmatprep.subr.mxu0 0.0
    %1630 = vmatpush1.msra.mxu0 0.0
    %1631 = vmatprep.subr.mxu0 0.0
    %1632 = vmatpush1.msra.mxu0 0.0
    %1633 = vmatprep.subr.mxu0 0.0
    %1634 = vmatpush1.msra.mxu0 0.0
    %1635 = vmatprep.subr.mxu0 0.0
    %1636 = vmatpush1.msra.mxu0 0.0
    %1637 = vmatprep.subr.mxu0 0.0
    %1638 = vmatpush1.msra.mxu0 0.0
    %1639 = vmatprep.subr.mxu0 0.0
    %1640 = vmatpush1.msra.mxu0 0.0
    %1641 = vmatprep.subr.mxu0 0.0
    %1642 = vmatpush1.msra.mxu0 0.0
    %1643 = vmatprep.subr.mxu0 0.0
    %1644 = vmatpush1.msra.mxu0 0.0
    %1645 = vmatprep.subr.mxu0 0.0
    %1646 = vmatpush1.msra.mxu0 0.0
    %1647 = vmatprep.subr.mxu0 0.0
    %1648 = vmatpush1.msra.mxu0 0.0
    %1649 = vmatprep.subr.mxu0 0.0
    %1650 = vmatpush1.msra.mxu0 0.0
    %1651 = vmatprep.mubr.f32.mxu0 0.0
    %1652 = vmatmul.mubr.f32.gmra.mrb[0].mxu0 %v1579
    %v1653 = vpop.f32.mrb[0].mxu0
    %v1654 = vadd.f32 0.0, %v1653
    %v1655 = vpop.f32.mrb[0].mxu0
    %v1656 = vadd.f32 0.0, %v1655
    %1657 = vdwg.mxu0
    %v1658 = vadd.f32 %v1564, %v1654
    %v1659 = vadd.f32 %v1565, %v1656
    %1660 = vrot.lane.b32.xlu0 %v922, 111
    %v1661 = vpop.permute.xlu0 %1660
    %1662 = vrot.lane.b32.xlu0 %v924, 111
    %v1663 = vpop.permute.xlu0 %1662
    %v1664 = vsel %vm818, %v1661, %v1663
    %v1668 = vsel %vm818, %v1663, %v1661
    %v1669 = vsel %vm56, %v1664, 0.0
    %v1670 = vsel %vm57, %v1668, 0.0
    %v1671 = vld [vmem:[%s826] sm:$0xff]
    %v1673 = vsel %vm90, %v1671, 0
    %v1676 = vsel %vm94, %v1669, 0
    %v1679 = vsel %vm94, %v1670, 0
    %1681 = vmatprep.subr.mxu0 %v1679
    %1682 = vmatpush1.msra.mxu0 %v1676
    %1683 = vmatprep.subr.mxu0 0.0
    %1684 = vmatpush1.msra.mxu0 0.0
    %1685 = vmatprep.subr.mxu0 0.0
    %1686 = vmatpush1.msra.mxu0 0.0
    %1687 = vmatprep.subr.mxu0 0.0
    %1688 = vmatpush1.msra.mxu0 0.0
    %1689 = vmatprep.subr.mxu0 0.0
    %1690 = vmatpush1.msra.mxu0 0.0
    %1691 = vmatprep.subr.mxu0 0.0
    %1692 = vmatpush1.msra.mxu0 0.0
    %1693 = vmatprep.subr.mxu0 0.0
    %1694 = vmatpush1.msra.mxu0 0.0
    %1695 = vmatprep.subr.mxu0 0.0
    %1696 = vmatpush1.msra.mxu0 0.0
    %1697 = vmatprep.subr.mxu0 0.0
    %1698 = vmatpush1.msra.mxu0 0.0
    %1699 = vmatprep.subr.mxu0 0.0
    %1700 = vmatpush1.msra.mxu0 0.0
    %1701 = vmatprep.subr.mxu0 0.0
    %1702 = vmatpush1.msra.mxu0 0.0
    %1703 = vmatprep.subr.mxu0 0.0
    %1704 = vmatpush1.msra.mxu0 0.0
    %1705 = vmatprep.subr.mxu0 0.0
    %1706 = vmatpush1.msra.mxu0 0.0
    %1707 = vmatprep.subr.mxu0 0.0
    %1708 = vmatpush1.msra.mxu0 0.0
    %1709 = vmatprep.subr.mxu0 0.0
    %1710 = vmatpush1.msra.mxu0 0.0
    %1711 = vmatprep.subr.mxu0 0.0
    %1712 = vmatpush1.msra.mxu0 0.0
    %1713 = vmatprep.subr.mxu0 0.0
    %1714 = vmatpush1.msra.mxu0 0.0
    %1715 = vmatprep.subr.mxu0 0.0
    %1716 = vmatpush1.msra.mxu0 0.0
    %1717 = vmatprep.subr.mxu0 0.0
    %1718 = vmatpush1.msra.mxu0 0.0
    %1719 = vmatprep.subr.mxu0 0.0
    %1720 = vmatpush1.msra.mxu0 0.0
    %1721 = vmatprep.subr.mxu0 0.0
    %1722 = vmatpush1.msra.mxu0 0.0
    %1723 = vmatprep.subr.mxu0 0.0
    %1724 = vmatpush1.msra.mxu0 0.0
    %1725 = vmatprep.subr.mxu0 0.0
    %1726 = vmatpush1.msra.mxu0 0.0
    %1727 = vmatprep.subr.mxu0 0.0
    %1728 = vmatpush1.msra.mxu0 0.0
    %1729 = vmatprep.subr.mxu0 0.0
    %1730 = vmatpush1.msra.mxu0 0.0
    %1731 = vmatprep.subr.mxu0 0.0
    %1732 = vmatpush1.msra.mxu0 0.0
    %1733 = vmatprep.subr.mxu0 0.0
    %1734 = vmatpush1.msra.mxu0 0.0
    %1735 = vmatprep.subr.mxu0 0.0
    %1736 = vmatpush1.msra.mxu0 0.0
    %1737 = vmatprep.subr.mxu0 0.0
    %1738 = vmatpush1.msra.mxu0 0.0
    %1739 = vmatprep.subr.mxu0 0.0
    %1740 = vmatpush1.msra.mxu0 0.0
    %1741 = vmatprep.subr.mxu0 0.0
    %1742 = vmatpush1.msra.mxu0 0.0
    %1743 = vmatprep.subr.mxu0 0.0
    %1744 = vmatpush1.msra.mxu0 0.0
    %1745 = vmatprep.mubr.f32.mxu0 0.0
    %1746 = vmatmul.mubr.f32.gmra.mrb[0].mxu0 %v1673
    %v1747 = vpop.f32.mrb[0].mxu0
    %v1748 = vadd.f32 0.0, %v1747
    %v1749 = vpop.f32.mrb[0].mxu0
    %v1750 = vadd.f32 0.0, %v1749
    %1751 = vdwg.mxu0
    %v1752 = vadd.f32 %v1658, %v1748
    %v1753 = vadd.f32 %v1659, %v1750
    %v1754 = vadd.f32 %v1752, %v913
    %v1755 = vadd.f32 %v1753, %v913
    %v1756 = vmax.f32 %v1754, 0.0
    %v1757 = vmax.f32 %v1755, 0.0
    %s1758 = scalar_lea.vmem %s5, 16
    %1759 = vst [vmem:[%s1758] sm:$0xff] %v1756
    %1760 = vst [vmem:[%s1758 + $0x8] sm:$0xff] %v1757
    %v1761 = vld [vmem:[#allocation2] sm:$0xff]
    %v1762 = vld [vmem:[#allocation2 + $0x8] sm:$0xff]
    %v1763 = vld [vmem:[#allocation2 + $0x10] sm:$0xff]
    %v1764 = vld [vmem:[#allocation2 + $0x18] sm:$0xff]
    %v1765 = vld [vmem:[#allocation2 + $0x20] sm:$0xff]
    %v1766 = vld [vmem:[#allocation2 + $0x28] sm:$0xff]
    %v1767 = vld [vmem:[#allocation2 + $0x30] sm:$0xff]
    %v1768 = vld [vmem:[#allocation2 + $0x38] sm:$0xff]
    %v1769 = vld [vmem:[#allocation2 + $0x40] sm:$0xff]
    %v1770 = vld [vmem:[#allocation2 + $0x48] sm:$0xff]
    %v1771 = vld [vmem:[#allocation2 + $0x50] sm:$0xff]
    %v1772 = vld [vmem:[#allocation2 + $0x58] sm:$0xff]
    %v1773 = vld [vmem:[#allocation2 + $0x60] sm:$0xff]
    %v1774 = vld [vmem:[#allocation2 + $0x68] sm:$0xff]
    %v1775 = vld [vmem:[#allocation2 + $0x70] sm:$0xff]
    %v1776 = vld [vmem:[#allocation2 + $0x78] sm:$0xff]
    %v1777 = vld [vmem:[#allocation2 + $0x80] sm:$0xff]
    %v1778 = vld [vmem:[#allocation2 + $0x88] sm:$0xff]
    %v1779 = vld [vmem:[#allocation2 + $0x90] sm:$0xff]
    %v1780 = vld [vmem:[#allocation2 + $0x98] sm:$0xff]
    %v1781 = vld [vmem:[#allocation2 + $0xa0] sm:$0xff]
    %v1782 = vld [vmem:[#allocation2 + $0xa8] sm:$0xff]
    %v1783 = vld [vmem:[#allocation2 + $0xb0] sm:$0xff]
    %v1784 = vld [vmem:[#allocation2 + $0xb8] sm:$0xff]
    %v1785 = vld [vmem:[#allocation2 + $0xc0] sm:$0xff]
    %v1786 = vld [vmem:[#allocation2 + $0xc8] sm:$0xff]
    %v1787 = vld [vmem:[#allocation2 + $0xd0] sm:$0xff]
    %v1788 = vld [vmem:[#allocation2 + $0xd8] sm:$0xff]
    %v1789 = vld [vmem:[#allocation2 + $0xe0] sm:$0xff]
    %v1790 = vld [vmem:[#allocation2 + $0xe8] sm:$0xff]
    %v1791 = vld [vmem:[#allocation2 + $0xf0] sm:$0xff]
    %v1792 = vld [vmem:[#allocation2 + $0xf8] sm:$0xff]
    %1793 = vmatprep.subr.mxu0 0.0
    %1794 = vmatpush1.msra.mxu0 %v1761
    %1795 = vmatprep.subr.mxu0 0.0
    %1796 = vmatpush1.msra.mxu0 %v1762
    %1797 = vmatprep.subr.mxu0 0.0
    %1798 = vmatpush1.msra.mxu0 %v1763
    %1799 = vmatprep.subr.mxu0 0.0
    %1800 = vmatpush1.msra.mxu0 %v1764
    %1801 = vmatprep.subr.mxu0 0.0
    %1802 = vmatpush1.msra.mxu0 %v1765
    %1803 = vmatprep.subr.mxu0 0.0
    %1804 = vmatpush1.msra.mxu0 %v1766
    %1805 = vmatprep.subr.mxu0 0.0
    %1806 = vmatpush1.msra.mxu0 %v1767
    %1807 = vmatprep.subr.mxu0 0.0
    %1808 = vmatpush1.msra.mxu0 %v1768
    %1809 = vmatprep.subr.mxu0 0.0
    %1810 = vmatpush1.msra.mxu0 %v1769
    %1811 = vmatprep.subr.mxu0 0.0
    %1812 = vmatpush1.msra.mxu0 %v1770
    %1813 = vmatprep.subr.mxu0 0.0
    %1814 = vmatpush1.msra.mxu0 %v1771
    %1815 = vmatprep.subr.mxu0 0.0
    %1816 = vmatpush1.msra.mxu0 %v1772
    %1817 = vmatprep.subr.mxu0 0.0
    %1818 = vmatpush1.msra.mxu0 %v1773
    %1819 = vmatprep.subr.mxu0 0.0
    %1820 = vmatpush1.msra.mxu0 %v1774
    %1821 = vmatprep.subr.mxu0 0.0
    %1822 = vmatpush1.msra.mxu0 %v1775
    %1823 = vmatprep.subr.mxu0 0.0
    %1824 = vmatpush1.msra.mxu0 %v1776
    %1825 = vmatprep.subr.mxu0 0.0
    %1826 = vmatpush1.msra.mxu0 %v1777
    %1827 = vmatprep.subr.mxu0 0.0
    %1828 = vmatpush1.msra.mxu0 %v1778
    %1829 = vmatprep.subr.mxu0 0.0
    %1830 = vmatpush1.msra.mxu0 %v1779
    %1831 = vmatprep.subr.mxu0 0.0
    %1832 = vmatpush1.msra.mxu0 %v1780
    %1833 = vmatprep.subr.mxu0 0.0
    %1834 = vmatpush1.msra.mxu0 %v1781
    %1835 = vmatprep.subr.mxu0 0.0
    %1836 = vmatpush1.msra.mxu0 %v1782
    %1837 = vmatprep.subr.mxu0 0.0
    %1838 = vmatpush1.msra.mxu0 %v1783
    %1839 = vmatprep.subr.mxu0 0.0
    %1840 = vmatpush1.msra.mxu0 %v1784
    %1841 = vmatprep.subr.mxu0 0.0
    %1842 = vmatpush1.msra.mxu0 %v1785
    %1843 = vmatprep.subr.mxu0 0.0
    %1844 = vmatpush1.msra.mxu0 %v1786
    %1845 = vmatprep.subr.mxu0 0.0
    %1846 = vmatpush1.msra.mxu0 %v1787
    %1847 = vmatprep.subr.mxu0 0.0
    %1848 = vmatpush1.msra.mxu0 %v1788
    %1849 = vmatprep.subr.mxu0 0.0
    %1850 = vmatpush1.msra.mxu0 %v1789
    %1851 = vmatprep.subr.mxu0 0.0
    %1852 = vmatpush1.msra.mxu0 %v1790
    %1853 = vmatprep.subr.mxu0 0.0
    %1854 = vmatpush1.msra.mxu0 %v1791
    %1855 = vmatprep.subr.mxu0 0.0
    %1856 = vmatpush1.msra.mxu0 %v1792
    %1857 = vmatprep.mubr.f32.mxu0 %v918
    %1858 = vmatmul.mubr.f32.gmra.mrb[0].mxu0 %v917
    %v1859 = vpop.f32.mrb[0].mxu0
    %v1860 = vadd.f32 0.0, %v1859
    %v1861 = vpop.f32.mrb[0].mxu0
    %1862 = vdwg.mxu0
    %v1863 = vadd.f32 %v59, %v1860
    %1864 = vmatprep.subr.mxu0 0.0
    %1865 = vmatpush1.msra.mxu0 %v1761
    %1866 = vmatprep.subr.mxu0 0.0
    %1867 = vmatpush1.msra.mxu0 %v1762
    %1868 = vmatprep.subr.mxu0 0.0
    %1869 = vmatpush1.msra.mxu0 %v1763
    %1870 = vmatprep.subr.mxu0 0.0
    %1871 = vmatpush1.msra.mxu0 %v1764
    %1872 = vmatprep.subr.mxu0 0.0
    %1873 = vmatpush1.msra.mxu0 %v1765
    %1874 = vmatprep.subr.mxu0 0.0
    %1875 = vmatpush1.msra.mxu0 %v1766
    %1876 = vmatprep.subr.mxu0 0.0
    %1877 = vmatpush1.msra.mxu0 %v1767
    %1878 = vmatprep.subr.mxu0 0.0
    %1879 = vmatpush1.msra.mxu0 %v1768
    %1880 = vmatprep.subr.mxu0 0.0
    %1881 = vmatpush1.msra.mxu0 %v1769
    %1882 = vmatprep.subr.mxu0 0.0
    %1883 = vmatpush1.msra.mxu0 %v1770
    %1884 = vmatprep.subr.mxu0 0.0
    %1885 = vmatpush1.msra.mxu0 %v1771
    %1886 = vmatprep.subr.mxu0 0.0
    %1887 = vmatpush1.msra.mxu0 %v1772
    %1888 = vmatprep.subr.mxu0 0.0
    %1889 = vmatpush1.msra.mxu0 %v1773
    %1890 = vmatprep.subr.mxu0 0.0
    %1891 = vmatpush1.msra.mxu0 %v1774
    %1892 = vmatprep.subr.mxu0 0.0
    %1893 = vmatpush1.msra.mxu0 %v1775
    %1894 = vmatprep.subr.mxu0 0.0
    %1895 = vmatpush1.msra.mxu0 %v1776
    %1896 = vmatprep.subr.mxu0 0.0
    %1897 = vmatpush1.msra.mxu0 %v1777
    %1898 = vmatprep.subr.mxu0 0.0
    %1899 = vmatpush1.msra.mxu0 %v1778
    %1900 = vmatprep.subr.mxu0 0.0
    %1901 = vmatpush1.msra.mxu0 %v1779
    %1902 = vmatprep.subr.mxu0 0.0
    %1903 = vmatpush1.msra.mxu0 %v1780
    %1904 = vmatprep.subr.mxu0 0.0
    %1905 = vmatpush1.msra.mxu0 %v1781
    %1906 = vmatprep.subr.mxu0 0.0
    %1907 = vmatpush1.msra.mxu0 %v1782
    %1908 = vmatprep.subr.mxu0 0.0
    %1909 = vmatpush1.msra.mxu0 %v1783
    %1910 = vmatprep.subr.mxu0 0.0
    %1911 = vmatpush1.msra.mxu0 %v1784
    %1912 = vmatprep.subr.mxu0 0.0
    %1913 = vmatpush1.msra.mxu0 %v1785
    %1914 = vmatprep.subr.mxu0 0.0
    %1915 = vmatpush1.msra.mxu0 %v1786
    %1916 = vmatprep.subr.mxu0 0.0
    %1917 = vmatpush1.msra.mxu0 %v1787
    %1918 = vmatprep.subr.mxu0 0.0
    %1919 = vmatpush1.msra.mxu0 %v1788
    %1920 = vmatprep.subr.mxu0 0.0
    %1921 = vmatpush1.msra.mxu0 %v1789
    %1922 = vmatprep.subr.mxu0 0.0
    %1923 = vmatpush1.msra.mxu0 %v1790
    %1924 = vmatprep.subr.mxu0 0.0
    %1925 = vmatpush1.msra.mxu0 %v1791
    %1926 = vmatprep.subr.mxu0 0.0
    %1927 = vmatpush1.msra.mxu0 %v1792
    %1928 = vmatprep.mubr.f32.mxu0 %v1757
    %1929 = vmatmul.mubr.f32.gmra.mrb[0].mxu0 %v1756
    %v1930 = vpop.f32.mrb[0].mxu0
    %v1931 = vadd.f32 0.0, %v1930
    %v1932 = vpop.f32.mrb[0].mxu0
    %1933 = vdwg.mxu0
    %v1934 = vadd.f32 %v59, %v1931
    %s1935 = scalar_lea.vmem [#allocation2], 256
    %v1936 = vld [vmem:[%s1935] sm:$0xff]
    %v1937 = vld [vmem:[%s1935 + $0x8] sm:$0xff]
    %v1938 = vld [vmem:[%s1935 + $0x10] sm:$0xff]
    %v1939 = vld [vmem:[%s1935 + $0x18] sm:$0xff]
    %v1940 = vld [vmem:[%s1935 + $0x20] sm:$0xff]
    %v1941 = vld [vmem:[%s1935 + $0x28] sm:$0xff]
    %v1942 = vld [vmem:[%s1935 + $0x30] sm:$0xff]
    %v1943 = vld [vmem:[%s1935 + $0x38] sm:$0xff]
    %v1944 = vld [vmem:[%s1935 + $0x40] sm:$0xff]
    %v1945 = vld [vmem:[%s1935 + $0x48] sm:$0xff]
    %v1946 = vld [vmem:[%s1935 + $0x50] sm:$0xff]
    %v1947 = vld [vmem:[%s1935 + $0x58] sm:$0xff]
    %v1948 = vld [vmem:[%s1935 + $0x60] sm:$0xff]
    %v1949 = vld [vmem:[%s1935 + $0x68] sm:$0xff]
    %v1950 = vld [vmem:[%s1935 + $0x70] sm:$0xff]
    %v1951 = vld [vmem:[%s1935 + $0x78] sm:$0xff]
    %v1952 = vld [vmem:[%s1935 + $0x80] sm:$0xff]
    %v1953 = vld [vmem:[%s1935 + $0x88] sm:$0xff]
    %v1954 = vld [vmem:[%s1935 + $0x90] sm:$0xff]
    %v1955 = vld [vmem:[%s1935 + $0x98] sm:$0xff]
    %v1956 = vld [vmem:[%s1935 + $0xa0] sm:$0xff]
    %v1957 = vld [vmem:[%s1935 + $0xa8] sm:$0xff]
    %v1958 = vld [vmem:[%s1935 + $0xb0] sm:$0xff]
    %v1959 = vld [vmem:[%s1935 + $0xb8] sm:$0xff]
    %v1960 = vld [vmem:[%s1935 + $0xc0] sm:$0xff]
    %v1961 = vld [vmem:[%s1935 + $0xc8] sm:$0xff]
    %v1962 = vld [vmem:[%s1935 + $0xd0] sm:$0xff]
    %v1963 = vld [vmem:[%s1935 + $0xd8] sm:$0xff]
    %v1964 = vld [vmem:[%s1935 + $0xe0] sm:$0xff]
    %v1965 = vld [vmem:[%s1935 + $0xe8] sm:$0xff]
    %v1966 = vld [vmem:[%s1935 + $0xf0] sm:$0xff]
    %v1967 = vld [vmem:[%s1935 + $0xf8] sm:$0xff]
    %v1970 = vrot.slane %v917, 1
    %v1971 = vrot.slane %v918, 1
    %1974 = vmatprep.subr.mxu0 0.0
    %1975 = vmatpush1.msra.mxu0 %v1936
    %1976 = vmatprep.subr.mxu0 0.0
    %1977 = vmatpush1.msra.mxu0 %v1937
    %1978 = vmatprep.subr.mxu0 0.0
    %1979 = vmatpush1.msra.mxu0 %v1938
    %1980 = vmatprep.subr.mxu0 0.0
    %1981 = vmatpush1.msra.mxu0 %v1939
    %1982 = vmatprep.subr.mxu0 0.0
    %1983 = vmatpush1.msra.mxu0 %v1940
    %1984 = vmatprep.subr.mxu0 0.0
    %1985 = vmatpush1.msra.mxu0 %v1941
    %1986 = vmatprep.subr.mxu0 0.0
    %1987 = vmatpush1.msra.mxu0 %v1942
    %1988 = vmatprep.subr.mxu0 0.0
    %1989 = vmatpush1.msra.mxu0 %v1943
    %1990 = vmatprep.subr.mxu0 0.0
    %1991 = vmatpush1.msra.mxu0 %v1944
    %1992 = vmatprep.subr.mxu0 0.0
    %1993 = vmatpush1.msra.mxu0 %v1945
    %1994 = vmatprep.subr.mxu0 0.0
    %1995 = vmatpush1.msra.mxu0 %v1946
    %1996 = vmatprep.subr.mxu0 0.0
    %1997 = vmatpush1.msra.mxu0 %v1947
    %1998 = vmatprep.subr.mxu0 0.0
    %1999 = vmatpush1.msra.mxu0 %v1948
    %2000 = vmatprep.subr.mxu0 0.0
    %2001 = vmatpush1.msra.mxu0 %v1949
    %2002 = vmatprep.subr.mxu0 0.0
    %2003 = vmatpush1.msra.mxu0 %v1950
    %2004 = vmatprep.subr.mxu0 0.0
    %2005 = vmatpush1.msra.mxu0 %v1951
    %2006 = vmatprep.subr.mxu0 0.0
    %2007 = vmatpush1.msra.mxu0 %v1952
    %2008 = vmatprep.subr.mxu0 0.0
    %2009 = vmatpush1.msra.mxu0 %v1953
    %2010 = vmatprep.subr.mxu0 0.0
    %2011 = vmatpush1.msra.mxu0 %v1954
    %2012 = vmatprep.subr.mxu0 0.0
    %2013 = vmatpush1.msra.mxu0 %v1955
    %2014 = vmatprep.subr.mxu0 0.0
    %2015 = vmatpush1.msra.mxu0 %v1956
    %2016 = vmatprep.subr.mxu0 0.0
    %2017 = vmatpush1.msra.mxu0 %v1957
    %2018 = vmatprep.subr.mxu0 0.0
    %2019 = vmatpush1.msra.mxu0 %v1958
    %2020 = vmatprep.subr.mxu0 0.0
    %2021 = vmatpush1.msra.mxu0 %v1959
    %2022 = vmatprep.subr.mxu0 0.0
    %2023 = vmatpush1.msra.mxu0 %v1960
    %2024 = vmatprep.subr.mxu0 0.0
    %2025 = vmatpush1.msra.mxu0 %v1961
    %2026 = vmatprep.subr.mxu0 0.0
    %2027 = vmatpush1.msra.mxu0 %v1962
    %2028 = vmatprep.subr.mxu0 0.0
    %2029 = vmatpush1.msra.mxu0 %v1963
    %2030 = vmatprep.subr.mxu0 0.0
    %2031 = vmatpush1.msra.mxu0 %v1964
    %2032 = vmatprep.subr.mxu0 0.0
    %2033 = vmatpush1.msra.mxu0 %v1965
    %2034 = vmatprep.subr.mxu0 0.0
    %2035 = vmatpush1.msra.mxu0 %v1966
    %2036 = vmatprep.subr.mxu0 0.0
    %2037 = vmatpush1.msra.mxu0 %v1967
    %2038 = vmatprep.mubr.f32.mxu0 %v1971
    %2039 = vmatmul.mubr.f32.gmra.mrb[0].mxu0 %v1970
    %v2040 = vpop.f32.mrb[0].mxu0
    %v2041 = vadd.f32 0.0, %v2040
    %v2042 = vpop.f32.mrb[0].mxu0
    %2043 = vdwg.mxu0
    %v2044 = vadd.f32 %v1863, %v2041
    %v2047 = vrot.slane %v1756, 1
    %v2048 = vrot.slane %v1757, 1
    %2051 = vmatprep.subr.mxu0 0.0
    %2052 = vmatpush1.msra.mxu0 %v1936
    %2053 = vmatprep.subr.mxu0 0.0
    %2054 = vmatpush1.msra.mxu0 %v1937
    %2055 = vmatprep.subr.mxu0 0.0
    %2056 = vmatpush1.msra.mxu0 %v1938
    %2057 = vmatprep.subr.mxu0 0.0
    %2058 = vmatpush1.msra.mxu0 %v1939
    %2059 = vmatprep.subr.mxu0 0.0
    %2060 = vmatpush1.msra.mxu0 %v1940
    %2061 = vmatprep.subr.mxu0 0.0
    %2062 = vmatpush1.msra.mxu0 %v1941
    %2063 = vmatprep.subr.mxu0 0.0
    %2064 = vmatpush1.msra.mxu0 %v1942
    %2065 = vmatprep.subr.mxu0 0.0
    %2066 = vmatpush1.msra.mxu0 %v1943
    %2067 = vmatprep.subr.mxu0 0.0
    %2068 = vmatpush1.msra.mxu0 %v1944
    %2069 = vmatprep.subr.mxu0 0.0
    %2070 = vmatpush1.msra.mxu0 %v1945
    %2071 = vmatprep.subr.mxu0 0.0
    %2072 = vmatpush1.msra.mxu0 %v1946
    %2073 = vmatprep.subr.mxu0 0.0
    %2074 = vmatpush1.msra.mxu0 %v1947
    %2075 = vmatprep.subr.mxu0 0.0
    %2076 = vmatpush1.msra.mxu0 %v1948
    %2077 = vmatprep.subr.mxu0 0.0
    %2078 = vmatpush1.msra.mxu0 %v1949
    %2079 = vmatprep.subr.mxu0 0.0
    %2080 = vmatpush1.msra.mxu0 %v1950
    %2081 = vmatprep.subr.mxu0 0.0
    %2082 = vmatpush1.msra.mxu0 %v1951
    %2083 = vmatprep.subr.mxu0 0.0
    %2084 = vmatpush1.msra.mxu0 %v1952
    %2085 = vmatprep.subr.mxu0 0.0
    %2086 = vmatpush1.msra.mxu0 %v1953
    %2087 = vmatprep.subr.mxu0 0.0
    %2088 = vmatpush1.msra.mxu0 %v1954
    %2089 = vmatprep.subr.mxu0 0.0
    %2090 = vmatpush1.msra.mxu0 %v1955
    %2091 = vmatprep.subr.mxu0 0.0
    %2092 = vmatpush1.msra.mxu0 %v1956
    %2093 = vmatprep.subr.mxu0 0.0
    %2094 = vmatpush1.msra.mxu0 %v1957
    %2095 = vmatprep.subr.mxu0 0.0
    %2096 = vmatpush1.msra.mxu0 %v1958
    %2097 = vmatprep.subr.mxu0 0.0
    %2098 = vmatpush1.msra.mxu0 %v1959
    %2099 = vmatprep.subr.mxu0 0.0
    %2100 = vmatpush1.msra.mxu0 %v1960
    %2101 = vmatprep.subr.mxu0 0.0
    %2102 = vmatpush1.msra.mxu0 %v1961
    %2103 = vmatprep.subr.mxu0 0.0
    %2104 = vmatpush1.msra.mxu0 %v1962
    %2105 = vmatprep.subr.mxu0 0.0
    %2106 = vmatpush1.msra.mxu0 %v1963
    %2107 = vmatprep.subr.mxu0 0.0
    %2108 = vmatpush1.msra.mxu0 %v1964
    %2109 = vmatprep.subr.mxu0 0.0
    %2110 = vmatpush1.msra.mxu0 %v1965
    %2111 = vmatprep.subr.mxu0 0.0
    %2112 = vmatpush1.msra.mxu0 %v1966
    %2113 = vmatprep.subr.mxu0 0.0
    %2114 = vmatpush1.msra.mxu0 %v1967
    %2115 = vmatprep.mubr.f32.mxu0 %v2048
    %2116 = vmatmul.mubr.f32.gmra.mrb[0].mxu0 %v2047
    %v2117 = vpop.f32.mrb[0].mxu0
    %v2118 = vadd.f32 0.0, %v2117
    %v2119 = vpop.f32.mrb[0].mxu0
    %2120 = vdwg.mxu0
    %v2121 = vadd.f32 %v1934, %v2118
    %s2122 = scalar_lea.vmem [#allocation2], 512
    %v2123 = vld [vmem:[%s2122] sm:$0xff]
    %v2124 = vld [vmem:[%s2122 + $0x8] sm:$0xff]
    %v2125 = vld [vmem:[%s2122 + $0x10] sm:$0xff]
    %v2126 = vld [vmem:[%s2122 + $0x18] sm:$0xff]
    %v2127 = vld [vmem:[%s2122 + $0x20] sm:$0xff]
    %v2128 = vld [vmem:[%s2122 + $0x28] sm:$0xff]
    %v2129 = vld [vmem:[%s2122 + $0x30] sm:$0xff]
    %v2130 = vld [vmem:[%s2122 + $0x38] sm:$0xff]
    %v2131 = vld [vmem:[%s2122 + $0x40] sm:$0xff]
    %v2132 = vld [vmem:[%s2122 + $0x48] sm:$0xff]
    %v2133 = vld [vmem:[%s2122 + $0x50] sm:$0xff]
    %v2134 = vld [vmem:[%s2122 + $0x58] sm:$0xff]
    %v2135 = vld [vmem:[%s2122 + $0x60] sm:$0xff]
    %v2136 = vld [vmem:[%s2122 + $0x68] sm:$0xff]
    %v2137 = vld [vmem:[%s2122 + $0x70] sm:$0xff]
    %v2138 = vld [vmem:[%s2122 + $0x78] sm:$0xff]
    %v2139 = vld [vmem:[%s2122 + $0x80] sm:$0xff]
    %v2140 = vld [vmem:[%s2122 + $0x88] sm:$0xff]
    %v2141 = vld [vmem:[%s2122 + $0x90] sm:$0xff]
    %v2142 = vld [vmem:[%s2122 + $0x98] sm:$0xff]
    %v2143 = vld [vmem:[%s2122 + $0xa0] sm:$0xff]
    %v2144 = vld [vmem:[%s2122 + $0xa8] sm:$0xff]
    %v2145 = vld [vmem:[%s2122 + $0xb0] sm:$0xff]
    %v2146 = vld [vmem:[%s2122 + $0xb8] sm:$0xff]
    %v2147 = vld [vmem:[%s2122 + $0xc0] sm:$0xff]
    %v2148 = vld [vmem:[%s2122 + $0xc8] sm:$0xff]
    %v2149 = vld [vmem:[%s2122 + $0xd0] sm:$0xff]
    %v2150 = vld [vmem:[%s2122 + $0xd8] sm:$0xff]
    %v2151 = vld [vmem:[%s2122 + $0xe0] sm:$0xff]
    %v2152 = vld [vmem:[%s2122 + $0xe8] sm:$0xff]
    %v2153 = vld [vmem:[%s2122 + $0xf0] sm:$0xff]
    %v2154 = vld [vmem:[%s2122 + $0xf8] sm:$0xff]
    %v2155 = vrot.slane %v917, 2
    %v2156 = vrot.slane %v918, 2
    %2159 = vmatprep.subr.mxu0 0.0
    %2160 = vmatpush1.msra.mxu0 %v2123
    %2161 = vmatprep.subr.mxu0 0.0
    %2162 = vmatpush1.msra.mxu0 %v2124
    %2163 = vmatprep.subr.mxu0 0.0
    %2164 = vmatpush1.msra.mxu0 %v2125
    %2165 = vmatprep.subr.mxu0 0.0
    %2166 = vmatpush1.msra.mxu0 %v2126
    %2167 = vmatprep.subr.mxu0 0.0
    %2168 = vmatpush1.msra.mxu0 %v2127
    %2169 = vmatprep.subr.mxu0 0.0
    %2170 = vmatpush1.msra.mxu0 %v2128
    %2171 = vmatprep.subr.mxu0 0.0
    %2172 = vmatpush1.msra.mxu0 %v2129
    %2173 = vmatprep.subr.mxu0 0.0
    %2174 = vmatpush1.msra.mxu0 %v2130
    %2175 = vmatprep.subr.mxu0 0.0
    %2176 = vmatpush1.msra.mxu0 %v2131
    %2177 = vmatprep.subr.mxu0 0.0
    %2178 = vmatpush1.msra.mxu0 %v2132
    %2179 = vmatprep.subr.mxu0 0.0
    %2180 = vmatpush1.msra.mxu0 %v2133
    %2181 = vmatprep.subr.mxu0 0.0
    %2182 = vmatpush1.msra.mxu0 %v2134
    %2183 = vmatprep.subr.mxu0 0.0
    %2184 = vmatpush1.msra.mxu0 %v2135
    %2185 = vmatprep.subr.mxu0 0.0
    %2186 = vmatpush1.msra.mxu0 %v2136
    %2187 = vmatprep.subr.mxu0 0.0
    %2188 = vmatpush1.msra.mxu0 %v2137
    %2189 = vmatprep.subr.mxu0 0.0
    %2190 = vmatpush1.msra.mxu0 %v2138
    %2191 = vmatprep.subr.mxu0 0.0
    %2192 = vmatpush1.msra.mxu0 %v2139
    %2193 = vmatprep.subr.mxu0 0.0
    %2194 = vmatpush1.msra.mxu0 %v2140
    %2195 = vmatprep.subr.mxu0 0.0
    %2196 = vmatpush1.msra.mxu0 %v2141
    %2197 = vmatprep.subr.mxu0 0.0
    %2198 = vmatpush1.msra.mxu0 %v2142
    %2199 = vmatprep.subr.mxu0 0.0
    %2200 = vmatpush1.msra.mxu0 %v2143
    %2201 = vmatprep.subr.mxu0 0.0
    %2202 = vmatpush1.msra.mxu0 %v2144
    %2203 = vmatprep.subr.mxu0 0.0
    %2204 = vmatpush1.msra.mxu0 %v2145
    %2205 = vmatprep.subr.mxu0 0.0
    %2206 = vmatpush1.msra.mxu0 %v2146
    %2207 = vmatprep.subr.mxu0 0.0
    %2208 = vmatpush1.msra.mxu0 %v2147
    %2209 = vmatprep.subr.mxu0 0.0
    %2210 = vmatpush1.msra.mxu0 %v2148
    %2211 = vmatprep.subr.mxu0 0.0
    %2212 = vmatpush1.msra.mxu0 %v2149
    %2213 = vmatprep.subr.mxu0 0.0
    %2214 = vmatpush1.msra.mxu0 %v2150
    %2215 = vmatprep.subr.mxu0 0.0
    %2216 = vmatpush1.msra.mxu0 %v2151
    %2217 = vmatprep.subr.mxu0 0.0
    %2218 = vmatpush1.msra.mxu0 %v2152
    %2219 = vmatprep.subr.mxu0 0.0
    %2220 = vmatpush1.msra.mxu0 %v2153
    %2221 = vmatprep.subr.mxu0 0.0
    %2222 = vmatpush1.msra.mxu0 %v2154
    %2223 = vmatprep.mubr.f32.mxu0 %v2156
    %2224 = vmatmul.mubr.f32.gmra.mrb[0].mxu0 %v2155
    %v2225 = vpop.f32.mrb[0].mxu0
    %v2226 = vadd.f32 0.0, %v2225
    %v2227 = vpop.f32.mrb[0].mxu0
    %2228 = vdwg.mxu0
    %v2229 = vadd.f32 %v2044, %v2226
    %v2230 = vrot.slane %v1756, 2
    %v2231 = vrot.slane %v1757, 2
    %2234 = vmatprep.subr.mxu0 0.0
    %2235 = vmatpush1.msra.mxu0 %v2123
    %2236 = vmatprep.subr.mxu0 0.0
    %2237 = vmatpush1.msra.mxu0 %v2124
    %2238 = vmatprep.subr.mxu0 0.0
    %2239 = vmatpush1.msra.mxu0 %v2125
    %2240 = vmatprep.subr.mxu0 0.0
    %2241 = vmatpush1.msra.mxu0 %v2126
    %2242 = vmatprep.subr.mxu0 0.0
    %2243 = vmatpush1.msra.mxu0 %v2127
    %2244 = vmatprep.subr.mxu0 0.0
    %2245 = vmatpush1.msra.mxu0 %v2128
    %2246 = vmatprep.subr.mxu0 0.0
    %2247 = vmatpush1.msra.mxu0 %v2129
    %2248 = vmatprep.subr.mxu0 0.0
    %2249 = vmatpush1.msra.mxu0 %v2130
    %2250 = vmatprep.subr.mxu0 0.0
    %2251 = vmatpush1.msra.mxu0 %v2131
    %2252 = vmatprep.subr.mxu0 0.0
    %2253 = vmatpush1.msra.mxu0 %v2132
    %2254 = vmatprep.subr.mxu0 0.0
    %2255 = vmatpush1.msra.mxu0 %v2133
    %2256 = vmatprep.subr.mxu0 0.0
    %2257 = vmatpush1.msra.mxu0 %v2134
    %2258 = vmatprep.subr.mxu0 0.0
    %2259 = vmatpush1.msra.mxu0 %v2135
    %2260 = vmatprep.subr.mxu0 0.0
    %2261 = vmatpush1.msra.mxu0 %v2136
    %2262 = vmatprep.subr.mxu0 0.0
    %2263 = vmatpush1.msra.mxu0 %v2137
    %2264 = vmatprep.subr.mxu0 0.0
    %2265 = vmatpush1.msra.mxu0 %v2138
    %2266 = vmatprep.subr.mxu0 0.0
    %2267 = vmatpush1.msra.mxu0 %v2139
    %2268 = vmatprep.subr.mxu0 0.0
    %2269 = vmatpush1.msra.mxu0 %v2140
    %2270 = vmatprep.subr.mxu0 0.0
    %2271 = vmatpush1.msra.mxu0 %v2141
    %2272 = vmatprep.subr.mxu0 0.0
    %2273 = vmatpush1.msra.mxu0 %v2142
    %2274 = vmatprep.subr.mxu0 0.0
    %2275 = vmatpush1.msra.mxu0 %v2143
    %2276 = vmatprep.subr.mxu0 0.0
    %2277 = vmatpush1.msra.mxu0 %v2144
    %2278 = vmatprep.subr.mxu0 0.0
    %2279 = vmatpush1.msra.mxu0 %v2145
    %2280 = vmatprep.subr.mxu0 0.0
    %2281 = vmatpush1.msra.mxu0 %v2146
    %2282 = vmatprep.subr.mxu0 0.0
    %2283 = vmatpush1.msra.mxu0 %v2147
    %2284 = vmatprep.subr.mxu0 0.0
    %2285 = vmatpush1.msra.mxu0 %v2148
    %2286 = vmatprep.subr.mxu0 0.0
    %2287 = vmatpush1.msra.mxu0 %v2149
    %2288 = vmatprep.subr.mxu0 0.0
    %2289 = vmatpush1.msra.mxu0 %v2150
    %2290 = vmatprep.subr.mxu0 0.0
    %2291 = vmatpush1.msra.mxu0 %v2151
    %2292 = vmatprep.subr.mxu0 0.0
    %2293 = vmatpush1.msra.mxu0 %v2152
    %2294 = vmatprep.subr.mxu0 0.0
    %2295 = vmatpush1.msra.mxu0 %v2153
    %2296 = vmatprep.subr.mxu0 0.0
    %2297 = vmatpush1.msra.mxu0 %v2154
    %2298 = vmatprep.mubr.f32.mxu0 %v2231
    %2299 = vmatmul.mubr.f32.gmra.mrb[0].mxu0 %v2230
    %v2300 = vpop.f32.mrb[0].mxu0
    %v2301 = vadd.f32 0.0, %v2300
    %v2302 = vpop.f32.mrb[0].mxu0
    %2303 = vdwg.mxu0
    %v2304 = vadd.f32 %v2121, %v2301
    %s2305 = scalar_lea.vmem [#allocation2], 768
    %v2306 = vld [vmem:[%s2305] sm:$0xff]
    %v2307 = vld [vmem:[%s2305 + $0x8] sm:$0xff]
    %v2308 = vld [vmem:[%s2305 + $0x10] sm:$0xff]
    %v2309 = vld [vmem:[%s2305 + $0x18] sm:$0xff]
    %v2310 = vld [vmem:[%s2305 + $0x20] sm:$0xff]
    %v2311 = vld [vmem:[%s2305 + $0x28] sm:$0xff]
    %v2312 = vld [vmem:[%s2305 + $0x30] sm:$0xff]
    %v2313 = vld [vmem:[%s2305 + $0x38] sm:$0xff]
    %v2314 = vld [vmem:[%s2305 + $0x40] sm:$0xff]
    %v2315 = vld [vmem:[%s2305 + $0x48] sm:$0xff]
    %v2316 = vld [vmem:[%s2305 + $0x50] sm:$0xff]
    %v2317 = vld [vmem:[%s2305 + $0x58] sm:$0xff]
    %v2318 = vld [vmem:[%s2305 + $0x60] sm:$0xff]
    %v2319 = vld [vmem:[%s2305 + $0x68] sm:$0xff]
    %v2320 = vld [vmem:[%s2305 + $0x70] sm:$0xff]
    %v2321 = vld [vmem:[%s2305 + $0x78] sm:$0xff]
    %v2322 = vld [vmem:[%s2305 + $0x80] sm:$0xff]
    %v2323 = vld [vmem:[%s2305 + $0x88] sm:$0xff]
    %v2324 = vld [vmem:[%s2305 + $0x90] sm:$0xff]
    %v2325 = vld [vmem:[%s2305 + $0x98] sm:$0xff]
    %v2326 = vld [vmem:[%s2305 + $0xa0] sm:$0xff]
    %v2327 = vld [vmem:[%s2305 + $0xa8] sm:$0xff]
    %v2328 = vld [vmem:[%s2305 + $0xb0] sm:$0xff]
    %v2329 = vld [vmem:[%s2305 + $0xb8] sm:$0xff]
    %v2330 = vld [vmem:[%s2305 + $0xc0] sm:$0xff]
    %v2331 = vld [vmem:[%s2305 + $0xc8] sm:$0xff]
    %v2332 = vld [vmem:[%s2305 + $0xd0] sm:$0xff]
    %v2333 = vld [vmem:[%s2305 + $0xd8] sm:$0xff]
    %v2334 = vld [vmem:[%s2305 + $0xe0] sm:$0xff]
    %v2335 = vld [vmem:[%s2305 + $0xe8] sm:$0xff]
    %v2336 = vld [vmem:[%s2305 + $0xf0] sm:$0xff]
    %v2337 = vld [vmem:[%s2305 + $0xf8] sm:$0xff]
    %v2338 = vrot.slane %v917, 3
    %v2339 = vrot.slane %v918, 3
    %2342 = vmatprep.subr.mxu0 0.0
    %2343 = vmatpush1.msra.mxu0 %v2306
    %2344 = vmatprep.subr.mxu0 0.0
    %2345 = vmatpush1.msra.mxu0 %v2307
    %2346 = vmatprep.subr.mxu0 0.0
    %2347 = vmatpush1.msra.mxu0 %v2308
    %2348 = vmatprep.subr.mxu0 0.0
    %2349 = vmatpush1.msra.mxu0 %v2309
    %2350 = vmatprep.subr.mxu0 0.0
    %2351 = vmatpush1.msra.mxu0 %v2310
    %2352 = vmatprep.subr.mxu0 0.0
    %2353 = vmatpush1.msra.mxu0 %v2311
    %2354 = vmatprep.subr.mxu0 0.0
    %2355 = vmatpush1.msra.mxu0 %v2312
    %2356 = vmatprep.subr.mxu0 0.0
    %2357 = vmatpush1.msra.mxu0 %v2313
    %2358 = vmatprep.subr.mxu0 0.0
    %2359 = vmatpush1.msra.mxu0 %v2314
    %2360 = vmatprep.subr.mxu0 0.0
    %2361 = vmatpush1.msra.mxu0 %v2315
    %2362 = vmatprep.subr.mxu0 0.0
    %2363 = vmatpush1.msra.mxu0 %v2316
    %2364 = vmatprep.subr.mxu0 0.0
    %2365 = vmatpush1.msra.mxu0 %v2317
    %2366 = vmatprep.subr.mxu0 0.0
    %2367 = vmatpush1.msra.mxu0 %v2318
    %2368 = vmatprep.subr.mxu0 0.0
    %2369 = vmatpush1.msra.mxu0 %v2319
    %2370 = vmatprep.subr.mxu0 0.0
    %2371 = vmatpush1.msra.mxu0 %v2320
    %2372 = vmatprep.subr.mxu0 0.0
    %2373 = vmatpush1.msra.mxu0 %v2321
    %2374 = vmatprep.subr.mxu0 0.0
    %2375 = vmatpush1.msra.mxu0 %v2322
    %2376 = vmatprep.subr.mxu0 0.0
    %2377 = vmatpush1.msra.mxu0 %v2323
    %2378 = vmatprep.subr.mxu0 0.0
    %2379 = vmatpush1.msra.mxu0 %v2324
    %2380 = vmatprep.subr.mxu0 0.0
    %2381 = vmatpush1.msra.mxu0 %v2325
    %2382 = vmatprep.subr.mxu0 0.0
    %2383 = vmatpush1.msra.mxu0 %v2326
    %2384 = vmatprep.subr.mxu0 0.0
    %2385 = vmatpush1.msra.mxu0 %v2327
    %2386 = vmatprep.subr.mxu0 0.0
    %2387 = vmatpush1.msra.mxu0 %v2328
    %2388 = vmatprep.subr.mxu0 0.0
    %2389 = vmatpush1.msra.mxu0 %v2329
    %2390 = vmatprep.subr.mxu0 0.0
    %2391 = vmatpush1.msra.mxu0 %v2330
    %2392 = vmatprep.subr.mxu0 0.0
    %2393 = vmatpush1.msra.mxu0 %v2331
    %2394 = vmatprep.subr.mxu0 0.0
    %2395 = vmatpush1.msra.mxu0 %v2332
    %2396 = vmatprep.subr.mxu0 0.0
    %2397 = vmatpush1.msra.mxu0 %v2333
    %2398 = vmatprep.subr.mxu0 0.0
    %2399 = vmatpush1.msra.mxu0 %v2334
    %2400 = vmatprep.subr.mxu0 0.0
    %2401 = vmatpush1.msra.mxu0 %v2335
    %2402 = vmatprep.subr.mxu0 0.0
    %2403 = vmatpush1.msra.mxu0 %v2336
    %2404 = vmatprep.subr.mxu0 0.0
    %2405 = vmatpush1.msra.mxu0 %v2337
    %2406 = vmatprep.mubr.f32.mxu0 %v2339
    %2407 = vmatmul.mubr.f32.gmra.mrb[0].mxu0 %v2338
    %v2408 = vpop.f32.mrb[0].mxu0
    %v2409 = vadd.f32 0.0, %v2408
    %v2410 = vpop.f32.mrb[0].mxu0
    %2411 = vdwg.mxu0
    %v2412 = vadd.f32 %v2229, %v2409
    %v2413 = vrot.slane %v1756, 3
    %v2414 = vrot.slane %v1757, 3
    %2417 = vmatprep.subr.mxu0 0.0
    %2418 = vmatpush1.msra.mxu0 %v2306
    %2419 = vmatprep.subr.mxu0 0.0
    %2420 = vmatpush1.msra.mxu0 %v2307
    %2421 = vmatprep.subr.mxu0 0.0
    %2422 = vmatpush1.msra.mxu0 %v2308
    %2423 = vmatprep.subr.mxu0 0.0
    %2424 = vmatpush1.msra.mxu0 %v2309
    %2425 = vmatprep.subr.mxu0 0.0
    %2426 = vmatpush1.msra.mxu0 %v2310
    %2427 = vmatprep.subr.mxu0 0.0
    %2428 = vmatpush1.msra.mxu0 %v2311
    %2429 = vmatprep.subr.mxu0 0.0
    %2430 = vmatpush1.msra.mxu0 %v2312
    %2431 = vmatprep.subr.mxu0 0.0
    %2432 = vmatpush1.msra.mxu0 %v2313
    %2433 = vmatprep.subr.mxu0 0.0
    %2434 = vmatpush1.msra.mxu0 %v2314
    %2435 = vmatprep.subr.mxu0 0.0
    %2436 = vmatpush1.msra.mxu0 %v2315
    %2437 = vmatprep.subr.mxu0 0.0
    %2438 = vmatpush1.msra.mxu0 %v2316
    %2439 = vmatprep.subr.mxu0 0.0
    %2440 = vmatpush1.msra.mxu0 %v2317
    %2441 = vmatprep.subr.mxu0 0.0
    %2442 = vmatpush1.msra.mxu0 %v2318
    %2443 = vmatprep.subr.mxu0 0.0
    %2444 = vmatpush1.msra.mxu0 %v2319
    %2445 = vmatprep.subr.mxu0 0.0
    %2446 = vmatpush1.msra.mxu0 %v2320
    %2447 = vmatprep.subr.mxu0 0.0
    %2448 = vmatpush1.msra.mxu0 %v2321
    %2449 = vmatprep.subr.mxu0 0.0
    %2450 = vmatpush1.msra.mxu0 %v2322
    %2451 = vmatprep.subr.mxu0 0.0
    %2452 = vmatpush1.msra.mxu0 %v2323
    %2453 = vmatprep.subr.mxu0 0.0
    %2454 = vmatpush1.msra.mxu0 %v2324
    %2455 = vmatprep.subr.mxu0 0.0
    %2456 = vmatpush1.msra.mxu0 %v2325
    %2457 = vmatprep.subr.mxu0 0.0
    %2458 = vmatpush1.msra.mxu0 %v2326
    %2459 = vmatprep.subr.mxu0 0.0
    %2460 = vmatpush1.msra.mxu0 %v2327
    %2461 = vmatprep.subr.mxu0 0.0
    %2462 = vmatpush1.msra.mxu0 %v2328
    %2463 = vmatprep.subr.mxu0 0.0
    %2464 = vmatpush1.msra.mxu0 %v2329
    %2465 = vmatprep.subr.mxu0 0.0
    %2466 = vmatpush1.msra.mxu0 %v2330
    %2467 = vmatprep.subr.mxu0 0.0
    %2468 = vmatpush1.msra.mxu0 %v2331
    %2469 = vmatprep.subr.mxu0 0.0
    %2470 = vmatpush1.msra.mxu0 %v2332
    %2471 = vmatprep.subr.mxu0 0.0
    %2472 = vmatpush1.msra.mxu0 %v2333
    %2473 = vmatprep.subr.mxu0 0.0
    %2474 = vmatpush1.msra.mxu0 %v2334
    %2475 = vmatprep.subr.mxu0 0.0
    %2476 = vmatpush1.msra.mxu0 %v2335
    %2477 = vmatprep.subr.mxu0 0.0
    %2478 = vmatpush1.msra.mxu0 %v2336
    %2479 = vmatprep.subr.mxu0 0.0
    %2480 = vmatpush1.msra.mxu0 %v2337
    %2481 = vmatprep.mubr.f32.mxu0 %v2414
    %2482 = vmatmul.mubr.f32.gmra.mrb[0].mxu0 %v2413
    %v2483 = vpop.f32.mrb[0].mxu0
    %v2484 = vadd.f32 0.0, %v2483
    %v2485 = vpop.f32.mrb[0].mxu0
    %2486 = vdwg.mxu0
    %v2487 = vadd.f32 %v2304, %v2484
    %s2488 = scalar_lea.vmem [#allocation2], 1024
    %v2489 = vld [vmem:[%s2488] sm:$0xff]
    %v2490 = vld [vmem:[%s2488 + $0x8] sm:$0xff]
    %v2491 = vld [vmem:[%s2488 + $0x10] sm:$0xff]
    %v2492 = vld [vmem:[%s2488 + $0x18] sm:$0xff]
    %v2493 = vld [vmem:[%s2488 + $0x20] sm:$0xff]
    %v2494 = vld [vmem:[%s2488 + $0x28] sm:$0xff]
    %v2495 = vld [vmem:[%s2488 + $0x30] sm:$0xff]
    %v2496 = vld [vmem:[%s2488 + $0x38] sm:$0xff]
    %v2497 = vld [vmem:[%s2488 + $0x40] sm:$0xff]
    %v2498 = vld [vmem:[%s2488 + $0x48] sm:$0xff]
    %v2499 = vld [vmem:[%s2488 + $0x50] sm:$0xff]
    %v2500 = vld [vmem:[%s2488 + $0x58] sm:$0xff]
    %v2501 = vld [vmem:[%s2488 + $0x60] sm:$0xff]
    %v2502 = vld [vmem:[%s2488 + $0x68] sm:$0xff]
    %v2503 = vld [vmem:[%s2488 + $0x70] sm:$0xff]
    %v2504 = vld [vmem:[%s2488 + $0x78] sm:$0xff]
    %v2505 = vld [vmem:[%s2488 + $0x80] sm:$0xff]
    %v2506 = vld [vmem:[%s2488 + $0x88] sm:$0xff]
    %v2507 = vld [vmem:[%s2488 + $0x90] sm:$0xff]
    %v2508 = vld [vmem:[%s2488 + $0x98] sm:$0xff]
    %v2509 = vld [vmem:[%s2488 + $0xa0] sm:$0xff]
    %v2510 = vld [vmem:[%s2488 + $0xa8] sm:$0xff]
    %v2511 = vld [vmem:[%s2488 + $0xb0] sm:$0xff]
    %v2512 = vld [vmem:[%s2488 + $0xb8] sm:$0xff]
    %v2513 = vld [vmem:[%s2488 + $0xc0] sm:$0xff]
    %v2514 = vld [vmem:[%s2488 + $0xc8] sm:$0xff]
    %v2515 = vld [vmem:[%s2488 + $0xd0] sm:$0xff]
    %v2516 = vld [vmem:[%s2488 + $0xd8] sm:$0xff]
    %v2517 = vld [vmem:[%s2488 + $0xe0] sm:$0xff]
    %v2518 = vld [vmem:[%s2488 + $0xe8] sm:$0xff]
    %v2519 = vld [vmem:[%s2488 + $0xf0] sm:$0xff]
    %v2520 = vld [vmem:[%s2488 + $0xf8] sm:$0xff]
    %v2521 = vrot.slane %v917, 4
    %v2522 = vrot.slane %v918, 4
    %2525 = vmatprep.subr.mxu0 0.0
    %2526 = vmatpush1.msra.mxu0 %v2489
    %2527 = vmatprep.subr.mxu0 0.0
    %2528 = vmatpush1.msra.mxu0 %v2490
    %2529 = vmatprep.subr.mxu0 0.0
    %2530 = vmatpush1.msra.mxu0 %v2491
    %2531 = vmatprep.subr.mxu0 0.0
    %2532 = vmatpush1.msra.mxu0 %v2492
    %2533 = vmatprep.subr.mxu0 0.0
    %2534 = vmatpush1.msra.mxu0 %v2493
    %2535 = vmatprep.subr.mxu0 0.0
    %2536 = vmatpush1.msra.mxu0 %v2494
    %2537 = vmatprep.subr.mxu0 0.0
    %2538 = vmatpush1.msra.mxu0 %v2495
    %2539 = vmatprep.subr.mxu0 0.0
    %2540 = vmatpush1.msra.mxu0 %v2496
    %2541 = vmatprep.subr.mxu0 0.0
    %2542 = vmatpush1.msra.mxu0 %v2497
    %2543 = vmatprep.subr.mxu0 0.0
    %2544 = vmatpush1.msra.mxu0 %v2498
    %2545 = vmatprep.subr.mxu0 0.0
    %2546 = vmatpush1.msra.mxu0 %v2499
    %2547 = vmatprep.subr.mxu0 0.0
    %2548 = vmatpush1.msra.mxu0 %v2500
    %2549 = vmatprep.subr.mxu0 0.0
    %2550 = vmatpush1.msra.mxu0 %v2501
    %2551 = vmatprep.subr.mxu0 0.0
    %2552 = vmatpush1.msra.mxu0 %v2502
    %2553 = vmatprep.subr.mxu0 0.0
    %2554 = vmatpush1.msra.mxu0 %v2503
    %2555 = vmatprep.subr.mxu0 0.0
    %2556 = vmatpush1.msra.mxu0 %v2504
    %2557 = vmatprep.subr.mxu0 0.0
    %2558 = vmatpush1.msra.mxu0 %v2505
    %2559 = vmatprep.subr.mxu0 0.0
    %2560 = vmatpush1.msra.mxu0 %v2506
    %2561 = vmatprep.subr.mxu0 0.0
    %2562 = vmatpush1.msra.mxu0 %v2507
    %2563 = vmatprep.subr.mxu0 0.0
    %2564 = vmatpush1.msra.mxu0 %v2508
    %2565 = vmatprep.subr.mxu0 0.0
    %2566 = vmatpush1.msra.mxu0 %v2509
    %2567 = vmatprep.subr.mxu0 0.0
    %2568 = vmatpush1.msra.mxu0 %v2510
    %2569 = vmatprep.subr.mxu0 0.0
    %2570 = vmatpush1.msra.mxu0 %v2511
    %2571 = vmatprep.subr.mxu0 0.0
    %2572 = vmatpush1.msra.mxu0 %v2512
    %2573 = vmatprep.subr.mxu0 0.0
    %2574 = vmatpush1.msra.mxu0 %v2513
    %2575 = vmatprep.subr.mxu0 0.0
    %2576 = vmatpush1.msra.mxu0 %v2514
    %2577 = vmatprep.subr.mxu0 0.0
    %2578 = vmatpush1.msra.mxu0 %v2515
    %2579 = vmatprep.subr.mxu0 0.0
    %2580 = vmatpush1.msra.mxu0 %v2516
    %2581 = vmatprep.subr.mxu0 0.0
    %2582 = vmatpush1.msra.mxu0 %v2517
    %2583 = vmatprep.subr.mxu0 0.0
    %2584 = vmatpush1.msra.mxu0 %v2518
    %2585 = vmatprep.subr.mxu0 0.0
    %2586 = vmatpush1.msra.mxu0 %v2519
    %2587 = vmatprep.subr.mxu0 0.0
    %2588 = vmatpush1.msra.mxu0 %v2520
    %2589 = vmatprep.mubr.f32.mxu0 %v2522
    %2590 = vmatmul.mubr.f32.gmra.mrb[0].mxu0 %v2521
    %v2591 = vpop.f32.mrb[0].mxu0
    %v2592 = vadd.f32 0.0, %v2591
    %v2593 = vpop.f32.mrb[0].mxu0
    %2594 = vdwg.mxu0
    %v2595 = vadd.f32 %v2412, %v2592
    %v2596 = vrot.slane %v1756, 4
    %v2597 = vrot.slane %v1757, 4
    %2600 = vmatprep.subr.mxu0 0.0
    %2601 = vmatpush1.msra.mxu0 %v2489
    %2602 = vmatprep.subr.mxu0 0.0
    %2603 = vmatpush1.msra.mxu0 %v2490
    %2604 = vmatprep.subr.mxu0 0.0
    %2605 = vmatpush1.msra.mxu0 %v2491
    %2606 = vmatprep.subr.mxu0 0.0
    %2607 = vmatpush1.msra.mxu0 %v2492
    %2608 = vmatprep.subr.mxu0 0.0
    %2609 = vmatpush1.msra.mxu0 %v2493
    %2610 = vmatprep.subr.mxu0 0.0
    %2611 = vmatpush1.msra.mxu0 %v2494
    %2612 = vmatprep.subr.mxu0 0.0
    %2613 = vmatpush1.msra.mxu0 %v2495
    %2614 = vmatprep.subr.mxu0 0.0
    %2615 = vmatpush1.msra.mxu0 %v2496
    %2616 = vmatprep.subr.mxu0 0.0
    %2617 = vmatpush1.msra.mxu0 %v2497
    %2618 = vmatprep.subr.mxu0 0.0
    %2619 = vmatpush1.msra.mxu0 %v2498
    %2620 = vmatprep.subr.mxu0 0.0
    %2621 = vmatpush1.msra.mxu0 %v2499
    %2622 = vmatprep.subr.mxu0 0.0
    %2623 = vmatpush1.msra.mxu0 %v2500
    %2624 = vmatprep.subr.mxu0 0.0
    %2625 = vmatpush1.msra.mxu0 %v2501
    %2626 = vmatprep.subr.mxu0 0.0
    %2627 = vmatpush1.msra.mxu0 %v2502
    %2628 = vmatprep.subr.mxu0 0.0
    %2629 = vmatpush1.msra.mxu0 %v2503
    %2630 = vmatprep.subr.mxu0 0.0
    %2631 = vmatpush1.msra.mxu0 %v2504
    %2632 = vmatprep.subr.mxu0 0.0
    %2633 = vmatpush1.msra.mxu0 %v2505
    %2634 = vmatprep.subr.mxu0 0.0
    %2635 = vmatpush1.msra.mxu0 %v2506
    %2636 = vmatprep.subr.mxu0 0.0
    %2637 = vmatpush1.msra.mxu0 %v2507
    %2638 = vmatprep.subr.mxu0 0.0
    %2639 = vmatpush1.msra.mxu0 %v2508
    %2640 = vmatprep.subr.mxu0 0.0
    %2641 = vmatpush1.msra.mxu0 %v2509
    %2642 = vmatprep.subr.mxu0 0.0
    %2643 = vmatpush1.msra.mxu0 %v2510
    %2644 = vmatprep.subr.mxu0 0.0
    %2645 = vmatpush1.msra.mxu0 %v2511
    %2646 = vmatprep.subr.mxu0 0.0
    %2647 = vmatpush1.msra.mxu0 %v2512
    %2648 = vmatprep.subr.mxu0 0.0
    %2649 = vmatpush1.msra.mxu0 %v2513
    %2650 = vmatprep.subr.mxu0 0.0
    %2651 = vmatpush1.msra.mxu0 %v2514
    %2652 = vmatprep.subr.mxu0 0.0
    %2653 = vmatpush1.msra.mxu0 %v2515
    %2654 = vmatprep.subr.mxu0 0.0
    %2655 = vmatpush1.msra.mxu0 %v2516
    %2656 = vmatprep.subr.mxu0 0.0
    %2657 = vmatpush1.msra.mxu0 %v2517
    %2658 = vmatprep.subr.mxu0 0.0
    %2659 = vmatpush1.msra.mxu0 %v2518
    %2660 = vmatprep.subr.mxu0 0.0
    %2661 = vmatpush1.msra.mxu0 %v2519
    %2662 = vmatprep.subr.mxu0 0.0
    %2663 = vmatpush1.msra.mxu0 %v2520
    %2664 = vmatprep.mubr.f32.mxu0 %v2597
    %2665 = vmatmul.mubr.f32.gmra.mrb[0].mxu0 %v2596
    %v2666 = vpop.f32.mrb[0].mxu0
    %v2667 = vadd.f32 0.0, %v2666
    %v2668 = vpop.f32.mrb[0].mxu0
    %2669 = vdwg.mxu0
    %v2670 = vadd.f32 %v2487, %v2667
    %s2671 = scalar_lea.vmem [#allocation2], 1280
    %v2672 = vld [vmem:[%s2671] sm:$0xff]
    %v2673 = vld [vmem:[%s2671 + $0x8] sm:$0xff]
    %v2674 = vld [vmem:[%s2671 + $0x10] sm:$0xff]
    %v2675 = vld [vmem:[%s2671 + $0x18] sm:$0xff]
    %v2676 = vld [vmem:[%s2671 + $0x20] sm:$0xff]
    %v2677 = vld [vmem:[%s2671 + $0x28] sm:$0xff]
    %v2678 = vld [vmem:[%s2671 + $0x30] sm:$0xff]
    %v2679 = vld [vmem:[%s2671 + $0x38] sm:$0xff]
    %v2680 = vld [vmem:[%s2671 + $0x40] sm:$0xff]
    %v2681 = vld [vmem:[%s2671 + $0x48] sm:$0xff]
    %v2682 = vld [vmem:[%s2671 + $0x50] sm:$0xff]
    %v2683 = vld [vmem:[%s2671 + $0x58] sm:$0xff]
    %v2684 = vld [vmem:[%s2671 + $0x60] sm:$0xff]
    %v2685 = vld [vmem:[%s2671 + $0x68] sm:$0xff]
    %v2686 = vld [vmem:[%s2671 + $0x70] sm:$0xff]
    %v2687 = vld [vmem:[%s2671 + $0x78] sm:$0xff]
    %v2688 = vld [vmem:[%s2671 + $0x80] sm:$0xff]
    %v2689 = vld [vmem:[%s2671 + $0x88] sm:$0xff]
    %v2690 = vld [vmem:[%s2671 + $0x90] sm:$0xff]
    %v2691 = vld [vmem:[%s2671 + $0x98] sm:$0xff]
    %v2692 = vld [vmem:[%s2671 + $0xa0] sm:$0xff]
    %v2693 = vld [vmem:[%s2671 + $0xa8] sm:$0xff]
    %v2694 = vld [vmem:[%s2671 + $0xb0] sm:$0xff]
    %v2695 = vld [vmem:[%s2671 + $0xb8] sm:$0xff]
    %v2696 = vld [vmem:[%s2671 + $0xc0] sm:$0xff]
    %v2697 = vld [vmem:[%s2671 + $0xc8] sm:$0xff]
    %v2698 = vld [vmem:[%s2671 + $0xd0] sm:$0xff]
    %v2699 = vld [vmem:[%s2671 + $0xd8] sm:$0xff]
    %v2700 = vld [vmem:[%s2671 + $0xe0] sm:$0xff]
    %v2701 = vld [vmem:[%s2671 + $0xe8] sm:$0xff]
    %v2702 = vld [vmem:[%s2671 + $0xf0] sm:$0xff]
    %v2703 = vld [vmem:[%s2671 + $0xf8] sm:$0xff]
    %v2704 = vrot.slane %v917, 5
    %v2705 = vrot.slane %v918, 5
    %2708 = vmatprep.subr.mxu0 0.0
    %2709 = vmatpush1.msra.mxu0 %v2672
    %2710 = vmatprep.subr.mxu0 0.0
    %2711 = vmatpush1.msra.mxu0 %v2673
    %2712 = vmatprep.subr.mxu0 0.0
    %2713 = vmatpush1.msra.mxu0 %v2674
    %2714 = vmatprep.subr.mxu0 0.0
    %2715 = vmatpush1.msra.mxu0 %v2675
    %2716 = vmatprep.subr.mxu0 0.0
    %2717 = vmatpush1.msra.mxu0 %v2676
    %2718 = vmatprep.subr.mxu0 0.0
    %2719 = vmatpush1.msra.mxu0 %v2677
    %2720 = vmatprep.subr.mxu0 0.0
    %2721 = vmatpush1.msra.mxu0 %v2678
    %2722 = vmatprep.subr.mxu0 0.0
    %2723 = vmatpush1.msra.mxu0 %v2679
    %2724 = vmatprep.subr.mxu0 0.0
    %2725 = vmatpush1.msra.mxu0 %v2680
    %2726 = vmatprep.subr.mxu0 0.0
    %2727 = vmatpush1.msra.mxu0 %v2681
    %2728 = vmatprep.subr.mxu0 0.0
    %2729 = vmatpush1.msra.mxu0 %v2682
    %2730 = vmatprep.subr.mxu0 0.0
    %2731 = vmatpush1.msra.mxu0 %v2683
    %2732 = vmatprep.subr.mxu0 0.0
    %2733 = vmatpush1.msra.mxu0 %v2684
    %2734 = vmatprep.subr.mxu0 0.0
    %2735 = vmatpush1.msra.mxu0 %v2685
    %2736 = vmatprep.subr.mxu0 0.0
    %2737 = vmatpush1.msra.mxu0 %v2686
    %2738 = vmatprep.subr.mxu0 0.0
    %2739 = vmatpush1.msra.mxu0 %v2687
    %2740 = vmatprep.subr.mxu0 0.0
    %2741 = vmatpush1.msra.mxu0 %v2688
    %2742 = vmatprep.subr.mxu0 0.0
    %2743 = vmatpush1.msra.mxu0 %v2689
    %2744 = vmatprep.subr.mxu0 0.0
    %2745 = vmatpush1.msra.mxu0 %v2690
    %2746 = vmatprep.subr.mxu0 0.0
    %2747 = vmatpush1.msra.mxu0 %v2691
    %2748 = vmatprep.subr.mxu0 0.0
    %2749 = vmatpush1.msra.mxu0 %v2692
    %2750 = vmatprep.subr.mxu0 0.0
    %2751 = vmatpush1.msra.mxu0 %v2693
    %2752 = vmatprep.subr.mxu0 0.0
    %2753 = vmatpush1.msra.mxu0 %v2694
    %2754 = vmatprep.subr.mxu0 0.0
    %2755 = vmatpush1.msra.mxu0 %v2695
    %2756 = vmatprep.subr.mxu0 0.0
    %2757 = vmatpush1.msra.mxu0 %v2696
    %2758 = vmatprep.subr.mxu0 0.0
    %2759 = vmatpush1.msra.mxu0 %v2697
    %2760 = vmatprep.subr.mxu0 0.0
    %2761 = vmatpush1.msra.mxu0 %v2698
    %2762 = vmatprep.subr.mxu0 0.0
    %2763 = vmatpush1.msra.mxu0 %v2699
    %2764 = vmatprep.subr.mxu0 0.0
    %2765 = vmatpush1.msra.mxu0 %v2700
    %2766 = vmatprep.subr.mxu0 0.0
    %2767 = vmatpush1.msra.mxu0 %v2701
    %2768 = vmatprep.subr.mxu0 0.0
    %2769 = vmatpush1.msra.mxu0 %v2702
    %2770 = vmatprep.subr.mxu0 0.0
    %2771 = vmatpush1.msra.mxu0 %v2703
    %2772 = vmatprep.mubr.f32.mxu0 %v2705
    %2773 = vmatmul.mubr.f32.gmra.mrb[0].mxu0 %v2704
    %v2774 = vpop.f32.mrb[0].mxu0
    %v2775 = vadd.f32 0.0, %v2774
    %v2776 = vpop.f32.mrb[0].mxu0
    %2777 = vdwg.mxu0
    %v2778 = vadd.f32 %v2595, %v2775
    %v2779 = vrot.slane %v1756, 5
    %v2780 = vrot.slane %v1757, 5
    %2783 = vmatprep.subr.mxu0 0.0
    %2784 = vmatpush1.msra.mxu0 %v2672
    %2785 = vmatprep.subr.mxu0 0.0
    %2786 = vmatpush1.msra.mxu0 %v2673
    %2787 = vmatprep.subr.mxu0 0.0
    %2788 = vmatpush1.msra.mxu0 %v2674
    %2789 = vmatprep.subr.mxu0 0.0
    %2790 = vmatpush1.msra.mxu0 %v2675
    %2791 = vmatprep.subr.mxu0 0.0
    %2792 = vmatpush1.msra.mxu0 %v2676
    %2793 = vmatprep.subr.mxu0 0.0
    %2794 = vmatpush1.msra.mxu0 %v2677
    %2795 = vmatprep.subr.mxu0 0.0
    %2796 = vmatpush1.msra.mxu0 %v2678
    %2797 = vmatprep.subr.mxu0 0.0
    %2798 = vmatpush1.msra.mxu0 %v2679
    %2799 = vmatprep.subr.mxu0 0.0
    %2800 = vmatpush1.msra.mxu0 %v2680
    %2801 = vmatprep.subr.mxu0 0.0
    %2802 = vmatpush1.msra.mxu0 %v2681
    %2803 = vmatprep.subr.mxu0 0.0
    %2804 = vmatpush1.msra.mxu0 %v2682
    %2805 = vmatprep.subr.mxu0 0.0
    %2806 = vmatpush1.msra.mxu0 %v2683
    %2807 = vmatprep.subr.mxu0 0.0
    %2808 = vmatpush1.msra.mxu0 %v2684
    %2809 = vmatprep.subr.mxu0 0.0
    %2810 = vmatpush1.msra.mxu0 %v2685
    %2811 = vmatprep.subr.mxu0 0.0
    %2812 = vmatpush1.msra.mxu0 %v2686
    %2813 = vmatprep.subr.mxu0 0.0
    %2814 = vmatpush1.msra.mxu0 %v2687
    %2815 = vmatprep.subr.mxu0 0.0
    %2816 = vmatpush1.msra.mxu0 %v2688
    %2817 = vmatprep.subr.mxu0 0.0
    %2818 = vmatpush1.msra.mxu0 %v2689
    %2819 = vmatprep.subr.mxu0 0.0
    %2820 = vmatpush1.msra.mxu0 %v2690
    %2821 = vmatprep.subr.mxu0 0.0
    %2822 = vmatpush1.msra.mxu0 %v2691
    %2823 = vmatprep.subr.mxu0 0.0
    %2824 = vmatpush1.msra.mxu0 %v2692
    %2825 = vmatprep.subr.mxu0 0.0
    %2826 = vmatpush1.msra.mxu0 %v2693
    %2827 = vmatprep.subr.mxu0 0.0
    %2828 = vmatpush1.msra.mxu0 %v2694
    %2829 = vmatprep.subr.mxu0 0.0
    %2830 = vmatpush1.msra.mxu0 %v2695
    %2831 = vmatprep.subr.mxu0 0.0
    %2832 = vmatpush1.msra.mxu0 %v2696
    %2833 = vmatprep.subr.mxu0 0.0
    %2834 = vmatpush1.msra.mxu0 %v2697
    %2835 = vmatprep.subr.mxu0 0.0
    %2836 = vmatpush1.msra.mxu0 %v2698
    %2837 = vmatprep.subr.mxu0 0.0
    %2838 = vmatpush1.msra.mxu0 %v2699
    %2839 = vmatprep.subr.mxu0 0.0
    %2840 = vmatpush1.msra.mxu0 %v2700
    %2841 = vmatprep.subr.mxu0 0.0
    %2842 = vmatpush1.msra.mxu0 %v2701
    %2843 = vmatprep.subr.mxu0 0.0
    %2844 = vmatpush1.msra.mxu0 %v2702
    %2845 = vmatprep.subr.mxu0 0.0
    %2846 = vmatpush1.msra.mxu0 %v2703
    %2847 = vmatprep.mubr.f32.mxu0 %v2780
    %2848 = vmatmul.mubr.f32.gmra.mrb[0].mxu0 %v2779
    %v2849 = vpop.f32.mrb[0].mxu0
    %v2850 = vadd.f32 0.0, %v2849
    %v2851 = vpop.f32.mrb[0].mxu0
    %2852 = vdwg.mxu0
    %v2853 = vadd.f32 %v2670, %v2850
    %s2854 = scalar_lea.vmem [#allocation2], 1536
    %v2855 = vld [vmem:[%s2854] sm:$0xff]
    %v2856 = vld [vmem:[%s2854 + $0x8] sm:$0xff]
    %v2857 = vld [vmem:[%s2854 + $0x10] sm:$0xff]
    %v2858 = vld [vmem:[%s2854 + $0x18] sm:$0xff]
    %v2859 = vld [vmem:[%s2854 + $0x20] sm:$0xff]
    %v2860 = vld [vmem:[%s2854 + $0x28] sm:$0xff]
    %v2861 = vld [vmem:[%s2854 + $0x30] sm:$0xff]
    %v2862 = vld [vmem:[%s2854 + $0x38] sm:$0xff]
    %v2863 = vld [vmem:[%s2854 + $0x40] sm:$0xff]
    %v2864 = vld [vmem:[%s2854 + $0x48] sm:$0xff]
    %v2865 = vld [vmem:[%s2854 + $0x50] sm:$0xff]
    %v2866 = vld [vmem:[%s2854 + $0x58] sm:$0xff]
    %v2867 = vld [vmem:[%s2854 + $0x60] sm:$0xff]
    %v2868 = vld [vmem:[%s2854 + $0x68] sm:$0xff]
    %v2869 = vld [vmem:[%s2854 + $0x70] sm:$0xff]
    %v2870 = vld [vmem:[%s2854 + $0x78] sm:$0xff]
    %v2871 = vld [vmem:[%s2854 + $0x80] sm:$0xff]
    %v2872 = vld [vmem:[%s2854 + $0x88] sm:$0xff]
    %v2873 = vld [vmem:[%s2854 + $0x90] sm:$0xff]
    %v2874 = vld [vmem:[%s2854 + $0x98] sm:$0xff]
    %v2875 = vld [vmem:[%s2854 + $0xa0] sm:$0xff]
    %v2876 = vld [vmem:[%s2854 + $0xa8] sm:$0xff]
    %v2877 = vld [vmem:[%s2854 + $0xb0] sm:$0xff]
    %v2878 = vld [vmem:[%s2854 + $0xb8] sm:$0xff]
    %v2879 = vld [vmem:[%s2854 + $0xc0] sm:$0xff]
    %v2880 = vld [vmem:[%s2854 + $0xc8] sm:$0xff]
    %v2881 = vld [vmem:[%s2854 + $0xd0] sm:$0xff]
    %v2882 = vld [vmem:[%s2854 + $0xd8] sm:$0xff]
    %v2883 = vld [vmem:[%s2854 + $0xe0] sm:$0xff]
    %v2884 = vld [vmem:[%s2854 + $0xe8] sm:$0xff]
    %v2885 = vld [vmem:[%s2854 + $0xf0] sm:$0xff]
    %v2886 = vld [vmem:[%s2854 + $0xf8] sm:$0xff]
    %v2887 = vrot.slane %v917, 6
    %v2888 = vrot.slane %v918, 6
    %2891 = vmatprep.subr.mxu0 0.0
    %2892 = vmatpush1.msra.mxu0 %v2855
    %2893 = vmatprep.subr.mxu0 0.0
    %2894 = vmatpush1.msra.mxu0 %v2856
    %2895 = vmatprep.subr.mxu0 0.0
    %2896 = vmatpush1.msra.mxu0 %v2857
    %2897 = vmatprep.subr.mxu0 0.0
    %2898 = vmatpush1.msra.mxu0 %v2858
    %2899 = vmatprep.subr.mxu0 0.0
    %2900 = vmatpush1.msra.mxu0 %v2859
    %2901 = vmatprep.subr.mxu0 0.0
    %2902 = vmatpush1.msra.mxu0 %v2860
    %2903 = vmatprep.subr.mxu0 0.0
    %2904 = vmatpush1.msra.mxu0 %v2861
    %2905 = vmatprep.subr.mxu0 0.0
    %2906 = vmatpush1.msra.mxu0 %v2862
    %2907 = vmatprep.subr.mxu0 0.0
    %2908 = vmatpush1.msra.mxu0 %v2863
    %2909 = vmatprep.subr.mxu0 0.0
    %2910 = vmatpush1.msra.mxu0 %v2864
    %2911 = vmatprep.subr.mxu0 0.0
    %2912 = vmatpush1.msra.mxu0 %v2865
    %2913 = vmatprep.subr.mxu0 0.0
    %2914 = vmatpush1.msra.mxu0 %v2866
    %2915 = vmatprep.subr.mxu0 0.0
    %2916 = vmatpush1.msra.mxu0 %v2867
    %2917 = vmatprep.subr.mxu0 0.0
    %2918 = vmatpush1.msra.mxu0 %v2868
    %2919 = vmatprep.subr.mxu0 0.0
    %2920 = vmatpush1.msra.mxu0 %v2869
    %2921 = vmatprep.subr.mxu0 0.0
    %2922 = vmatpush1.msra.mxu0 %v2870
    %2923 = vmatprep.subr.mxu0 0.0
    %2924 = vmatpush1.msra.mxu0 %v2871
    %2925 = vmatprep.subr.mxu0 0.0
    %2926 = vmatpush1.msra.mxu0 %v2872
    %2927 = vmatprep.subr.mxu0 0.0
    %2928 = vmatpush1.msra.mxu0 %v2873
    %2929 = vmatprep.subr.mxu0 0.0
    %2930 = vmatpush1.msra.mxu0 %v2874
    %2931 = vmatprep.subr.mxu0 0.0
    %2932 = vmatpush1.msra.mxu0 %v2875
    %2933 = vmatprep.subr.mxu0 0.0
    %2934 = vmatpush1.msra.mxu0 %v2876
    %2935 = vmatprep.subr.mxu0 0.0
    %2936 = vmatpush1.msra.mxu0 %v2877
    %2937 = vmatprep.subr.mxu0 0.0
    %2938 = vmatpush1.msra.mxu0 %v2878
    %2939 = vmatprep.subr.mxu0 0.0
    %2940 = vmatpush1.msra.mxu0 %v2879
    %2941 = vmatprep.subr.mxu0 0.0
    %2942 = vmatpush1.msra.mxu0 %v2880
    %2943 = vmatprep.subr.mxu0 0.0
    %2944 = vmatpush1.msra.mxu0 %v2881
    %2945 = vmatprep.subr.mxu0 0.0
    %2946 = vmatpush1.msra.mxu0 %v2882
    %2947 = vmatprep.subr.mxu0 0.0
    %2948 = vmatpush1.msra.mxu0 %v2883
    %2949 = vmatprep.subr.mxu0 0.0
    %2950 = vmatpush1.msra.mxu0 %v2884
    %2951 = vmatprep.subr.mxu0 0.0
    %2952 = vmatpush1.msra.mxu0 %v2885
    %2953 = vmatprep.subr.mxu0 0.0
    %2954 = vmatpush1.msra.mxu0 %v2886
    %2955 = vmatprep.mubr.f32.mxu0 %v2888
    %2956 = vmatmul.mubr.f32.gmra.mrb[0].mxu0 %v2887
    %v2957 = vpop.f32.mrb[0].mxu0
    %v2958 = vadd.f32 0.0, %v2957
    %v2959 = vpop.f32.mrb[0].mxu0
    %2960 = vdwg.mxu0
    %v2961 = vadd.f32 %v2778, %v2958
    %v2962 = vrot.slane %v1756, 6
    %v2963 = vrot.slane %v1757, 6
    %2966 = vmatprep.subr.mxu0 0.0
    %2967 = vmatpush1.msra.mxu0 %v2855
    %2968 = vmatprep.subr.mxu0 0.0
    %2969 = vmatpush1.msra.mxu0 %v2856
    %2970 = vmatprep.subr.mxu0 0.0
    %2971 = vmatpush1.msra.mxu0 %v2857
    %2972 = vmatprep.subr.mxu0 0.0
    %2973 = vmatpush1.msra.mxu0 %v2858
    %2974 = vmatprep.subr.mxu0 0.0
    %2975 = vmatpush1.msra.mxu0 %v2859
    %2976 = vmatprep.subr.mxu0 0.0
    %2977 = vmatpush1.msra.mxu0 %v2860
    %2978 = vmatprep.subr.mxu0 0.0
    %2979 = vmatpush1.msra.mxu0 %v2861
    %2980 = vmatprep.subr.mxu0 0.0
    %2981 = vmatpush1.msra.mxu0 %v2862
    %2982 = vmatprep.subr.mxu0 0.0
    %2983 = vmatpush1.msra.mxu0 %v2863
    %2984 = vmatprep.subr.mxu0 0.0
    %2985 = vmatpush1.msra.mxu0 %v2864
    %2986 = vmatprep.subr.mxu0 0.0
    %2987 = vmatpush1.msra.mxu0 %v2865
    %2988 = vmatprep.subr.mxu0 0.0
    %2989 = vmatpush1.msra.mxu0 %v2866
    %2990 = vmatprep.subr.mxu0 0.0
    %2991 = vmatpush1.msra.mxu0 %v2867
    %2992 = vmatprep.subr.mxu0 0.0
    %2993 = vmatpush1.msra.mxu0 %v2868
    %2994 = vmatprep.subr.mxu0 0.0
    %2995 = vmatpush1.msra.mxu0 %v2869
    %2996 = vmatprep.subr.mxu0 0.0
    %2997 = vmatpush1.msra.mxu0 %v2870
    %2998 = vmatprep.subr.mxu0 0.0
    %2999 = vmatpush1.msra.mxu0 %v2871
    %3000 = vmatprep.subr.mxu0 0.0
    %3001 = vmatpush1.msra.mxu0 %v2872
    %3002 = vmatprep.subr.mxu0 0.0
    %3003 = vmatpush1.msra.mxu0 %v2873
    %3004 = vmatprep.subr.mxu0 0.0
    %3005 = vmatpush1.msra.mxu0 %v2874
    %3006 = vmatprep.subr.mxu0 0.0
    %3007 = vmatpush1.msra.mxu0 %v2875
    %3008 = vmatprep.subr.mxu0 0.0
    %3009 = vmatpush1.msra.mxu0 %v2876
    %3010 = vmatprep.subr.mxu0 0.0
    %3011 = vmatpush1.msra.mxu0 %v2877
    %3012 = vmatprep.subr.mxu0 0.0
    %3013 = vmatpush1.msra.mxu0 %v2878
    %3014 = vmatprep.subr.mxu0 0.0
    %3015 = vmatpush1.msra.mxu0 %v2879
    %3016 = vmatprep.subr.mxu0 0.0
    %3017 = vmatpush1.msra.mxu0 %v2880
    %3018 = vmatprep.subr.mxu0 0.0
    %3019 = vmatpush1.msra.mxu0 %v2881
    %3020 = vmatprep.subr.mxu0 0.0
    %3021 = vmatpush1.msra.mxu0 %v2882
    %3022 = vmatprep.subr.mxu0 0.0
    %3023 = vmatpush1.msra.mxu0 %v2883
    %3024 = vmatprep.subr.mxu0 0.0
    %3025 = vmatpush1.msra.mxu0 %v2884
    %3026 = vmatprep.subr.mxu0 0.0
    %3027 = vmatpush1.msra.mxu0 %v2885
    %3028 = vmatprep.subr.mxu0 0.0
    %3029 = vmatpush1.msra.mxu0 %v2886
    %3030 = vmatprep.mubr.f32.mxu0 %v2963
    %3031 = vmatmul.mubr.f32.gmra.mrb[0].mxu0 %v2962
    %v3032 = vpop.f32.mrb[0].mxu0
    %v3033 = vadd.f32 0.0, %v3032
    %v3034 = vpop.f32.mrb[0].mxu0
    %3035 = vdwg.mxu0
    %v3036 = vadd.f32 %v2853, %v3033
    %s3037 = scalar_lea.vmem [#allocation2], 1792
    %v3038 = vld [vmem:[%s3037] sm:$0xff]
    %v3039 = vld [vmem:[%s3037 + $0x8] sm:$0xff]
    %v3040 = vld [vmem:[%s3037 + $0x10] sm:$0xff]
    %v3041 = vld [vmem:[%s3037 + $0x18] sm:$0xff]
    %v3042 = vld [vmem:[%s3037 + $0x20] sm:$0xff]
    %v3043 = vld [vmem:[%s3037 + $0x28] sm:$0xff]
    %v3044 = vld [vmem:[%s3037 + $0x30] sm:$0xff]
    %v3045 = vld [vmem:[%s3037 + $0x38] sm:$0xff]
    %v3046 = vld [vmem:[%s3037 + $0x40] sm:$0xff]
    %v3047 = vld [vmem:[%s3037 + $0x48] sm:$0xff]
    %v3048 = vld [vmem:[%s3037 + $0x50] sm:$0xff]
    %v3049 = vld [vmem:[%s3037 + $0x58] sm:$0xff]
    %v3050 = vld [vmem:[%s3037 + $0x60] sm:$0xff]
    %v3051 = vld [vmem:[%s3037 + $0x68] sm:$0xff]
    %v3052 = vld [vmem:[%s3037 + $0x70] sm:$0xff]
    %v3053 = vld [vmem:[%s3037 + $0x78] sm:$0xff]
    %v3054 = vld [vmem:[%s3037 + $0x80] sm:$0xff]
    %v3055 = vld [vmem:[%s3037 + $0x88] sm:$0xff]
    %v3056 = vld [vmem:[%s3037 + $0x90] sm:$0xff]
    %v3057 = vld [vmem:[%s3037 + $0x98] sm:$0xff]
    %v3058 = vld [vmem:[%s3037 + $0xa0] sm:$0xff]
    %v3059 = vld [vmem:[%s3037 + $0xa8] sm:$0xff]
    %v3060 = vld [vmem:[%s3037 + $0xb0] sm:$0xff]
    %v3061 = vld [vmem:[%s3037 + $0xb8] sm:$0xff]
    %v3062 = vld [vmem:[%s3037 + $0xc0] sm:$0xff]
    %v3063 = vld [vmem:[%s3037 + $0xc8] sm:$0xff]
    %v3064 = vld [vmem:[%s3037 + $0xd0] sm:$0xff]
    %v3065 = vld [vmem:[%s3037 + $0xd8] sm:$0xff]
    %v3066 = vld [vmem:[%s3037 + $0xe0] sm:$0xff]
    %v3067 = vld [vmem:[%s3037 + $0xe8] sm:$0xff]
    %v3068 = vld [vmem:[%s3037 + $0xf0] sm:$0xff]
    %v3069 = vld [vmem:[%s3037 + $0xf8] sm:$0xff]
    %v3070 = vrot.slane %v917, 7
    %v3071 = vrot.slane %v918, 7
    %3074 = vmatprep.subr.mxu0 0.0
    %3075 = vmatpush1.msra.mxu0 %v3038
    %3076 = vmatprep.subr.mxu0 0.0
    %3077 = vmatpush1.msra.mxu0 %v3039
    %3078 = vmatprep.subr.mxu0 0.0
    %3079 = vmatpush1.msra.mxu0 %v3040
    %3080 = vmatprep.subr.mxu0 0.0
    %3081 = vmatpush1.msra.mxu0 %v3041
    %3082 = vmatprep.subr.mxu0 0.0
    %3083 = vmatpush1.msra.mxu0 %v3042
    %3084 = vmatprep.subr.mxu0 0.0
    %3085 = vmatpush1.msra.mxu0 %v3043
    %3086 = vmatprep.subr.mxu0 0.0
    %3087 = vmatpush1.msra.mxu0 %v3044
    %3088 = vmatprep.subr.mxu0 0.0
    %3089 = vmatpush1.msra.mxu0 %v3045
    %3090 = vmatprep.subr.mxu0 0.0
    %3091 = vmatpush1.msra.mxu0 %v3046
    %3092 = vmatprep.subr.mxu0 0.0
    %3093 = vmatpush1.msra.mxu0 %v3047
    %3094 = vmatprep.subr.mxu0 0.0
    %3095 = vmatpush1.msra.mxu0 %v3048
    %3096 = vmatprep.subr.mxu0 0.0
    %3097 = vmatpush1.msra.mxu0 %v3049
    %3098 = vmatprep.subr.mxu0 0.0
    %3099 = vmatpush1.msra.mxu0 %v3050
    %3100 = vmatprep.subr.mxu0 0.0
    %3101 = vmatpush1.msra.mxu0 %v3051
    %3102 = vmatprep.subr.mxu0 0.0
    %3103 = vmatpush1.msra.mxu0 %v3052
    %3104 = vmatprep.subr.mxu0 0.0
    %3105 = vmatpush1.msra.mxu0 %v3053
    %3106 = vmatprep.subr.mxu0 0.0
    %3107 = vmatpush1.msra.mxu0 %v3054
    %3108 = vmatprep.subr.mxu0 0.0
    %3109 = vmatpush1.msra.mxu0 %v3055
    %3110 = vmatprep.subr.mxu0 0.0
    %3111 = vmatpush1.msra.mxu0 %v3056
    %3112 = vmatprep.subr.mxu0 0.0
    %3113 = vmatpush1.msra.mxu0 %v3057
    %3114 = vmatprep.subr.mxu0 0.0
    %3115 = vmatpush1.msra.mxu0 %v3058
    %3116 = vmatprep.subr.mxu0 0.0
    %3117 = vmatpush1.msra.mxu0 %v3059
    %3118 = vmatprep.subr.mxu0 0.0
    %3119 = vmatpush1.msra.mxu0 %v3060
    %3120 = vmatprep.subr.mxu0 0.0
    %3121 = vmatpush1.msra.mxu0 %v3061
    %3122 = vmatprep.subr.mxu0 0.0
    %3123 = vmatpush1.msra.mxu0 %v3062
    %3124 = vmatprep.subr.mxu0 0.0
    %3125 = vmatpush1.msra.mxu0 %v3063
    %3126 = vmatprep.subr.mxu0 0.0
    %3127 = vmatpush1.msra.mxu0 %v3064
    %3128 = vmatprep.subr.mxu0 0.0
    %3129 = vmatpush1.msra.mxu0 %v3065
    %3130 = vmatprep.subr.mxu0 0.0
    %3131 = vmatpush1.msra.mxu0 %v3066
    %3132 = vmatprep.subr.mxu0 0.0
    %3133 = vmatpush1.msra.mxu0 %v3067
    %3134 = vmatprep.subr.mxu0 0.0
    %3135 = vmatpush1.msra.mxu0 %v3068
    %3136 = vmatprep.subr.mxu0 0.0
    %3137 = vmatpush1.msra.mxu0 %v3069
    %3138 = vmatprep.mubr.f32.mxu0 %v3071
    %3139 = vmatmul.mubr.f32.gmra.mrb[0].mxu0 %v3070
    %v3140 = vpop.f32.mrb[0].mxu0
    %v3141 = vadd.f32 0.0, %v3140
    %v3142 = vpop.f32.mrb[0].mxu0
    %3143 = vdwg.mxu0
    %v3144 = vadd.f32 %v2961, %v3141
    %v3145 = vrot.slane %v1756, 7
    %v3146 = vrot.slane %v1757, 7
    %3149 = vmatprep.subr.mxu0 0.0
    %3150 = vmatpush1.msra.mxu0 %v3038
    %3151 = vmatprep.subr.mxu0 0.0
    %3152 = vmatpush1.msra.mxu0 %v3039
    %3153 = vmatprep.subr.mxu0 0.0
    %3154 = vmatpush1.msra.mxu0 %v3040
    %3155 = vmatprep.subr.mxu0 0.0
    %3156 = vmatpush1.msra.mxu0 %v3041
    %3157 = vmatprep.subr.mxu0 0.0
    %3158 = vmatpush1.msra.mxu0 %v3042
    %3159 = vmatprep.subr.mxu0 0.0
    %3160 = vmatpush1.msra.mxu0 %v3043
    %3161 = vmatprep.subr.mxu0 0.0
    %3162 = vmatpush1.msra.mxu0 %v3044
    %3163 = vmatprep.subr.mxu0 0.0
    %3164 = vmatpush1.msra.mxu0 %v3045
    %3165 = vmatprep.subr.mxu0 0.0
    %3166 = vmatpush1.msra.mxu0 %v3046
    %3167 = vmatprep.subr.mxu0 0.0
    %3168 = vmatpush1.msra.mxu0 %v3047
    %3169 = vmatprep.subr.mxu0 0.0
    %3170 = vmatpush1.msra.mxu0 %v3048
    %3171 = vmatprep.subr.mxu0 0.0
    %3172 = vmatpush1.msra.mxu0 %v3049
    %3173 = vmatprep.subr.mxu0 0.0
    %3174 = vmatpush1.msra.mxu0 %v3050
    %3175 = vmatprep.subr.mxu0 0.0
    %3176 = vmatpush1.msra.mxu0 %v3051
    %3177 = vmatprep.subr.mxu0 0.0
    %3178 = vmatpush1.msra.mxu0 %v3052
    %3179 = vmatprep.subr.mxu0 0.0
    %3180 = vmatpush1.msra.mxu0 %v3053
    %3181 = vmatprep.subr.mxu0 0.0
    %3182 = vmatpush1.msra.mxu0 %v3054
    %3183 = vmatprep.subr.mxu0 0.0
    %3184 = vmatpush1.msra.mxu0 %v3055
    %3185 = vmatprep.subr.mxu0 0.0
    %3186 = vmatpush1.msra.mxu0 %v3056
    %3187 = vmatprep.subr.mxu0 0.0
    %3188 = vmatpush1.msra.mxu0 %v3057
    %3189 = vmatprep.subr.mxu0 0.0
    %3190 = vmatpush1.msra.mxu0 %v3058
    %3191 = vmatprep.subr.mxu0 0.0
    %3192 = vmatpush1.msra.mxu0 %v3059
    %3193 = vmatprep.subr.mxu0 0.0
    %3194 = vmatpush1.msra.mxu0 %v3060
    %3195 = vmatprep.subr.mxu0 0.0
    %3196 = vmatpush1.msra.mxu0 %v3061
    %3197 = vmatprep.subr.mxu0 0.0
    %3198 = vmatpush1.msra.mxu0 %v3062
    %3199 = vmatprep.subr.mxu0 0.0
    %3200 = vmatpush1.msra.mxu0 %v3063
    %3201 = vmatprep.subr.mxu0 0.0
    %3202 = vmatpush1.msra.mxu0 %v3064
    %3203 = vmatprep.subr.mxu0 0.0
    %3204 = vmatpush1.msra.mxu0 %v3065
    %3205 = vmatprep.subr.mxu0 0.0
    %3206 = vmatpush1.msra.mxu0 %v3066
    %3207 = vmatprep.subr.mxu0 0.0
    %3208 = vmatpush1.msra.mxu0 %v3067
    %3209 = vmatprep.subr.mxu0 0.0
    %3210 = vmatpush1.msra.mxu0 %v3068
    %3211 = vmatprep.subr.mxu0 0.0
    %3212 = vmatpush1.msra.mxu0 %v3069
    %3213 = vmatprep.mubr.f32.mxu0 %v3146
    %3214 = vmatmul.mubr.f32.gmra.mrb[0].mxu0 %v3145
    %v3215 = vpop.f32.mrb[0].mxu0
    %v3216 = vadd.f32 0.0, %v3215
    %v3217 = vpop.f32.mrb[0].mxu0
    %3218 = vdwg.mxu0
    %v3219 = vadd.f32 %v3036, %v3216
    %3220 = vst [vmem:[#allocation5] sm:$0x1] %v3144
    %3221 = vst [vmem:[#allocation5 + $0x1] sm:$0x1] %v3219
    // Predicated region
    $region26: #{layer_forward.1} parent=1 // pred_check
      _
    $region27: #{layer_forward.1} parent=1 // pred_check_branch
      %3223 = sbr.rel (0) target = $region29
    $region28: #{layer_forward.1} parent=1 // pred_region
      _
    $region29: #{layer_forward.1} parent=1 // pred_fallthru
      _
    // Predicated region
    $region30: #{layer_forward.1} parent=1 // pred_check
      _
    $region31: #{layer_forward.1} parent=1 // pred_check_branch
      %3225 = sbr.rel (0) target = $region33
    $region32: #{layer_forward.1} parent=1 // pred_region
      %s3227 = ssub.s32 32, 32
      %3228 = vsyncadd [#allocation4], %s3227
      %s3230 = sshll.u32 [#allocation5], 4
      %s3231 = int_to_ptr.vmem [resolvable:$true] %s3230
      %3233 = dma.vmem_to_hbm [thread:$0]  %s3231, 32, %s6, [#allocation4]
    $region33: #{layer_forward.1} parent=1 // pred_fallthru
      _
    // Predicated region
    $region34: #{layer_forward.1} parent=1 // pred_check
      _
    $region35: #{layer_forward.1} parent=1 // pred_check_branch
      %3235 = sbr.rel (0) target = $region37
    $region36: #{layer_forward.1} parent=1 // pred_region
      _
    $region37: #{layer_forward.1} parent=1 // pred_fallthru
      _
    // Predicated region
    $region38: #{layer_forward.1} parent=1 // pred_check
      _
    $region39: #{layer_forward.1} parent=1 // pred_check_branch
      %3237 = sbr.rel (0) target = $region41
    $region40: #{layer_forward.1} parent=1 // pred_region
      %3238 = dma.done [#allocation4], 32
    $region41: #{layer_forward.1} parent=1 // pred_fallthru
      _
    %3239 = vsyncpa [#allocation3], 1
    %3240 = vsyncpa [#allocation4], 1

</llo_original>
